<compile_context>
chip_gen: v7x
topology: tpu7x:2x2x1
jax: 0.10.0
libtpu: 0.0.40
codegen_flags: <defaults>
</compile_context>

<pallas_src>
import numpy as np
import jax
import jax.numpy as jnp
from jax import lax
from jax.experimental import pallas as pl
from jax.experimental.pallas import tpu as pltpu


def _round_up(v, m):
    return -(-v // m) * m


# ------------- host-side constants (O(W^2) / O(H*W); never O(M^2)) -----------

def _interior_mask(h, w):
    """(1, (h+2)*(w+2)) mask: 1 at interior pixels, 0 on the halo ring."""
    m = np.zeros((h + 2, w + 2), np.float32)
    m[1:h + 1, 1:w + 1] = 1.0
    return m.reshape(1, -1)


def _pool_group_matrix(w, gh):
    """(2*gh*(w+2), gh*(w/2+2)) matrix: AvgPool2d(2) of 2*gh padded input rows
    into gh padded output rows (output left/right halo columns are zero)."""
    wp_in, wp_out = w + 2, w // 2 + 2
    p = np.zeros((2 * gh * wp_in, gh * wp_out), np.float32)
    for ro in range(gh):
        for wo in range(w // 2):
            o = ro * wp_out + wo + 1
            for dy in (0, 1):
                for dx in (0, 1):
                    p[(2 * ro + dy) * wp_in + 2 * wo + dx + 1, o] = 0.25
    return p


def _global_pool_vec(h, w):
    """((h+2)*(w+2), 1) vector implementing the global average pool."""
    g = np.zeros((h + 2, w + 2), np.float32)
    g[1:h + 1, 1:w + 1] = 1.0 / (h * w)
    return g.reshape(-1, 1)


def _pick_gh(h, w, cap_elems=1 << 20):
    """Largest row-pair group (divisor of h//2) keeping the pool matrix small,
    so the pooling constant stays bounded even for large images."""
    best = 1
    for gh in range(1, h // 2 + 1):
        if (h // 2) % gh == 0 and 2 * gh * (w + 2) * gh * (w // 2 + 2) <= cap_elems:
            best = gh
    return best


# ------------------------------ fused kernel ---------------------------------

def _build_kernel(h0, w0, nblocks, gh_list):
    def kernel(*refs):
        i = 0
        x_ref = refs[i]; i += 1
        blocks = []
        for _ in range(nblocks):
            blocks.append(refs[i:i + 7]); i += 7
        imasks = refs[i:i + nblocks + 1]; i += nblocks + 1
        g_ref, fcw_ref, fcb_ref = refs[i:i + 3]; i += 3
        logit_ref, feat_ref = refs[i:i + 2]

        def conv3x3(x, w_ref, b_ref, wp):
            """Same-padded 3x3 conv on halo-padded layout: one stacked matmul."""
            cin, mp = x.shape
            margin = wp + 1                      # covers every tap shift
            mc = mp - 2 * margin                 # contiguous range holding all
            taps = []                            # interior output positions
            for dy in (-1, 0, 1):
                for dx in (-1, 0, 1):
                    s = margin + dy * wp + dx
                    taps.append(x[:, s:s + mc])
            stacked = jnp.concatenate(taps, axis=0)          # (9*Cin, mc)
            y = jnp.dot(w_ref[...], stacked,
                        preferred_element_type=jnp.float32) + b_ref[...]
            z = jnp.zeros((y.shape[0], margin), jnp.float32)
            return jnp.concatenate([z, y, z], axis=1)        # (Cout, mp)

        def avg_pool2(x, hh, ww, gh, p_ref):
            """AvgPool2d(2), padded layout -> padded layout (zero output halo)."""
            c = x.shape[0]
            wp_in, wp_out = ww + 2, ww // 2 + 2
            zrow = jnp.zeros((c, wp_out), jnp.float32)
            pieces = [zrow]                       # top halo row of output image
            for r in range((hh // 2) // gh):
                start = (1 + 2 * r * gh) * wp_in
                chunk = x[:, start:start + 2 * gh * wp_in]
                pieces.append(jnp.dot(chunk, p_ref[...],
                                      preferred_element_type=jnp.float32))
            pieces.append(zrow)                   # bottom halo row
            return jnp.concatenate(pieces, axis=1)

        h = x_ref[0]                              # (Cin_pad, (h0+2)*(w0+2))
        hh, ww = h0, w0
        for b in range(nblocks):
            w1, b1, w2, b2, scw, scb, p_ref = blocks[b]
            im_in = imasks[b][...]
            im_out = imasks[b + 1][...]
            # residual branch (ResBlock has a leading ReLU, OptimizedBlock not)
            pre = jnp.maximum(h, 0.0) if b > 0 else h
            t1 = conv3x3(pre, w1, b1, ww + 2)
            t1 = jnp.maximum(t1, 0.0) * im_in     # re-zero halo for conv2 input
            t2 = conv3x3(t1, w2, b2, ww + 2)
            t2p = avg_pool2(t2, hh, ww, gh_list[b], p_ref)
            # shortcut: pool BEFORE the 1x1 conv (they commute; bias too)
            hp = avg_pool2(h, hh, ww, gh_list[b], p_ref)
            sc = (jnp.dot(scw[...], hp, preferred_element_type=jnp.float32)
                  + scb[...]) * im_out            # bias leaks into halo -> mask
            h = t2p + sc
            hh //= 2
            ww //= 2
        h = jnp.maximum(h, 0.0)                   # final ReLU
        feat = jnp.dot(h, g_ref[...], preferred_element_type=jnp.float32)  # (C,1)
        feat_ref[0] = feat
        logit_ref[0] = (jnp.dot(fcw_ref[...], feat,
                                preferred_element_type=jnp.float32)
                        + fcb_ref[...])           # (1,1)

    return kernel


# ------------------------------ Pallas wrapper --------------------------------

@jax.jit
def discriminator_forward(params, x):
    """x: (N, 3, H, W) NCHW. Returns (logits (N,1), pooled features (N,C_last))."""
    batch, cin0, h0, w0 = x.shape
    nblocks = len(params["blocks"])
    assert h0 % (2 ** nblocks) == 0 and w0 % (2 ** nblocks) == 0

    cin0p = _round_up(cin0, 8)
    hpwp0 = (h0 + 2) * (w0 + 2)
    # NCHW -> per-image halo-padded layout (N, Cpad, (H+2)*(W+2)), zero halo.
    xp = jnp.pad(x, ((0, 0), (0, cin0p - cin0), (1, 1), (1, 1)))
    xp = xp.reshape(batch, cin0p, hpwp0)

    inputs = [xp]
    in_specs = [pl.BlockSpec((1, cin0p, hpwp0), lambda n: (n, 0, 0))]

    def add_const(arr):
        arr = jnp.asarray(arr, jnp.float32)
        nd = arr.ndim
        inputs.append(arr)
        in_specs.append(pl.BlockSpec(arr.shape, lambda n, _nd=nd: (0,) * _nd))

    gh_list = []
    flops = 0
    hh, ww = h0, w0
    for b, blk in enumerate(params["blocks"]):
        cmid, cin = blk["c1_w"].shape[:2]
        cout = blk["c2_w"].shape[0]
        cin_eff = cin0p if b == 0 else cin
        mp = (hh + 2) * (ww + 2)
        mc = mp - 2 * (ww + 3)
        mp_out = (hh // 2 + 2) * (ww // 2 + 2)
        gh = _pick_gh(hh, ww)
        gh_list.append(gh)

        c1w = blk["c1_w"]
        scw = blk["sc_w"][:, :, 0, 0]
        if cin_eff != cin:
            c1w = jnp.pad(c1w, ((0, 0), (0, cin_eff - cin), (0, 0), (0, 0)))
            scw = jnp.pad(scw, ((0, 0), (0, cin_eff - cin)))
        # (Cout, Cin, 3, 3) -> (Cout, 9*Cin), rows ordered tap-major/channel-minor
        c1w = jnp.transpose(c1w, (0, 2, 3, 1)).reshape(cmid, 9 * cin_eff)
        c2w = jnp.transpose(blk["c2_w"], (0, 2, 3, 1)).reshape(cout, 9 * cmid)

        add_const(c1w)
        add_const(blk["c1_b"].reshape(cmid, 1))
        add_const(c2w)
        add_const(blk["c2_b"].reshape(cout, 1))
        add_const(scw)
        add_const(blk["sc_b"].reshape(cout, 1))
        add_const(_pool_group_matrix(ww, gh))

        nch = (hh // 2) // gh
        chunk_in, chunk_out = 2 * gh * (ww + 2), gh * (ww // 2 + 2)
        flops += 2 * mc * 9 * (cin_eff * cmid + cmid * cout)        # 3x3 convs
        flops += nch * 2 * (cout + cin_eff) * chunk_in * chunk_out  # two pools
        flops += 2 * cout * cin_eff * mp_out                        # 1x1 shortcut
        hh //= 2
        ww //= 2

    # interior masks at every resolution appearing in the pipeline
    rh, rw = h0, w0
    for _ in range(nblocks + 1):
        add_const(_interior_mask(rh, rw))
        rh //= 2
        rw //= 2

    c_last = params["blocks"][-1]["c2_w"].shape[0]
    hf, wf = h0 // (2 ** nblocks), w0 // (2 ** nblocks)
    add_const(_global_pool_vec(hf, wf))
    add_const(params["fc_w"])                     # (1, c_last)
    add_const(params["fc_b"].reshape(1, 1))
    flops += 2 * c_last * (hf + 2) * (wf + 2) + 2 * c_last
    flops *= batch

    bytes_accessed = 4 * (sum(int(np.prod(a.shape)) for a in inputs)
                          + batch * (c_last + 2))

    kernel = _build_kernel(h0, w0, nblocks, tuple(gh_list))
    logits3, feat3 = pl.pallas_call(
        kernel,
        grid=(batch,),
        out_shape=(jax.ShapeDtypeStruct((batch, 1, 1), jnp.float32),
                   jax.ShapeDtypeStruct((batch, c_last, 1), jnp.float32)),
        in_specs=in_specs,
        out_specs=(pl.BlockSpec((1, 1, 1), lambda n: (n, 0, 0)),
                   pl.BlockSpec((1, c_last, 1), lambda n: (n, 0, 0))),
        compiler_params=pltpu.CompilerParams(
            dimension_semantics=("parallel",)),       # per-image -> both v7x TCs
        cost_estimate=pl.CostEstimate(flops=int(flops), transcendentals=0,
                                      bytes_accessed=int(bytes_accessed)),
    )(*inputs)
    return logits3[:, :, 0], feat3[:, :, 0]


# ------------------------- parameters / spectral norm -------------------------

def init_params(key, ndf=8, ndlayers=2, in_ch=3):
    def conv_init(k, cout, cin, ksize):
        kw, kb = jax.random.split(k)
        fan_in = cin * ksize * ksize
        wgt = jax.random.normal(kw, (cout, cin, ksize, ksize),
                                jnp.float32) / np.sqrt(fan_in)
        bias = 0.1 * jax.random.normal(kb, (cout,), jnp.float32)
        return wgt, bias

    blocks = []
    # OptimizedBlock(3, ndf)
    key, k1, k2, k3 = jax.random.split(key, 4)
    c1w, c1b = conv_init(k1, ndf, in_ch, 3)
    c2w, c2b = conv_init(k2, ndf, ndf, 3)
    scw, scb = conv_init(k3, ndf, in_ch, 1)
    blocks.append(dict(c1_w=c1w, c1_b=c1b, c2_w=c2w, c2_b=c2b,
                       sc_w=scw, sc_b=scb))
    # ResBlock(t, 2t, downsample=True) x ndlayers  (hidden_channels == in)
    tndf = ndf
    for _ in range(ndlayers):
        key, k1, k2, k3 = jax.random.split(key, 4)
        c1w, c1b = conv_init(k1, tndf, tndf, 3)
        c2w, c2b = conv_init(k2, 2 * tndf, tndf, 3)
        scw, scb = conv_init(k3, 2 * tndf, tndf, 1)
        blocks.append(dict(c1_w=c1w, c1_b=c1b, c2_w=c2w, c2_b=c2b,
                           sc_w=scw, sc_b=scb))
        tndf *= 2
    key, kf = jax.random.split(key)
    fc_w = jax.random.normal(kf, (1, tndf), jnp.float32) / np.sqrt(tndf)
    fc_b = jnp.zeros((1,), jnp.float32)
    return {"blocks": blocks, "fc_w": fc_w, "fc_b": fc_b}


def _spectral_normalize(w, key, n_iter=1, eps=1e-12):
    """W / sigma(W) with one power iteration (forward semantics of SNConv2d)."""
    mat = w.reshape(w.shape[0], -1)
    u = jax.random.normal(key, (mat.shape[0],), jnp.float32)
    u = u / (jnp.linalg.norm(u) + eps)
    v = None
    for _ in range(n_iter):
        v = mat.T @ u
        v = v / (jnp.linalg.norm(v) + eps)
        u = mat @ v
        u = u / (jnp.linalg.norm(u) + eps)
    sigma = u @ (mat @ v)
    return w / sigma


def apply_spectral_norm(params, key):
    # TODO(synk): SNConv2d/SNLinear keep a persistent power-iteration buffer `u`
    # across forwards; here `u` is re-drawn deterministically from the key
    # (pure preprocessing), which matches the math but not the running state.
    out = {"blocks": [], "fc_b": params["fc_b"]}
    for blk in params["blocks"]:
        nb = {}
        for name in ("c1_w", "c2_w", "sc_w"):
            key, sub = jax.random.split(key)
            nb[name] = _spectral_normalize(blk[name], sub)
        for name in ("c1_b", "c2_b", "sc_b"):
            nb[name] = blk[name]
        out["blocks"].append(nb)
    key, sub = jax.random.split(key)
    out["fc_w"] = _spectral_normalize(params["fc_w"], sub)
    return out


# ----------------------------- pure-JAX reference -----------------------------

def ref_forward(params, x):
    def conv(h, w, b, pad):
        y = lax.conv_general_dilated(
            h, w, (1, 1), [(pad, pad), (pad, pad)],
            dimension_numbers=("NCHW", "OIHW", "NCHW"),
            precision=lax.Precision.HIGHEST)
        return y + b[None, :, None, None]

    def pool2(h):
        n, c, hh, ww = h.shape
        return h.reshape(n, c, hh // 2, 2, ww // 2, 2).mean(axis=(3, 5))

    h = x
    for b, blk in enumerate(params["blocks"]):
        inp = h
        t = jax.nn.relu(h) if b > 0 else h
        t = conv(t, blk["c1_w"], blk["c1_b"], 1)
        t = jax.nn.relu(t)
        t = conv(t, blk["c2_w"], blk["c2_b"], 1)
        t = pool2(t)
        sc = conv(inp, blk["sc_w"], blk["sc_b"], 0)
        sc = pool2(sc)
        h = t + sc
    h = jax.nn.relu(h)
    feat = h.mean(axis=(2, 3))                       # global avg pool + view
    logits = feat @ params["fc_w"].T + params["fc_b"][None, :]
    return logits, feat


# ----------------------------------- main --------------------------------------

if __name__ == "__main__":
    # Small config consistent with the module: ndf=8, ndlayers=2, batch=2,
    # 16x16 RGB input (spatial 16 -> 8 -> 4 -> 2, channels 8/16/32).
    BATCH, IMAGE_SIZE, NDF, NDLAYERS = 2, 16, 8, 2

    root = jax.random.PRNGKey(0)
    k_init, k_sn, k_x = jax.random.split(root, 3)
    raw_params = init_params(k_init, ndf=NDF, ndlayers=NDLAYERS)
    params = apply_spectral_norm(raw_params, k_sn)
    x = jax.random.normal(k_x, (BATCH, 3, IMAGE_SIZE, IMAGE_SIZE), jnp.float32)

    logits, feat = discriminator_forward(params, x)
    logits = jax.block_until_ready(logits)
    feat = jax.block_until_ready(feat)

    c_last = NDF * (2 ** NDLAYERS)
    assert logits.shape == (BATCH, 1)
    assert feat.shape == (BATCH, c_last)

    ref_logits, ref_feat = ref_forward(params, x)
    assert jnp.allclose(feat, ref_feat, atol=2e-3, rtol=2e-2), \
        float(jnp.max(jnp.abs(feat - ref_feat)))
    assert jnp.allclose(logits, ref_logits, atol=2e-3, rtol=2e-2), \
        float(jnp.max(jnp.abs(logits - ref_logits)))

    print("KERNEL_OK")
</pallas_src>

<mosaic_0001>
module attributes {stable_mosaic.version = 11 : i64} {
  func.func @kernel(%arg0: i32, %arg1: memref<1x8x324xf32, #tpu.memory_space<vmem>>, %arg2: memref<8x72xf32, #tpu.memory_space<vmem>>, %arg3: memref<8x1xf32, #tpu.memory_space<vmem>>, %arg4: memref<8x72xf32, #tpu.memory_space<vmem>>, %arg5: memref<8x1xf32, #tpu.memory_space<vmem>>, %arg6: memref<8x8xf32, #tpu.memory_space<vmem>>, %arg7: memref<8x1xf32, #tpu.memory_space<vmem>>, %arg8: memref<288x80xf32, #tpu.memory_space<vmem>>, %arg9: memref<8x72xf32, #tpu.memory_space<vmem>>, %arg10: memref<8x1xf32, #tpu.memory_space<vmem>>, %arg11: memref<16x72xf32, #tpu.memory_space<vmem>>, %arg12: memref<16x1xf32, #tpu.memory_space<vmem>>, %arg13: memref<16x8xf32, #tpu.memory_space<vmem>>, %arg14: memref<16x1xf32, #tpu.memory_space<vmem>>, %arg15: memref<80x24xf32, #tpu.memory_space<vmem>>, %arg16: memref<16x144xf32, #tpu.memory_space<vmem>>, %arg17: memref<16x1xf32, #tpu.memory_space<vmem>>, %arg18: memref<32x144xf32, #tpu.memory_space<vmem>>, %arg19: memref<32x1xf32, #tpu.memory_space<vmem>>, %arg20: memref<32x16xf32, #tpu.memory_space<vmem>>, %arg21: memref<32x1xf32, #tpu.memory_space<vmem>>, %arg22: memref<24x8xf32, #tpu.memory_space<vmem>>, %arg23: memref<1x324xf32, #tpu.memory_space<vmem>>, %arg24: memref<1x100xf32, #tpu.memory_space<vmem>>, %arg25: memref<1x36xf32, #tpu.memory_space<vmem>>, %arg26: memref<1x16xf32, #tpu.memory_space<vmem>>, %arg27: memref<16x1xf32, #tpu.memory_space<vmem>>, %arg28: memref<1x32xf32, #tpu.memory_space<vmem>>, %arg29: memref<1x1xf32, #tpu.memory_space<vmem>>, %arg30: memref<1x1x1xf32, #tpu.memory_space<vmem>>, %arg31: memref<1x32x1xf32, #tpu.memory_space<vmem>>) attributes {dimension_semantics = [#tpu.dimension_semantics<parallel>], iteration_bounds = array<i64: 2>, scalar_prefetch = 0 : i64, scratch_operands = 0 : i64, tpu.core_type = #tpu.core_type<tc>, window_params = [{transform_indices = @transform_0, window_bounds = array<i64: 1, 8, 324>}, {pipeline_mode = #tpu.pipeline_mode<synchronous>, transform_indices = @transform_1, window_bounds = array<i64: 8, 72>}, {pipeline_mode = #tpu.pipeline_mode<synchronous>, transform_indices = @transform_2, window_bounds = array<i64: 8, 1>}, {pipeline_mode = #tpu.pipeline_mode<synchronous>, transform_indices = @transform_3, window_bounds = array<i64: 8, 72>}, {pipeline_mode = #tpu.pipeline_mode<synchronous>, transform_indices = @transform_4, window_bounds = array<i64: 8, 1>}, {pipeline_mode = #tpu.pipeline_mode<synchronous>, transform_indices = @transform_5, window_bounds = array<i64: 8, 8>}, {pipeline_mode = #tpu.pipeline_mode<synchronous>, transform_indices = @transform_6, window_bounds = array<i64: 8, 1>}, {pipeline_mode = #tpu.pipeline_mode<synchronous>, transform_indices = @transform_7, window_bounds = array<i64: 288, 80>}, {pipeline_mode = #tpu.pipeline_mode<synchronous>, transform_indices = @transform_8, window_bounds = array<i64: 8, 72>}, {pipeline_mode = #tpu.pipeline_mode<synchronous>, transform_indices = @transform_9, window_bounds = array<i64: 8, 1>}, {pipeline_mode = #tpu.pipeline_mode<synchronous>, transform_indices = @transform_10, window_bounds = array<i64: 16, 72>}, {pipeline_mode = #tpu.pipeline_mode<synchronous>, transform_indices = @transform_11, window_bounds = array<i64: 16, 1>}, {pipeline_mode = #tpu.pipeline_mode<synchronous>, transform_indices = @transform_12, window_bounds = array<i64: 16, 8>}, {pipeline_mode = #tpu.pipeline_mode<synchronous>, transform_indices = @transform_13, window_bounds = array<i64: 16, 1>}, {pipeline_mode = #tpu.pipeline_mode<synchronous>, transform_indices = @transform_14, window_bounds = array<i64: 80, 24>}, {pipeline_mode = #tpu.pipeline_mode<synchronous>, transform_indices = @transform_15, window_bounds = array<i64: 16, 144>}, {pipeline_mode = #tpu.pipeline_mode<synchronous>, transform_indices = @transform_16, window_bounds = array<i64: 16, 1>}, {pipeline_mode = #tpu.pipeline_mode<synchronous>, transform_indices = @transform_17, window_bounds = array<i64: 32, 144>}, {pipeline_mode = #tpu.pipeline_mode<synchronous>, transform_indices = @transform_18, window_bounds = array<i64: 32, 1>}, {pipeline_mode = #tpu.pipeline_mode<synchronous>, transform_indices = @transform_19, window_bounds = array<i64: 32, 16>}, {pipeline_mode = #tpu.pipeline_mode<synchronous>, transform_indices = @transform_20, window_bounds = array<i64: 32, 1>}, {pipeline_mode = #tpu.pipeline_mode<synchronous>, transform_indices = @transform_21, window_bounds = array<i64: 24, 8>}, {pipeline_mode = #tpu.pipeline_mode<synchronous>, transform_indices = @transform_22, window_bounds = array<i64: 1, 324>}, {pipeline_mode = #tpu.pipeline_mode<synchronous>, transform_indices = @transform_23, window_bounds = array<i64: 1, 100>}, {pipeline_mode = #tpu.pipeline_mode<synchronous>, transform_indices = @transform_24, window_bounds = array<i64: 1, 36>}, {pipeline_mode = #tpu.pipeline_mode<synchronous>, transform_indices = @transform_25, window_bounds = array<i64: 1, 16>}, {pipeline_mode = #tpu.pipeline_mode<synchronous>, transform_indices = @transform_26, window_bounds = array<i64: 16, 1>}, {pipeline_mode = #tpu.pipeline_mode<synchronous>, transform_indices = @transform_27, window_bounds = array<i64: 1, 32>}, {pipeline_mode = #tpu.pipeline_mode<synchronous>, transform_indices = @transform_28, window_bounds = array<i64: 1, 1>}, {transform_indices = @transform_29, window_bounds = array<i64: 1, 1, 1>}, {transform_indices = @transform_30, window_bounds = array<i64: 1, 32, 1>}]} {
    %c0 = arith.constant 0 : index
    %c0_0 = arith.constant 0 : index
    %c0_1 = arith.constant 0 : index
    %0 = vector.load %arg1[%c0, %c0_0, %c0_1] : memref<1x8x324xf32, #tpu.memory_space<vmem>>, vector<1x8x324xf32>
    %1 = vector.shape_cast %0 : vector<1x8x324xf32> to vector<8x324xf32>
    %c0_2 = arith.constant 0 : index
    %c0_3 = arith.constant 0 : index
    %2 = vector.load %arg23[%c0_2, %c0_3] : memref<1x324xf32, #tpu.memory_space<vmem>>, vector<1x324xf32>
    %c0_4 = arith.constant 0 : index
    %c0_5 = arith.constant 0 : index
    %3 = vector.load %arg24[%c0_4, %c0_5] : memref<1x100xf32, #tpu.memory_space<vmem>>, vector<1x100xf32>
    %4 = vector.extract_strided_slice %1 {offsets = [0, 0], sizes = [8, 286], strides = [1, 1]} : vector<8x324xf32> to vector<8x286xf32>
    %5 = vector.extract_strided_slice %1 {offsets = [0, 1], sizes = [8, 286], strides = [1, 1]} : vector<8x324xf32> to vector<8x286xf32>
    %6 = vector.extract_strided_slice %1 {offsets = [0, 2], sizes = [8, 286], strides = [1, 1]} : vector<8x324xf32> to vector<8x286xf32>
    %7 = vector.extract_strided_slice %1 {offsets = [0, 18], sizes = [8, 286], strides = [1, 1]} : vector<8x324xf32> to vector<8x286xf32>
    %8 = vector.extract_strided_slice %1 {offsets = [0, 19], sizes = [8, 286], strides = [1, 1]} : vector<8x324xf32> to vector<8x286xf32>
    %9 = vector.extract_strided_slice %1 {offsets = [0, 20], sizes = [8, 286], strides = [1, 1]} : vector<8x324xf32> to vector<8x286xf32>
    %10 = vector.extract_strided_slice %1 {offsets = [0, 36], sizes = [8, 286], strides = [1, 1]} : vector<8x324xf32> to vector<8x286xf32>
    %11 = vector.extract_strided_slice %1 {offsets = [0, 37], sizes = [8, 286], strides = [1, 1]} : vector<8x324xf32> to vector<8x286xf32>
    %12 = vector.extract_strided_slice %1 {offsets = [0, 38], sizes = [8, 286], strides = [1, 1]} : vector<8x324xf32> to vector<8x286xf32>
    %13 = tpu.concatenate %4, %5, %6, %7, %8, %9, %10, %11, %12 in 0 : vector<8x286xf32>, vector<8x286xf32>, vector<8x286xf32>, vector<8x286xf32>, vector<8x286xf32>, vector<8x286xf32>, vector<8x286xf32>, vector<8x286xf32>, vector<8x286xf32> -> vector<72x286xf32>
    %c0_6 = arith.constant 0 : index
    %c0_7 = arith.constant 0 : index
    %14 = vector.load %arg2[%c0_6, %c0_7] : memref<8x72xf32, #tpu.memory_space<vmem>>, vector<8x72xf32>
    %cst = arith.constant dense<0.000000e+00> : vector<8x286xf32>
    %15 = tpu.matmul %14, %13, %cst {dimension_numbers = #tpu.dot_dimension_numbers<[1], [0], [0], [1], [0, 0, 1, 1], [], []>} : vector<8x72xf32>, vector<72x286xf32>, vector<8x286xf32> -> vector<8x286xf32>
    %c0_8 = arith.constant 0 : index
    %c0_9 = arith.constant 0 : index
    %16 = vector.load %arg3[%c0_8, %c0_9] : memref<8x1xf32, #tpu.memory_space<vmem>>, vector<8x1xf32>
    %17 = vector.broadcast %16 : vector<8x1xf32> to vector<8x286xf32>
    %18 = arith.addf %15, %17 : vector<8x286xf32>
    %cst_10 = arith.constant 0.000000e+00 : f32
    %19 = vector.broadcast %cst_10 : f32 to vector<8x19xf32>
    %20 = tpu.concatenate %19, %18, %19 in 1 : vector<8x19xf32>, vector<8x286xf32>, vector<8x19xf32> -> vector<8x324xf32>
    %cst_11 = arith.constant 0.000000e+00 : f32
    %21 = vector.broadcast %cst_11 : f32 to vector<8x324xf32>
    %22 = arith.maximumf %20, %21 : vector<8x324xf32>
    %23 = vector.broadcast %2 : vector<1x324xf32> to vector<8x324xf32>
    %24 = arith.mulf %22, %23 : vector<8x324xf32>
    %25 = vector.extract_strided_slice %24 {offsets = [0, 0], sizes = [8, 286], strides = [1, 1]} : vector<8x324xf32> to vector<8x286xf32>
    %26 = vector.extract_strided_slice %24 {offsets = [0, 1], sizes = [8, 286], strides = [1, 1]} : vector<8x324xf32> to vector<8x286xf32>
    %27 = vector.extract_strided_slice %24 {offsets = [0, 2], sizes = [8, 286], strides = [1, 1]} : vector<8x324xf32> to vector<8x286xf32>
    %28 = vector.extract_strided_slice %24 {offsets = [0, 18], sizes = [8, 286], strides = [1, 1]} : vector<8x324xf32> to vector<8x286xf32>
    %29 = vector.extract_strided_slice %24 {offsets = [0, 19], sizes = [8, 286], strides = [1, 1]} : vector<8x324xf32> to vector<8x286xf32>
    %30 = vector.extract_strided_slice %24 {offsets = [0, 20], sizes = [8, 286], strides = [1, 1]} : vector<8x324xf32> to vector<8x286xf32>
    %31 = vector.extract_strided_slice %24 {offsets = [0, 36], sizes = [8, 286], strides = [1, 1]} : vector<8x324xf32> to vector<8x286xf32>
    %32 = vector.extract_strided_slice %24 {offsets = [0, 37], sizes = [8, 286], strides = [1, 1]} : vector<8x324xf32> to vector<8x286xf32>
    %33 = vector.extract_strided_slice %24 {offsets = [0, 38], sizes = [8, 286], strides = [1, 1]} : vector<8x324xf32> to vector<8x286xf32>
    %34 = tpu.concatenate %25, %26, %27, %28, %29, %30, %31, %32, %33 in 0 : vector<8x286xf32>, vector<8x286xf32>, vector<8x286xf32>, vector<8x286xf32>, vector<8x286xf32>, vector<8x286xf32>, vector<8x286xf32>, vector<8x286xf32>, vector<8x286xf32> -> vector<72x286xf32>
    %c0_12 = arith.constant 0 : index
    %c0_13 = arith.constant 0 : index
    %35 = vector.load %arg4[%c0_12, %c0_13] : memref<8x72xf32, #tpu.memory_space<vmem>>, vector<8x72xf32>
    %cst_14 = arith.constant dense<0.000000e+00> : vector<8x286xf32>
    %36 = tpu.matmul %35, %34, %cst_14 {dimension_numbers = #tpu.dot_dimension_numbers<[1], [0], [0], [1], [0, 0, 1, 1], [], []>} : vector<8x72xf32>, vector<72x286xf32>, vector<8x286xf32> -> vector<8x286xf32>
    %c0_15 = arith.constant 0 : index
    %c0_16 = arith.constant 0 : index
    %37 = vector.load %arg5[%c0_15, %c0_16] : memref<8x1xf32, #tpu.memory_space<vmem>>, vector<8x1xf32>
    %38 = vector.broadcast %37 : vector<8x1xf32> to vector<8x286xf32>
    %39 = arith.addf %36, %38 : vector<8x286xf32>
    %cst_17 = arith.constant 0.000000e+00 : f32
    %40 = vector.broadcast %cst_17 : f32 to vector<8x19xf32>
    %41 = tpu.concatenate %40, %39, %40 in 1 : vector<8x19xf32>, vector<8x286xf32>, vector<8x19xf32> -> vector<8x324xf32>
    %cst_18 = arith.constant 0.000000e+00 : f32
    %42 = vector.broadcast %cst_18 : f32 to vector<8x10xf32>
    %43 = vector.extract_strided_slice %41 {offsets = [0, 18], sizes = [8, 288], strides = [1, 1]} : vector<8x324xf32> to vector<8x288xf32>
    %c0_19 = arith.constant 0 : index
    %c0_20 = arith.constant 0 : index
    %44 = vector.load %arg8[%c0_19, %c0_20] : memref<288x80xf32, #tpu.memory_space<vmem>>, vector<288x80xf32>
    %cst_21 = arith.constant dense<0.000000e+00> : vector<8x80xf32>
    %45 = tpu.matmul %43, %44, %cst_21 {dimension_numbers = #tpu.dot_dimension_numbers<[1], [0], [0], [1], [0, 0, 1, 1], [], []>} : vector<8x288xf32>, vector<288x80xf32>, vector<8x80xf32> -> vector<8x80xf32>
    %46 = tpu.concatenate %42, %45, %42 in 1 : vector<8x10xf32>, vector<8x80xf32>, vector<8x10xf32> -> vector<8x100xf32>
    %cst_22 = arith.constant 0.000000e+00 : f32
    %47 = vector.broadcast %cst_22 : f32 to vector<8x10xf32>
    %48 = vector.extract_strided_slice %1 {offsets = [0, 18], sizes = [8, 288], strides = [1, 1]} : vector<8x324xf32> to vector<8x288xf32>
    %c0_23 = arith.constant 0 : index
    %c0_24 = arith.constant 0 : index
    %49 = vector.load %arg8[%c0_23, %c0_24] : memref<288x80xf32, #tpu.memory_space<vmem>>, vector<288x80xf32>
    %cst_25 = arith.constant dense<0.000000e+00> : vector<8x80xf32>
    %50 = tpu.matmul %48, %49, %cst_25 {dimension_numbers = #tpu.dot_dimension_numbers<[1], [0], [0], [1], [0, 0, 1, 1], [], []>} : vector<8x288xf32>, vector<288x80xf32>, vector<8x80xf32> -> vector<8x80xf32>
    %51 = tpu.concatenate %47, %50, %47 in 1 : vector<8x10xf32>, vector<8x80xf32>, vector<8x10xf32> -> vector<8x100xf32>
    %c0_26 = arith.constant 0 : index
    %c0_27 = arith.constant 0 : index
    %52 = vector.load %arg6[%c0_26, %c0_27] : memref<8x8xf32, #tpu.memory_space<vmem>>, vector<8x8xf32>
    %cst_28 = arith.constant dense<0.000000e+00> : vector<8x100xf32>
    %53 = tpu.matmul %52, %51, %cst_28 {dimension_numbers = #tpu.dot_dimension_numbers<[1], [0], [0], [1], [0, 0, 1, 1], [], []>} : vector<8x8xf32>, vector<8x100xf32>, vector<8x100xf32> -> vector<8x100xf32>
    %c0_29 = arith.constant 0 : index
    %c0_30 = arith.constant 0 : index
    %54 = vector.load %arg7[%c0_29, %c0_30] : memref<8x1xf32, #tpu.memory_space<vmem>>, vector<8x1xf32>
    %55 = vector.broadcast %54 : vector<8x1xf32> to vector<8x100xf32>
    %56 = arith.addf %53, %55 : vector<8x100xf32>
    %57 = vector.broadcast %3 : vector<1x100xf32> to vector<8x100xf32>
    %58 = arith.mulf %56, %57 : vector<8x100xf32>
    %59 = arith.addf %46, %58 : vector<8x100xf32>
    %c0_31 = arith.constant 0 : index
    %c0_32 = arith.constant 0 : index
    %60 = vector.load %arg24[%c0_31, %c0_32] : memref<1x100xf32, #tpu.memory_space<vmem>>, vector<1x100xf32>
    %c0_33 = arith.constant 0 : index
    %c0_34 = arith.constant 0 : index
    %61 = vector.load %arg25[%c0_33, %c0_34] : memref<1x36xf32, #tpu.memory_space<vmem>>, vector<1x36xf32>
    %cst_35 = arith.constant 0.000000e+00 : f32
    %62 = vector.broadcast %cst_35 : f32 to vector<8x100xf32>
    %63 = arith.maximumf %59, %62 : vector<8x100xf32>
    %64 = vector.extract_strided_slice %63 {offsets = [0, 0], sizes = [8, 78], strides = [1, 1]} : vector<8x100xf32> to vector<8x78xf32>
    %65 = vector.extract_strided_slice %63 {offsets = [0, 1], sizes = [8, 78], strides = [1, 1]} : vector<8x100xf32> to vector<8x78xf32>
    %66 = vector.extract_strided_slice %63 {offsets = [0, 2], sizes = [8, 78], strides = [1, 1]} : vector<8x100xf32> to vector<8x78xf32>
    %67 = vector.extract_strided_slice %63 {offsets = [0, 10], sizes = [8, 78], strides = [1, 1]} : vector<8x100xf32> to vector<8x78xf32>
    %68 = vector.extract_strided_slice %63 {offsets = [0, 11], sizes = [8, 78], strides = [1, 1]} : vector<8x100xf32> to vector<8x78xf32>
    %69 = vector.extract_strided_slice %63 {offsets = [0, 12], sizes = [8, 78], strides = [1, 1]} : vector<8x100xf32> to vector<8x78xf32>
    %70 = vector.extract_strided_slice %63 {offsets = [0, 20], sizes = [8, 78], strides = [1, 1]} : vector<8x100xf32> to vector<8x78xf32>
    %71 = vector.extract_strided_slice %63 {offsets = [0, 21], sizes = [8, 78], strides = [1, 1]} : vector<8x100xf32> to vector<8x78xf32>
    %72 = vector.extract_strided_slice %63 {offsets = [0, 22], sizes = [8, 78], strides = [1, 1]} : vector<8x100xf32> to vector<8x78xf32>
    %73 = tpu.concatenate %64, %65, %66, %67, %68, %69, %70, %71, %72 in 0 : vector<8x78xf32>, vector<8x78xf32>, vector<8x78xf32>, vector<8x78xf32>, vector<8x78xf32>, vector<8x78xf32>, vector<8x78xf32>, vector<8x78xf32>, vector<8x78xf32> -> vector<72x78xf32>
    %c0_36 = arith.constant 0 : index
    %c0_37 = arith.constant 0 : index
    %74 = vector.load %arg9[%c0_36, %c0_37] : memref<8x72xf32, #tpu.memory_space<vmem>>, vector<8x72xf32>
    %cst_38 = arith.constant dense<0.000000e+00> : vector<8x78xf32>
    %75 = tpu.matmul %74, %73, %cst_38 {dimension_numbers = #tpu.dot_dimension_numbers<[1], [0], [0], [1], [0, 0, 1, 1], [], []>} : vector<8x72xf32>, vector<72x78xf32>, vector<8x78xf32> -> vector<8x78xf32>
    %c0_39 = arith.constant 0 : index
    %c0_40 = arith.constant 0 : index
    %76 = vector.load %arg10[%c0_39, %c0_40] : memref<8x1xf32, #tpu.memory_space<vmem>>, vector<8x1xf32>
    %77 = vector.broadcast %76 : vector<8x1xf32> to vector<8x78xf32>
    %78 = arith.addf %75, %77 : vector<8x78xf32>
    %cst_41 = arith.constant 0.000000e+00 : f32
    %79 = vector.broadcast %cst_41 : f32 to vector<8x11xf32>
    %80 = tpu.concatenate %79, %78, %79 in 1 : vector<8x11xf32>, vector<8x78xf32>, vector<8x11xf32> -> vector<8x100xf32>
    %cst_42 = arith.constant 0.000000e+00 : f32
    %81 = vector.broadcast %cst_42 : f32 to vector<8x100xf32>
    %82 = arith.maximumf %80, %81 : vector<8x100xf32>
    %83 = vector.broadcast %60 : vector<1x100xf32> to vector<8x100xf32>
    %84 = arith.mulf %82, %83 : vector<8x100xf32>
    %85 = vector.extract_strided_slice %84 {offsets = [0, 0], sizes = [8, 78], strides = [1, 1]} : vector<8x100xf32> to vector<8x78xf32>
    %86 = vector.extract_strided_slice %84 {offsets = [0, 1], sizes = [8, 78], strides = [1, 1]} : vector<8x100xf32> to vector<8x78xf32>
    %87 = vector.extract_strided_slice %84 {offsets = [0, 2], sizes = [8, 78], strides = [1, 1]} : vector<8x100xf32> to vector<8x78xf32>
    %88 = vector.extract_strided_slice %84 {offsets = [0, 10], sizes = [8, 78], strides = [1, 1]} : vector<8x100xf32> to vector<8x78xf32>
    %89 = vector.extract_strided_slice %84 {offsets = [0, 11], sizes = [8, 78], strides = [1, 1]} : vector<8x100xf32> to vector<8x78xf32>
    %90 = vector.extract_strided_slice %84 {offsets = [0, 12], sizes = [8, 78], strides = [1, 1]} : vector<8x100xf32> to vector<8x78xf32>
    %91 = vector.extract_strided_slice %84 {offsets = [0, 20], sizes = [8, 78], strides = [1, 1]} : vector<8x100xf32> to vector<8x78xf32>
    %92 = vector.extract_strided_slice %84 {offsets = [0, 21], sizes = [8, 78], strides = [1, 1]} : vector<8x100xf32> to vector<8x78xf32>
    %93 = vector.extract_strided_slice %84 {offsets = [0, 22], sizes = [8, 78], strides = [1, 1]} : vector<8x100xf32> to vector<8x78xf32>
    %94 = tpu.concatenate %85, %86, %87, %88, %89, %90, %91, %92, %93 in 0 : vector<8x78xf32>, vector<8x78xf32>, vector<8x78xf32>, vector<8x78xf32>, vector<8x78xf32>, vector<8x78xf32>, vector<8x78xf32>, vector<8x78xf32>, vector<8x78xf32> -> vector<72x78xf32>
    %c0_43 = arith.constant 0 : index
    %c0_44 = arith.constant 0 : index
    %95 = vector.load %arg11[%c0_43, %c0_44] : memref<16x72xf32, #tpu.memory_space<vmem>>, vector<16x72xf32>
    %cst_45 = arith.constant dense<0.000000e+00> : vector<16x78xf32>
    %96 = tpu.matmul %95, %94, %cst_45 {dimension_numbers = #tpu.dot_dimension_numbers<[1], [0], [0], [1], [0, 0, 1, 1], [], []>} : vector<16x72xf32>, vector<72x78xf32>, vector<16x78xf32> -> vector<16x78xf32>
    %c0_46 = arith.constant 0 : index
    %c0_47 = arith.constant 0 : index
    %97 = vector.load %arg12[%c0_46, %c0_47] : memref<16x1xf32, #tpu.memory_space<vmem>>, vector<16x1xf32>
    %98 = vector.broadcast %97 : vector<16x1xf32> to vector<16x78xf32>
    %99 = arith.addf %96, %98 : vector<16x78xf32>
    %cst_48 = arith.constant 0.000000e+00 : f32
    %100 = vector.broadcast %cst_48 : f32 to vector<16x11xf32>
    %101 = tpu.concatenate %100, %99, %100 in 1 : vector<16x11xf32>, vector<16x78xf32>, vector<16x11xf32> -> vector<16x100xf32>
    %cst_49 = arith.constant 0.000000e+00 : f32
    %102 = vector.broadcast %cst_49 : f32 to vector<16x6xf32>
    %103 = vector.extract_strided_slice %101 {offsets = [0, 10], sizes = [16, 80], strides = [1, 1]} : vector<16x100xf32> to vector<16x80xf32>
    %c0_50 = arith.constant 0 : index
    %c0_51 = arith.constant 0 : index
    %104 = vector.load %arg15[%c0_50, %c0_51] : memref<80x24xf32, #tpu.memory_space<vmem>>, vector<80x24xf32>
    %cst_52 = arith.constant dense<0.000000e+00> : vector<16x24xf32>
    %105 = tpu.matmul %103, %104, %cst_52 {dimension_numbers = #tpu.dot_dimension_numbers<[1], [0], [0], [1], [0, 0, 1, 1], [], []>} : vector<16x80xf32>, vector<80x24xf32>, vector<16x24xf32> -> vector<16x24xf32>
    %106 = tpu.concatenate %102, %105, %102 in 1 : vector<16x6xf32>, vector<16x24xf32>, vector<16x6xf32> -> vector<16x36xf32>
    %cst_53 = arith.constant 0.000000e+00 : f32
    %107 = vector.broadcast %cst_53 : f32 to vector<8x6xf32>
    %108 = vector.extract_strided_slice %59 {offsets = [0, 10], sizes = [8, 80], strides = [1, 1]} : vector<8x100xf32> to vector<8x80xf32>
    %c0_54 = arith.constant 0 : index
    %c0_55 = arith.constant 0 : index
    %109 = vector.load %arg15[%c0_54, %c0_55] : memref<80x24xf32, #tpu.memory_space<vmem>>, vector<80x24xf32>
    %cst_56 = arith.constant dense<0.000000e+00> : vector<8x24xf32>
    %110 = tpu.matmul %108, %109, %cst_56 {dimension_numbers = #tpu.dot_dimension_numbers<[1], [0], [0], [1], [0, 0, 1, 1], [], []>} : vector<8x80xf32>, vector<80x24xf32>, vector<8x24xf32> -> vector<8x24xf32>
    %111 = tpu.concatenate %107, %110, %107 in 1 : vector<8x6xf32>, vector<8x24xf32>, vector<8x6xf32> -> vector<8x36xf32>
    %c0_57 = arith.constant 0 : index
    %c0_58 = arith.constant 0 : index
    %112 = vector.load %arg13[%c0_57, %c0_58] : memref<16x8xf32, #tpu.memory_space<vmem>>, vector<16x8xf32>
    %cst_59 = arith.constant dense<0.000000e+00> : vector<16x36xf32>
    %113 = tpu.matmul %112, %111, %cst_59 {dimension_numbers = #tpu.dot_dimension_numbers<[1], [0], [0], [1], [0, 0, 1, 1], [], []>} : vector<16x8xf32>, vector<8x36xf32>, vector<16x36xf32> -> vector<16x36xf32>
    %c0_60 = arith.constant 0 : index
    %c0_61 = arith.constant 0 : index
    %114 = vector.load %arg14[%c0_60, %c0_61] : memref<16x1xf32, #tpu.memory_space<vmem>>, vector<16x1xf32>
    %115 = vector.broadcast %114 : vector<16x1xf32> to vector<16x36xf32>
    %116 = arith.addf %113, %115 : vector<16x36xf32>
    %117 = vector.broadcast %61 : vector<1x36xf32> to vector<16x36xf32>
    %118 = arith.mulf %116, %117 : vector<16x36xf32>
    %119 = arith.addf %106, %118 : vector<16x36xf32>
    %c0_62 = arith.constant 0 : index
    %c0_63 = arith.constant 0 : index
    %120 = vector.load %arg25[%c0_62, %c0_63] : memref<1x36xf32, #tpu.memory_space<vmem>>, vector<1x36xf32>
    %c0_64 = arith.constant 0 : index
    %c0_65 = arith.constant 0 : index
    %121 = vector.load %arg26[%c0_64, %c0_65] : memref<1x16xf32, #tpu.memory_space<vmem>>, vector<1x16xf32>
    %cst_66 = arith.constant 0.000000e+00 : f32
    %122 = vector.broadcast %cst_66 : f32 to vector<16x36xf32>
    %123 = arith.maximumf %119, %122 : vector<16x36xf32>
    %124 = vector.extract_strided_slice %123 {offsets = [0, 0], sizes = [16, 22], strides = [1, 1]} : vector<16x36xf32> to vector<16x22xf32>
    %125 = vector.extract_strided_slice %123 {offsets = [0, 1], sizes = [16, 22], strides = [1, 1]} : vector<16x36xf32> to vector<16x22xf32>
    %126 = vector.extract_strided_slice %123 {offsets = [0, 2], sizes = [16, 22], strides = [1, 1]} : vector<16x36xf32> to vector<16x22xf32>
    %127 = vector.extract_strided_slice %123 {offsets = [0, 6], sizes = [16, 22], strides = [1, 1]} : vector<16x36xf32> to vector<16x22xf32>
    %128 = vector.extract_strided_slice %123 {offsets = [0, 7], sizes = [16, 22], strides = [1, 1]} : vector<16x36xf32> to vector<16x22xf32>
    %129 = vector.extract_strided_slice %123 {offsets = [0, 8], sizes = [16, 22], strides = [1, 1]} : vector<16x36xf32> to vector<16x22xf32>
    %130 = vector.extract_strided_slice %123 {offsets = [0, 12], sizes = [16, 22], strides = [1, 1]} : vector<16x36xf32> to vector<16x22xf32>
    %131 = vector.extract_strided_slice %123 {offsets = [0, 13], sizes = [16, 22], strides = [1, 1]} : vector<16x36xf32> to vector<16x22xf32>
    %132 = vector.extract_strided_slice %123 {offsets = [0, 14], sizes = [16, 22], strides = [1, 1]} : vector<16x36xf32> to vector<16x22xf32>
    %133 = tpu.concatenate %124, %125, %126, %127, %128, %129, %130, %131, %132 in 0 : vector<16x22xf32>, vector<16x22xf32>, vector<16x22xf32>, vector<16x22xf32>, vector<16x22xf32>, vector<16x22xf32>, vector<16x22xf32>, vector<16x22xf32>, vector<16x22xf32> -> vector<144x22xf32>
    %c0_67 = arith.constant 0 : index
    %c0_68 = arith.constant 0 : index
    %134 = vector.load %arg16[%c0_67, %c0_68] : memref<16x144xf32, #tpu.memory_space<vmem>>, vector<16x144xf32>
    %cst_69 = arith.constant dense<0.000000e+00> : vector<16x22xf32>
    %135 = tpu.matmul %134, %133, %cst_69 {dimension_numbers = #tpu.dot_dimension_numbers<[1], [0], [0], [1], [0, 0, 1, 1], [], []>} : vector<16x144xf32>, vector<144x22xf32>, vector<16x22xf32> -> vector<16x22xf32>
    %c0_70 = arith.constant 0 : index
    %c0_71 = arith.constant 0 : index
    %136 = vector.load %arg17[%c0_70, %c0_71] : memref<16x1xf32, #tpu.memory_space<vmem>>, vector<16x1xf32>
    %137 = vector.broadcast %136 : vector<16x1xf32> to vector<16x22xf32>
    %138 = arith.addf %135, %137 : vector<16x22xf32>
    %cst_72 = arith.constant 0.000000e+00 : f32
    %139 = vector.broadcast %cst_72 : f32 to vector<16x7xf32>
    %140 = tpu.concatenate %139, %138, %139 in 1 : vector<16x7xf32>, vector<16x22xf32>, vector<16x7xf32> -> vector<16x36xf32>
    %cst_73 = arith.constant 0.000000e+00 : f32
    %141 = vector.broadcast %cst_73 : f32 to vector<16x36xf32>
    %142 = arith.maximumf %140, %141 : vector<16x36xf32>
    %143 = vector.broadcast %120 : vector<1x36xf32> to vector<16x36xf32>
    %144 = arith.mulf %142, %143 : vector<16x36xf32>
    %145 = vector.extract_strided_slice %144 {offsets = [0, 0], sizes = [16, 22], strides = [1, 1]} : vector<16x36xf32> to vector<16x22xf32>
    %146 = vector.extract_strided_slice %144 {offsets = [0, 1], sizes = [16, 22], strides = [1, 1]} : vector<16x36xf32> to vector<16x22xf32>
    %147 = vector.extract_strided_slice %144 {offsets = [0, 2], sizes = [16, 22], strides = [1, 1]} : vector<16x36xf32> to vector<16x22xf32>
    %148 = vector.extract_strided_slice %144 {offsets = [0, 6], sizes = [16, 22], strides = [1, 1]} : vector<16x36xf32> to vector<16x22xf32>
    %149 = vector.extract_strided_slice %144 {offsets = [0, 7], sizes = [16, 22], strides = [1, 1]} : vector<16x36xf32> to vector<16x22xf32>
    %150 = vector.extract_strided_slice %144 {offsets = [0, 8], sizes = [16, 22], strides = [1, 1]} : vector<16x36xf32> to vector<16x22xf32>
    %151 = vector.extract_strided_slice %144 {offsets = [0, 12], sizes = [16, 22], strides = [1, 1]} : vector<16x36xf32> to vector<16x22xf32>
    %152 = vector.extract_strided_slice %144 {offsets = [0, 13], sizes = [16, 22], strides = [1, 1]} : vector<16x36xf32> to vector<16x22xf32>
    %153 = vector.extract_strided_slice %144 {offsets = [0, 14], sizes = [16, 22], strides = [1, 1]} : vector<16x36xf32> to vector<16x22xf32>
    %154 = tpu.concatenate %145, %146, %147, %148, %149, %150, %151, %152, %153 in 0 : vector<16x22xf32>, vector<16x22xf32>, vector<16x22xf32>, vector<16x22xf32>, vector<16x22xf32>, vector<16x22xf32>, vector<16x22xf32>, vector<16x22xf32>, vector<16x22xf32> -> vector<144x22xf32>
    %c0_74 = arith.constant 0 : index
    %c0_75 = arith.constant 0 : index
    %155 = vector.load %arg18[%c0_74, %c0_75] : memref<32x144xf32, #tpu.memory_space<vmem>>, vector<32x144xf32>
    %cst_76 = arith.constant dense<0.000000e+00> : vector<32x22xf32>
    %156 = tpu.matmul %155, %154, %cst_76 {dimension_numbers = #tpu.dot_dimension_numbers<[1], [0], [0], [1], [0, 0, 1, 1], [], []>} : vector<32x144xf32>, vector<144x22xf32>, vector<32x22xf32> -> vector<32x22xf32>
    %c0_77 = arith.constant 0 : index
    %c0_78 = arith.constant 0 : index
    %157 = vector.load %arg19[%c0_77, %c0_78] : memref<32x1xf32, #tpu.memory_space<vmem>>, vector<32x1xf32>
    %158 = vector.broadcast %157 : vector<32x1xf32> to vector<32x22xf32>
    %159 = arith.addf %156, %158 : vector<32x22xf32>
    %cst_79 = arith.constant 0.000000e+00 : f32
    %160 = vector.broadcast %cst_79 : f32 to vector<32x7xf32>
    %161 = tpu.concatenate %160, %159, %160 in 1 : vector<32x7xf32>, vector<32x22xf32>, vector<32x7xf32> -> vector<32x36xf32>
    %cst_80 = arith.constant 0.000000e+00 : f32
    %162 = vector.broadcast %cst_80 : f32 to vector<32x4xf32>
    %163 = vector.extract_strided_slice %161 {offsets = [0, 6], sizes = [32, 24], strides = [1, 1]} : vector<32x36xf32> to vector<32x24xf32>
    %c0_81 = arith.constant 0 : index
    %c0_82 = arith.constant 0 : index
    %164 = vector.load %arg22[%c0_81, %c0_82] : memref<24x8xf32, #tpu.memory_space<vmem>>, vector<24x8xf32>
    %cst_83 = arith.constant dense<0.000000e+00> : vector<32x8xf32>
    %165 = tpu.matmul %163, %164, %cst_83 {dimension_numbers = #tpu.dot_dimension_numbers<[1], [0], [0], [1], [0, 0, 1, 1], [], []>} : vector<32x24xf32>, vector<24x8xf32>, vector<32x8xf32> -> vector<32x8xf32>
    %166 = tpu.concatenate %162, %165, %162 in 1 : vector<32x4xf32>, vector<32x8xf32>, vector<32x4xf32> -> vector<32x16xf32>
    %cst_84 = arith.constant 0.000000e+00 : f32
    %167 = vector.broadcast %cst_84 : f32 to vector<16x4xf32>
    %168 = vector.extract_strided_slice %119 {offsets = [0, 6], sizes = [16, 24], strides = [1, 1]} : vector<16x36xf32> to vector<16x24xf32>
    %c0_85 = arith.constant 0 : index
    %c0_86 = arith.constant 0 : index
    %169 = vector.load %arg22[%c0_85, %c0_86] : memref<24x8xf32, #tpu.memory_space<vmem>>, vector<24x8xf32>
    %cst_87 = arith.constant dense<0.000000e+00> : vector<16x8xf32>
    %170 = tpu.matmul %168, %169, %cst_87 {dimension_numbers = #tpu.dot_dimension_numbers<[1], [0], [0], [1], [0, 0, 1, 1], [], []>} : vector<16x24xf32>, vector<24x8xf32>, vector<16x8xf32> -> vector<16x8xf32>
    %171 = tpu.concatenate %167, %170, %167 in 1 : vector<16x4xf32>, vector<16x8xf32>, vector<16x4xf32> -> vector<16x16xf32>
    %c0_88 = arith.constant 0 : index
    %c0_89 = arith.constant 0 : index
    %172 = vector.load %arg20[%c0_88, %c0_89] : memref<32x16xf32, #tpu.memory_space<vmem>>, vector<32x16xf32>
    %cst_90 = arith.constant dense<0.000000e+00> : vector<32x16xf32>
    %173 = tpu.matmul %172, %171, %cst_90 {dimension_numbers = #tpu.dot_dimension_numbers<[1], [0], [0], [1], [0, 0, 1, 1], [], []>} : vector<32x16xf32>, vector<16x16xf32>, vector<32x16xf32> -> vector<32x16xf32>
    %c0_91 = arith.constant 0 : index
    %c0_92 = arith.constant 0 : index
    %174 = vector.load %arg21[%c0_91, %c0_92] : memref<32x1xf32, #tpu.memory_space<vmem>>, vector<32x1xf32>
    %175 = vector.broadcast %174 : vector<32x1xf32> to vector<32x16xf32>
    %176 = arith.addf %173, %175 : vector<32x16xf32>
    %177 = vector.broadcast %121 : vector<1x16xf32> to vector<32x16xf32>
    %178 = arith.mulf %176, %177 : vector<32x16xf32>
    %179 = arith.addf %166, %178 : vector<32x16xf32>
    %cst_93 = arith.constant 0.000000e+00 : f32
    %180 = vector.broadcast %cst_93 : f32 to vector<32x16xf32>
    %181 = arith.maximumf %179, %180 : vector<32x16xf32>
    %c0_94 = arith.constant 0 : index
    %c0_95 = arith.constant 0 : index
    %182 = vector.load %arg27[%c0_94, %c0_95] : memref<16x1xf32, #tpu.memory_space<vmem>>, vector<16x1xf32>
    %cst_96 = arith.constant dense<0.000000e+00> : vector<32x1xf32>
    %183 = tpu.matmul %181, %182, %cst_96 {dimension_numbers = #tpu.dot_dimension_numbers<[1], [0], [0], [1], [0, 0, 1, 1], [], []>} : vector<32x16xf32>, vector<16x1xf32>, vector<32x1xf32> -> vector<32x1xf32>
    %c0_97 = arith.constant 0 : index
    %c0_98 = arith.constant 0 : index
    %c0_99 = arith.constant 0 : index
    %184 = vector.load %arg31[%c0_97, %c0_98, %c0_99] : memref<1x32x1xf32, #tpu.memory_space<vmem>>, vector<1x32x1xf32>
    %185 = vector.shape_cast %184 : vector<1x32x1xf32> to vector<32x1xf32>
    %186 = vector.shape_cast %183 : vector<32x1xf32> to vector<1x32x1xf32>
    tpu.vector_store %arg31[%c0_97, %c0_98, %c0_99], %186 {strides = array<i32>} : memref<1x32x1xf32, #tpu.memory_space<vmem>>, vector<1x32x1xf32>,
    %c0_100 = arith.constant 0 : index
    %c0_101 = arith.constant 0 : index
    %187 = vector.load %arg28[%c0_100, %c0_101] : memref<1x32xf32, #tpu.memory_space<vmem>>, vector<1x32xf32>
    %cst_102 = arith.constant dense<0.000000e+00> : vector<1x1xf32>
    %188 = tpu.matmul %187, %183, %cst_102 {dimension_numbers = #tpu.dot_dimension_numbers<[1], [0], [0], [1], [0, 0, 1, 1], [], []>} : vector<1x32xf32>, vector<32x1xf32>, vector<1x1xf32> -> vector<1x1xf32>
    %c0_103 = arith.constant 0 : index
    %c0_104 = arith.constant 0 : index
    %189 = vector.load %arg29[%c0_103, %c0_104] : memref<1x1xf32, #tpu.memory_space<vmem>>, vector<1x1xf32>
    %190 = arith.addf %188, %189 : vector<1x1xf32>
    %c0_105 = arith.constant 0 : index
    %c0_106 = arith.constant 0 : index
    %c0_107 = arith.constant 0 : index
    %191 = vector.load %arg30[%c0_105, %c0_106, %c0_107] : memref<1x1x1xf32, #tpu.memory_space<vmem>>, vector<1x1x1xf32>
    %192 = vector.shape_cast %191 : vector<1x1x1xf32> to vector<1x1xf32>
    %193 = vector.shape_cast %190 : vector<1x1xf32> to vector<1x1x1xf32>
    tpu.vector_store %arg30[%c0_105, %c0_106, %c0_107], %193 {strides = array<i32>} : memref<1x1x1xf32, #tpu.memory_space<vmem>>, vector<1x1x1xf32>,
    return
  }
  func.func @transform_0(%arg0: i32) -> (i32, i32, i32) {
    %c0_i32 = arith.constant 0 : i32
    %c0_i32_0 = arith.constant 0 : i32
    %c0_i32_1 = arith.constant 0 : i32
    return %arg0, %c0_i32, %c0_i32_0 : i32, i32, i32
  }
  func.func @transform_1(%arg0: i32) -> (i32, i32) {
    %c0_i32 = arith.constant 0 : i32
    %c0_i32_0 = arith.constant 0 : i32
    %c0_i32_1 = arith.constant 0 : i32
    return %c0_i32, %c0_i32_0 : i32, i32
  }
  func.func @transform_2(%arg0: i32) -> (i32, i32) {
    %c0_i32 = arith.constant 0 : i32
    %c0_i32_0 = arith.constant 0 : i32
    %c0_i32_1 = arith.constant 0 : i32
    return %c0_i32, %c0_i32_0 : i32, i32
  }
  func.func @transform_3(%arg0: i32) -> (i32, i32) {
    %c0_i32 = arith.constant 0 : i32
    %c0_i32_0 = arith.constant 0 : i32
    %c0_i32_1 = arith.constant 0 : i32
    return %c0_i32, %c0_i32_0 : i32, i32
  }
  func.func @transform_4(%arg0: i32) -> (i32, i32) {
    %c0_i32 = arith.constant 0 : i32
    %c0_i32_0 = arith.constant 0 : i32
    %c0_i32_1 = arith.constant 0 : i32
    return %c0_i32, %c0_i32_0 : i32, i32
  }
  func.func @transform_5(%arg0: i32) -> (i32, i32) {
    %c0_i32 = arith.constant 0 : i32
    %c0_i32_0 = arith.constant 0 : i32
    %c0_i32_1 = arith.constant 0 : i32
    return %c0_i32, %c0_i32_0 : i32, i32
  }
  func.func @transform_6(%arg0: i32) -> (i32, i32) {
    %c0_i32 = arith.constant 0 : i32
    %c0_i32_0 = arith.constant 0 : i32
    %c0_i32_1 = arith.constant 0 : i32
    return %c0_i32, %c0_i32_0 : i32, i32
  }
  func.func @transform_7(%arg0: i32) -> (i32, i32) {
    %c0_i32 = arith.constant 0 : i32
    %c0_i32_0 = arith.constant 0 : i32
    %c0_i32_1 = arith.constant 0 : i32
    return %c0_i32, %c0_i32_0 : i32, i32
  }
  func.func @transform_8(%arg0: i32) -> (i32, i32) {
    %c0_i32 = arith.constant 0 : i32
    %c0_i32_0 = arith.constant 0 : i32
    %c0_i32_1 = arith.constant 0 : i32
    return %c0_i32, %c0_i32_0 : i32, i32
  }
  func.func @transform_9(%arg0: i32) -> (i32, i32) {
    %c0_i32 = arith.constant 0 : i32
    %c0_i32_0 = arith.constant 0 : i32
    %c0_i32_1 = arith.constant 0 : i32
    return %c0_i32, %c0_i32_0 : i32, i32
  }
  func.func @transform_10(%arg0: i32) -> (i32, i32) {
    %c0_i32 = arith.constant 0 : i32
    %c0_i32_0 = arith.constant 0 : i32
    %c0_i32_1 = arith.constant 0 : i32
    return %c0_i32, %c0_i32_0 : i32, i32
  }
  func.func @transform_11(%arg0: i32) -> (i32, i32) {
    %c0_i32 = arith.constant 0 : i32
    %c0_i32_0 = arith.constant 0 : i32
    %c0_i32_1 = arith.constant 0 : i32
    return %c0_i32, %c0_i32_0 : i32, i32
  }
  func.func @transform_12(%arg0: i32) -> (i32, i32) {
    %c0_i32 = arith.constant 0 : i32
    %c0_i32_0 = arith.constant 0 : i32
    %c0_i32_1 = arith.constant 0 : i32
    return %c0_i32, %c0_i32_0 : i32, i32
  }
  func.func @transform_13(%arg0: i32) -> (i32, i32) {
    %c0_i32 = arith.constant 0 : i32
    %c0_i32_0 = arith.constant 0 : i32
    %c0_i32_1 = arith.constant 0 : i32
    return %c0_i32, %c0_i32_0 : i32, i32
  }
  func.func @transform_14(%arg0: i32) -> (i32, i32) {
    %c0_i32 = arith.constant 0 : i32
    %c0_i32_0 = arith.constant 0 : i32
    %c0_i32_1 = arith.constant 0 : i32
    return %c0_i32, %c0_i32_0 : i32, i32
  }
  func.func @transform_15(%arg0: i32) -> (i32, i32) {
    %c0_i32 = arith.constant 0 : i32
    %c0_i32_0 = arith.constant 0 : i32
    %c0_i32_1 = arith.constant 0 : i32
    return %c0_i32, %c0_i32_0 : i32, i32
  }
  func.func @transform_16(%arg0: i32) -> (i32, i32) {
    %c0_i32 = arith.constant 0 : i32
    %c0_i32_0 = arith.constant 0 : i32
    %c0_i32_1 = arith.constant 0 : i32
    return %c0_i32, %c0_i32_0 : i32, i32
  }
  func.func @transform_17(%arg0: i32) -> (i32, i32) {
    %c0_i32 = arith.constant 0 : i32
    %c0_i32_0 = arith.constant 0 : i32
    %c0_i32_1 = arith.constant 0 : i32
    return %c0_i32, %c0_i32_0 : i32, i32
  }
  func.func @transform_18(%arg0: i32) -> (i32, i32) {
    %c0_i32 = arith.constant 0 : i32
    %c0_i32_0 = arith.constant 0 : i32
    %c0_i32_1 = arith.constant 0 : i32
    return %c0_i32, %c0_i32_0 : i32, i32
  }
  func.func @transform_19(%arg0: i32) -> (i32, i32) {
    %c0_i32 = arith.constant 0 : i32
    %c0_i32_0 = arith.constant 0 : i32
    %c0_i32_1 = arith.constant 0 : i32
    return %c0_i32, %c0_i32_0 : i32, i32
  }
  func.func @transform_20(%arg0: i32) -> (i32, i32) {
    %c0_i32 = arith.constant 0 : i32
    %c0_i32_0 = arith.constant 0 : i32
    %c0_i32_1 = arith.constant 0 : i32
    return %c0_i32, %c0_i32_0 : i32, i32
  }
  func.func @transform_21(%arg0: i32) -> (i32, i32) {
    %c0_i32 = arith.constant 0 : i32
    %c0_i32_0 = arith.constant 0 : i32
    %c0_i32_1 = arith.constant 0 : i32
    return %c0_i32, %c0_i32_0 : i32, i32
  }
  func.func @transform_22(%arg0: i32) -> (i32, i32) {
    %c0_i32 = arith.constant 0 : i32
    %c0_i32_0 = arith.constant 0 : i32
    %c0_i32_1 = arith.constant 0 : i32
    return %c0_i32, %c0_i32_0 : i32, i32
  }
  func.func @transform_23(%arg0: i32) -> (i32, i32) {
    %c0_i32 = arith.constant 0 : i32
    %c0_i32_0 = arith.constant 0 : i32
    %c0_i32_1 = arith.constant 0 : i32
    return %c0_i32, %c0_i32_0 : i32, i32
  }
  func.func @transform_24(%arg0: i32) -> (i32, i32) {
    %c0_i32 = arith.constant 0 : i32
    %c0_i32_0 = arith.constant 0 : i32
    %c0_i32_1 = arith.constant 0 : i32
    return %c0_i32, %c0_i32_0 : i32, i32
  }
  func.func @transform_25(%arg0: i32) -> (i32, i32) {
    %c0_i32 = arith.constant 0 : i32
    %c0_i32_0 = arith.constant 0 : i32
    %c0_i32_1 = arith.constant 0 : i32
    return %c0_i32, %c0_i32_0 : i32, i32
  }
  func.func @transform_26(%arg0: i32) -> (i32, i32) {
    %c0_i32 = arith.constant 0 : i32
    %c0_i32_0 = arith.constant 0 : i32
    %c0_i32_1 = arith.constant 0 : i32
    return %c0_i32, %c0_i32_0 : i32, i32
  }
  func.func @transform_27(%arg0: i32) -> (i32, i32) {
    %c0_i32 = arith.constant 0 : i32
    %c0_i32_0 = arith.constant 0 : i32
    %c0_i32_1 = arith.constant 0 : i32
    return %c0_i32, %c0_i32_0 : i32, i32
  }
  func.func @transform_28(%arg0: i32) -> (i32, i32) {
    %c0_i32 = arith.constant 0 : i32
    %c0_i32_0 = arith.constant 0 : i32
    %c0_i32_1 = arith.constant 0 : i32
    return %c0_i32, %c0_i32_0 : i32, i32
  }
  func.func @transform_29(%arg0: i32) -> (i32, i32, i32) {
    %c0_i32 = arith.constant 0 : i32
    %c0_i32_0 = arith.constant 0 : i32
    %c0_i32_1 = arith.constant 0 : i32
    return %arg0, %c0_i32, %c0_i32_0 : i32, i32, i32
  }
  func.func @transform_30(%arg0: i32) -> (i32, i32, i32) {
    %c0_i32 = arith.constant 0 : i32
    %c0_i32_0 = arith.constant 0 : i32
    %c0_i32_1 = arith.constant 0 : i32
    return %arg0, %c0_i32, %c0_i32_0 : i32, i32, i32
  }
}

</mosaic_0001>

<llo_original>
// kernel: discriminator_forward.1
$region0: #{discriminator_forward.1}
  #allocation0 [shape = 'u32[]', space=smem, size = 0x4, offset = 0x4, fixed_abs, tag = 'smem constant byte address 0x4 - core index']
  #allocation1 [shape = 'u32[144,128]{1,0:T(1,128)}', space=vmem, size = 0x12000, scoped, tag = 'internal scratch']
  #allocation2 [shape = 'f32[1,1]{1,0:T(1,128)S(1)}', space=vmem, size = 0x200, scoped, tag = 'scoped memory for discriminator_forward.1']
  %s0 = inlined_call_operand.smem [shape: u32[31], index: -1, kind: input, shape index: {}]
  %s1 = sld [smem:[%s0]]
  %s2 = scalar_lea.smem %s0, 1
  %s3 = sld [smem:[%s2]]
  %s4 = scalar_lea.smem %s0, 2
  %s5 = sld [smem:[%s4]]
  %s6 = scalar_lea.smem %s0, 3
  %s7 = sld [smem:[%s6]]
  %s8 = scalar_lea.smem %s0, 4
  %s9 = sld [smem:[%s8]]
  %s10 = scalar_lea.smem %s0, 5
  %s11 = sld [smem:[%s10]]
  %s12 = scalar_lea.smem %s0, 6
  %s13 = sld [smem:[%s12]]
  %s14 = scalar_lea.smem %s0, 7
  %s15 = sld [smem:[%s14]]
  %s16 = scalar_lea.smem %s0, 8
  %s17 = sld [smem:[%s16]]
  %s18 = scalar_lea.smem %s0, 9
  %s19 = sld [smem:[%s18]]
  %s20 = scalar_lea.smem %s0, 10
  %s21 = sld [smem:[%s20]]
  %s22 = scalar_lea.smem %s0, 11
  %s23 = sld [smem:[%s22]]
  %s24 = scalar_lea.smem %s0, 12
  %s25 = sld [smem:[%s24]]
  %s26 = scalar_lea.smem %s0, 13
  %s27 = sld [smem:[%s26]]
  %s28 = scalar_lea.smem %s0, 14
  %s29 = sld [smem:[%s28]]
  %s30 = scalar_lea.smem %s0, 15
  %s31 = sld [smem:[%s30]]
  %s32 = scalar_lea.smem %s0, 16
  %s33 = sld [smem:[%s32]]
  %s34 = scalar_lea.smem %s0, 17
  %s35 = sld [smem:[%s34]]
  %s36 = scalar_lea.smem %s0, 18
  %s37 = sld [smem:[%s36]]
  %s38 = scalar_lea.smem %s0, 19
  %s39 = sld [smem:[%s38]]
  %s40 = scalar_lea.smem %s0, 20
  %s41 = sld [smem:[%s40]]
  %s42 = scalar_lea.smem %s0, 21
  %s43 = sld [smem:[%s42]]
  %s44 = scalar_lea.smem %s0, 22
  %s45 = sld [smem:[%s44]]
  %s46 = scalar_lea.smem %s0, 23
  %s47 = sld [smem:[%s46]]
  %s48 = scalar_lea.smem %s0, 24
  %s49 = sld [smem:[%s48]]
  %s50 = scalar_lea.smem %s0, 25
  %s51 = sld [smem:[%s50]]
  %s52 = scalar_lea.smem %s0, 26
  %s53 = sld [smem:[%s52]]
  %s54 = scalar_lea.smem %s0, 27
  %s55 = sld [smem:[%s54]]
  %s56 = scalar_lea.smem %s0, 28
  %s57 = sld [smem:[%s56]]
  %s58 = scalar_lea.smem %s0, 29
  %s59 = sld [smem:[%s58]]
  %s60 = scalar_lea.smem %s0, 30
  %s61 = sld [smem:[%s60]]
  %62 = xla_tuple %s59, %s61
  %s63 = sld [smem:[#allocation0]]
  $region157: #{discriminator_forward.1} parent=0
    _
  %s65 = ssub.s32 1, %s63
  %s66 = scalar_select 0, %s65, %s63
  %v67 = vstv %s57
  %68 = vst [vmem:[#allocation2] sm:$0x1] %v67
  loop: start=0, step=1, limit=4
  $region2: #{discriminator_forward.1} parent=0 // loop_pre_header
    _
  $region3: #{discriminator_forward.1} parent=0 // loop_header
    %s70 = sphi 0, %s74
    %p71 = scmp.ge.s32.totalorder %s70, 4
    %s80 = sphi 0, %s82
    %s83 = sphi 0, %s80
    %s84 = sphi 0, %s83
    %s100 = sphi 0, %s84
    %s104 = sphi 0, %s104
    %s106 = sphi 0, %s104
    %s107 = sphi 0, %s106
    %s121 = sphi 0, %s107
    %s125 = sphi 0, %s125
    %s127 = sphi 0, %s125
    %s128 = sphi 0, %s127
    %s142 = sphi 0, %s128
    %s146 = sphi 0, %s146
    %s148 = sphi 0, %s146
    %s149 = sphi 0, %s148
    %s163 = sphi 0, %s149
    %s167 = sphi 0, %s167
    %s169 = sphi 0, %s167
    %s170 = sphi 0, %s169
    %s184 = sphi 0, %s170
    %s188 = sphi 0, %s188
    %s190 = sphi 0, %s188
    %s191 = sphi 0, %s190
    %s205 = sphi 0, %s191
    %s209 = sphi 0, %s209
    %s211 = sphi 0, %s209
    %s212 = sphi 0, %s211
    %s226 = sphi 0, %s212
    %s230 = sphi 0, %s230
    %s232 = sphi 0, %s230
    %s233 = sphi 0, %s232
    %s247 = sphi 0, %s233
    %s251 = sphi 0, %s251
    %s253 = sphi 0, %s251
    %s254 = sphi 0, %s253
    %s268 = sphi 0, %s254
    %s272 = sphi 0, %s272
    %s274 = sphi 0, %s272
    %s275 = sphi 0, %s274
    %s289 = sphi 0, %s275
    %s293 = sphi 0, %s293
    %s295 = sphi 0, %s293
    %s296 = sphi 0, %s295
    %s310 = sphi 0, %s296
    %s314 = sphi 0, %s314
    %s316 = sphi 0, %s314
    %s317 = sphi 0, %s316
    %s331 = sphi 0, %s317
    %s335 = sphi 0, %s335
    %s337 = sphi 0, %s335
    %s338 = sphi 0, %s337
    %s352 = sphi 0, %s338
    %s356 = sphi 0, %s356
    %s358 = sphi 0, %s356
    %s359 = sphi 0, %s358
    %s373 = sphi 0, %s359
    %s377 = sphi 0, %s377
    %s379 = sphi 0, %s377
    %s380 = sphi 0, %s379
    %s394 = sphi 0, %s380
    %s398 = sphi 0, %s398
    %s400 = sphi 0, %s398
    %s401 = sphi 0, %s400
    %s415 = sphi 0, %s401
    %s419 = sphi 0, %s419
    %s421 = sphi 0, %s419
    %s422 = sphi 0, %s421
    %s436 = sphi 0, %s422
    %s440 = sphi 0, %s440
    %s442 = sphi 0, %s440
    %s443 = sphi 0, %s442
    %s457 = sphi 0, %s443
    %s461 = sphi 0, %s461
    %s463 = sphi 0, %s461
    %s464 = sphi 0, %s463
    %s478 = sphi 0, %s464
    %s482 = sphi 0, %s482
    %s484 = sphi 0, %s482
    %s485 = sphi 0, %s484
    %s499 = sphi 0, %s485
    %s503 = sphi 0, %s503
    %s505 = sphi 0, %s503
    %s506 = sphi 0, %s505
    %s520 = sphi 0, %s506
    %s524 = sphi 0, %s524
    %s526 = sphi 0, %s524
    %s527 = sphi 0, %s526
    %s541 = sphi 0, %s527
    %s545 = sphi 0, %s545
    %s547 = sphi 0, %s545
    %s548 = sphi 0, %s547
    %s562 = sphi 0, %s548
    %s566 = sphi 0, %s566
    %s568 = sphi 0, %s566
    %s569 = sphi 0, %s568
    %s583 = sphi 0, %s569
    %s587 = sphi 0, %s587
    %s589 = sphi 0, %s587
    %s590 = sphi 0, %s589
    %s604 = sphi 0, %s590
    %s608 = sphi 0, %s608
    %s610 = sphi 0, %s608
    %s611 = sphi 0, %s610
    %s625 = sphi 0, %s611
    %s629 = sphi 0, %s629
    %s631 = sphi 0, %s629
    %s632 = sphi 0, %s631
    %s646 = sphi 0, %s632
    %s650 = sphi 0, %s650
    %s652 = sphi 0, %s650
    %s653 = sphi 0, %s652
    %s667 = sphi 0, %s653
    %s671 = sphi 0, %s671
    %s673 = sphi 0, %s671
    %s674 = sphi 0, %s673
    %s688 = sphi 0, %s674
    %s694 = sphi 0, %s696
    %s697 = sphi 0, %s694
    %s698 = sphi 0, %s697
    %s714 = sphi 0, %s698
    %s720 = sphi 0, %s722
    %s723 = sphi 0, %s720
    %s724 = sphi 0, %s723
    %s740 = sphi 0, %s724
  $region4: #{discriminator_forward.1} parent=0 // loop_header_branch
    %73 = sbr.rel (%p71) target = $region8
  $region5: #{discriminator_forward.1} parent=0 // loop_body
    %s75 = ssub.s32 %s70, 1
    %s76 = ssub.s32 %s70, 2
    %s77 = sadd.s32 %s70, 1
    %s78 = ssub.s32 %s70, %s77
    %p79 = scmp.eq.s32.totalorder %s78, 0
    %s81 = sadd.s32 %s80, 1
    %s82 = scalar_select %p79, %s80, %s81
    %p85 = pneg %p79
    %p86 = scmp.eq.s32.totalorder %s70, 1
    %p87 = por %p85, %p86
    %p88 = scmp.ne.s32.totalorder %s80, %s83
    %p89 = scmp.eq.s32.totalorder %s70, 0
    %p90 = por %p88, %p89
    %p91 = scmp.ne.s32.totalorder %s80, %s83
    %p92 = scmp.eq.s32.totalorder %s75, 1
    %p93 = por %p91, %p92
    %p94 = scmp.ne.s32.totalorder %s83, %s84
    %p95 = scmp.eq.s32.totalorder %s75, 0
    %p96 = por %p94, %p95
    %p97 = scmp.ne.s32.totalorder %s83, %s84
    %p98 = scmp.eq.s32.totalorder %s76, 1
    %p99 = por %p97, %p98
    %p101 = scmp.ne.s32.totalorder %s84, %s100
    %p102 = scmp.eq.s32.totalorder %s76, 0
    %p103 = por %p101, %p102
    %s105 = sadd.s32 %s104, 1
    %p108 = scmp.eq.s32.totalorder %s70, 1
    %p109 = scmp.ne.s32.totalorder %s104, %s106
    %p110 = scmp.eq.s32.totalorder %s70, 0
    %p111 = por %p109, %p110
    %p112 = scmp.ne.s32.totalorder %s104, %s106
    %p113 = scmp.eq.s32.totalorder %s75, 1
    %p114 = por %p112, %p113
    %p115 = scmp.ne.s32.totalorder %s106, %s107
    %p116 = scmp.eq.s32.totalorder %s75, 0
    %p117 = por %p115, %p116
    %p118 = scmp.ne.s32.totalorder %s106, %s107
    %p119 = scmp.eq.s32.totalorder %s76, 1
    %p120 = por %p118, %p119
    %p122 = scmp.ne.s32.totalorder %s107, %s121
    %p123 = scmp.eq.s32.totalorder %s76, 0
    %p124 = por %p122, %p123
    %s126 = sadd.s32 %s125, 1
    %p129 = scmp.eq.s32.totalorder %s70, 1
    %p130 = scmp.ne.s32.totalorder %s125, %s127
    %p131 = scmp.eq.s32.totalorder %s70, 0
    %p132 = por %p130, %p131
    %p133 = scmp.ne.s32.totalorder %s125, %s127
    %p134 = scmp.eq.s32.totalorder %s75, 1
    %p135 = por %p133, %p134
    %p136 = scmp.ne.s32.totalorder %s127, %s128
    %p137 = scmp.eq.s32.totalorder %s75, 0
    %p138 = por %p136, %p137
    %p139 = scmp.ne.s32.totalorder %s127, %s128
    %p140 = scmp.eq.s32.totalorder %s76, 1
    %p141 = por %p139, %p140
    %p143 = scmp.ne.s32.totalorder %s128, %s142
    %p144 = scmp.eq.s32.totalorder %s76, 0
    %p145 = por %p143, %p144
    %s147 = sadd.s32 %s146, 1
    %p150 = scmp.eq.s32.totalorder %s70, 1
    %p151 = scmp.ne.s32.totalorder %s146, %s148
    %p152 = scmp.eq.s32.totalorder %s70, 0
    %p153 = por %p151, %p152
    %p154 = scmp.ne.s32.totalorder %s146, %s148
    %p155 = scmp.eq.s32.totalorder %s75, 1
    %p156 = por %p154, %p155
    %p157 = scmp.ne.s32.totalorder %s148, %s149
    %p158 = scmp.eq.s32.totalorder %s75, 0
    %p159 = por %p157, %p158
    %p160 = scmp.ne.s32.totalorder %s148, %s149
    %p161 = scmp.eq.s32.totalorder %s76, 1
    %p162 = por %p160, %p161
    %p164 = scmp.ne.s32.totalorder %s149, %s163
    %p165 = scmp.eq.s32.totalorder %s76, 0
    %p166 = por %p164, %p165
    %s168 = sadd.s32 %s167, 1
    %p171 = scmp.eq.s32.totalorder %s70, 1
    %p172 = scmp.ne.s32.totalorder %s167, %s169
    %p173 = scmp.eq.s32.totalorder %s70, 0
    %p174 = por %p172, %p173
    %p175 = scmp.ne.s32.totalorder %s167, %s169
    %p176 = scmp.eq.s32.totalorder %s75, 1
    %p177 = por %p175, %p176
    %p178 = scmp.ne.s32.totalorder %s169, %s170
    %p179 = scmp.eq.s32.totalorder %s75, 0
    %p180 = por %p178, %p179
    %p181 = scmp.ne.s32.totalorder %s169, %s170
    %p182 = scmp.eq.s32.totalorder %s76, 1
    %p183 = por %p181, %p182
    %p185 = scmp.ne.s32.totalorder %s170, %s184
    %p186 = scmp.eq.s32.totalorder %s76, 0
    %p187 = por %p185, %p186
    %s189 = sadd.s32 %s188, 1
    %p192 = scmp.eq.s32.totalorder %s70, 1
    %p193 = scmp.ne.s32.totalorder %s188, %s190
    %p194 = scmp.eq.s32.totalorder %s70, 0
    %p195 = por %p193, %p194
    %p196 = scmp.ne.s32.totalorder %s188, %s190
    %p197 = scmp.eq.s32.totalorder %s75, 1
    %p198 = por %p196, %p197
    %p199 = scmp.ne.s32.totalorder %s190, %s191
    %p200 = scmp.eq.s32.totalorder %s75, 0
    %p201 = por %p199, %p200
    %p202 = scmp.ne.s32.totalorder %s190, %s191
    %p203 = scmp.eq.s32.totalorder %s76, 1
    %p204 = por %p202, %p203
    %p206 = scmp.ne.s32.totalorder %s191, %s205
    %p207 = scmp.eq.s32.totalorder %s76, 0
    %p208 = por %p206, %p207
    %s210 = sadd.s32 %s209, 1
    %p213 = scmp.eq.s32.totalorder %s70, 1
    %p214 = scmp.ne.s32.totalorder %s209, %s211
    %p215 = scmp.eq.s32.totalorder %s70, 0
    %p216 = por %p214, %p215
    %p217 = scmp.ne.s32.totalorder %s209, %s211
    %p218 = scmp.eq.s32.totalorder %s75, 1
    %p219 = por %p217, %p218
    %p220 = scmp.ne.s32.totalorder %s211, %s212
    %p221 = scmp.eq.s32.totalorder %s75, 0
    %p222 = por %p220, %p221
    %p223 = scmp.ne.s32.totalorder %s211, %s212
    %p224 = scmp.eq.s32.totalorder %s76, 1
    %p225 = por %p223, %p224
    %p227 = scmp.ne.s32.totalorder %s212, %s226
    %p228 = scmp.eq.s32.totalorder %s76, 0
    %p229 = por %p227, %p228
    %s231 = sadd.s32 %s230, 1
    %p234 = scmp.eq.s32.totalorder %s70, 1
    %p235 = scmp.ne.s32.totalorder %s230, %s232
    %p236 = scmp.eq.s32.totalorder %s70, 0
    %p237 = por %p235, %p236
    %p238 = scmp.ne.s32.totalorder %s230, %s232
    %p239 = scmp.eq.s32.totalorder %s75, 1
    %p240 = por %p238, %p239
    %p241 = scmp.ne.s32.totalorder %s232, %s233
    %p242 = scmp.eq.s32.totalorder %s75, 0
    %p243 = por %p241, %p242
    %p244 = scmp.ne.s32.totalorder %s232, %s233
    %p245 = scmp.eq.s32.totalorder %s76, 1
    %p246 = por %p244, %p245
    %p248 = scmp.ne.s32.totalorder %s233, %s247
    %p249 = scmp.eq.s32.totalorder %s76, 0
    %p250 = por %p248, %p249
    %s252 = sadd.s32 %s251, 1
    %p255 = scmp.eq.s32.totalorder %s70, 1
    %p256 = scmp.ne.s32.totalorder %s251, %s253
    %p257 = scmp.eq.s32.totalorder %s70, 0
    %p258 = por %p256, %p257
    %p259 = scmp.ne.s32.totalorder %s251, %s253
    %p260 = scmp.eq.s32.totalorder %s75, 1
    %p261 = por %p259, %p260
    %p262 = scmp.ne.s32.totalorder %s253, %s254
    %p263 = scmp.eq.s32.totalorder %s75, 0
    %p264 = por %p262, %p263
    %p265 = scmp.ne.s32.totalorder %s253, %s254
    %p266 = scmp.eq.s32.totalorder %s76, 1
    %p267 = por %p265, %p266
    %p269 = scmp.ne.s32.totalorder %s254, %s268
    %p270 = scmp.eq.s32.totalorder %s76, 0
    %p271 = por %p269, %p270
    %s273 = sadd.s32 %s272, 1
    %p276 = scmp.eq.s32.totalorder %s70, 1
    %p277 = scmp.ne.s32.totalorder %s272, %s274
    %p278 = scmp.eq.s32.totalorder %s70, 0
    %p279 = por %p277, %p278
    %p280 = scmp.ne.s32.totalorder %s272, %s274
    %p281 = scmp.eq.s32.totalorder %s75, 1
    %p282 = por %p280, %p281
    %p283 = scmp.ne.s32.totalorder %s274, %s275
    %p284 = scmp.eq.s32.totalorder %s75, 0
    %p285 = por %p283, %p284
    %p286 = scmp.ne.s32.totalorder %s274, %s275
    %p287 = scmp.eq.s32.totalorder %s76, 1
    %p288 = por %p286, %p287
    %p290 = scmp.ne.s32.totalorder %s275, %s289
    %p291 = scmp.eq.s32.totalorder %s76, 0
    %p292 = por %p290, %p291
    %s294 = sadd.s32 %s293, 1
    %p297 = scmp.eq.s32.totalorder %s70, 1
    %p298 = scmp.ne.s32.totalorder %s293, %s295
    %p299 = scmp.eq.s32.totalorder %s70, 0
    %p300 = por %p298, %p299
    %p301 = scmp.ne.s32.totalorder %s293, %s295
    %p302 = scmp.eq.s32.totalorder %s75, 1
    %p303 = por %p301, %p302
    %p304 = scmp.ne.s32.totalorder %s295, %s296
    %p305 = scmp.eq.s32.totalorder %s75, 0
    %p306 = por %p304, %p305
    %p307 = scmp.ne.s32.totalorder %s295, %s296
    %p308 = scmp.eq.s32.totalorder %s76, 1
    %p309 = por %p307, %p308
    %p311 = scmp.ne.s32.totalorder %s296, %s310
    %p312 = scmp.eq.s32.totalorder %s76, 0
    %p313 = por %p311, %p312
    %s315 = sadd.s32 %s314, 1
    %p318 = scmp.eq.s32.totalorder %s70, 1
    %p319 = scmp.ne.s32.totalorder %s314, %s316
    %p320 = scmp.eq.s32.totalorder %s70, 0
    %p321 = por %p319, %p320
    %p322 = scmp.ne.s32.totalorder %s314, %s316
    %p323 = scmp.eq.s32.totalorder %s75, 1
    %p324 = por %p322, %p323
    %p325 = scmp.ne.s32.totalorder %s316, %s317
    %p326 = scmp.eq.s32.totalorder %s75, 0
    %p327 = por %p325, %p326
    %p328 = scmp.ne.s32.totalorder %s316, %s317
    %p329 = scmp.eq.s32.totalorder %s76, 1
    %p330 = por %p328, %p329
    %p332 = scmp.ne.s32.totalorder %s317, %s331
    %p333 = scmp.eq.s32.totalorder %s76, 0
    %p334 = por %p332, %p333
    %s336 = sadd.s32 %s335, 1
    %p339 = scmp.eq.s32.totalorder %s70, 1
    %p340 = scmp.ne.s32.totalorder %s335, %s337
    %p341 = scmp.eq.s32.totalorder %s70, 0
    %p342 = por %p340, %p341
    %p343 = scmp.ne.s32.totalorder %s335, %s337
    %p344 = scmp.eq.s32.totalorder %s75, 1
    %p345 = por %p343, %p344
    %p346 = scmp.ne.s32.totalorder %s337, %s338
    %p347 = scmp.eq.s32.totalorder %s75, 0
    %p348 = por %p346, %p347
    %p349 = scmp.ne.s32.totalorder %s337, %s338
    %p350 = scmp.eq.s32.totalorder %s76, 1
    %p351 = por %p349, %p350
    %p353 = scmp.ne.s32.totalorder %s338, %s352
    %p354 = scmp.eq.s32.totalorder %s76, 0
    %p355 = por %p353, %p354
    %s357 = sadd.s32 %s356, 1
    %p360 = scmp.eq.s32.totalorder %s70, 1
    %p361 = scmp.ne.s32.totalorder %s356, %s358
    %p362 = scmp.eq.s32.totalorder %s70, 0
    %p363 = por %p361, %p362
    %p364 = scmp.ne.s32.totalorder %s356, %s358
    %p365 = scmp.eq.s32.totalorder %s75, 1
    %p366 = por %p364, %p365
    %p367 = scmp.ne.s32.totalorder %s358, %s359
    %p368 = scmp.eq.s32.totalorder %s75, 0
    %p369 = por %p367, %p368
    %p370 = scmp.ne.s32.totalorder %s358, %s359
    %p371 = scmp.eq.s32.totalorder %s76, 1
    %p372 = por %p370, %p371
    %p374 = scmp.ne.s32.totalorder %s359, %s373
    %p375 = scmp.eq.s32.totalorder %s76, 0
    %p376 = por %p374, %p375
    %s378 = sadd.s32 %s377, 1
    %p381 = scmp.eq.s32.totalorder %s70, 1
    %p382 = scmp.ne.s32.totalorder %s377, %s379
    %p383 = scmp.eq.s32.totalorder %s70, 0
    %p384 = por %p382, %p383
    %p385 = scmp.ne.s32.totalorder %s377, %s379
    %p386 = scmp.eq.s32.totalorder %s75, 1
    %p387 = por %p385, %p386
    %p388 = scmp.ne.s32.totalorder %s379, %s380
    %p389 = scmp.eq.s32.totalorder %s75, 0
    %p390 = por %p388, %p389
    %p391 = scmp.ne.s32.totalorder %s379, %s380
    %p392 = scmp.eq.s32.totalorder %s76, 1
    %p393 = por %p391, %p392
    %p395 = scmp.ne.s32.totalorder %s380, %s394
    %p396 = scmp.eq.s32.totalorder %s76, 0
    %p397 = por %p395, %p396
    %s399 = sadd.s32 %s398, 1
    %p402 = scmp.eq.s32.totalorder %s70, 1
    %p403 = scmp.ne.s32.totalorder %s398, %s400
    %p404 = scmp.eq.s32.totalorder %s70, 0
    %p405 = por %p403, %p404
    %p406 = scmp.ne.s32.totalorder %s398, %s400
    %p407 = scmp.eq.s32.totalorder %s75, 1
    %p408 = por %p406, %p407
    %p409 = scmp.ne.s32.totalorder %s400, %s401
    %p410 = scmp.eq.s32.totalorder %s75, 0
    %p411 = por %p409, %p410
    %p412 = scmp.ne.s32.totalorder %s400, %s401
    %p413 = scmp.eq.s32.totalorder %s76, 1
    %p414 = por %p412, %p413
    %p416 = scmp.ne.s32.totalorder %s401, %s415
    %p417 = scmp.eq.s32.totalorder %s76, 0
    %p418 = por %p416, %p417
    %s420 = sadd.s32 %s419, 1
    %p423 = scmp.eq.s32.totalorder %s70, 1
    %p424 = scmp.ne.s32.totalorder %s419, %s421
    %p425 = scmp.eq.s32.totalorder %s70, 0
    %p426 = por %p424, %p425
    %p427 = scmp.ne.s32.totalorder %s419, %s421
    %p428 = scmp.eq.s32.totalorder %s75, 1
    %p429 = por %p427, %p428
    %p430 = scmp.ne.s32.totalorder %s421, %s422
    %p431 = scmp.eq.s32.totalorder %s75, 0
    %p432 = por %p430, %p431
    %p433 = scmp.ne.s32.totalorder %s421, %s422
    %p434 = scmp.eq.s32.totalorder %s76, 1
    %p435 = por %p433, %p434
    %p437 = scmp.ne.s32.totalorder %s422, %s436
    %p438 = scmp.eq.s32.totalorder %s76, 0
    %p439 = por %p437, %p438
    %s441 = sadd.s32 %s440, 1
    %p444 = scmp.eq.s32.totalorder %s70, 1
    %p445 = scmp.ne.s32.totalorder %s440, %s442
    %p446 = scmp.eq.s32.totalorder %s70, 0
    %p447 = por %p445, %p446
    %p448 = scmp.ne.s32.totalorder %s440, %s442
    %p449 = scmp.eq.s32.totalorder %s75, 1
    %p450 = por %p448, %p449
    %p451 = scmp.ne.s32.totalorder %s442, %s443
    %p452 = scmp.eq.s32.totalorder %s75, 0
    %p453 = por %p451, %p452
    %p454 = scmp.ne.s32.totalorder %s442, %s443
    %p455 = scmp.eq.s32.totalorder %s76, 1
    %p456 = por %p454, %p455
    %p458 = scmp.ne.s32.totalorder %s443, %s457
    %p459 = scmp.eq.s32.totalorder %s76, 0
    %p460 = por %p458, %p459
    %s462 = sadd.s32 %s461, 1
    %p465 = scmp.eq.s32.totalorder %s70, 1
    %p466 = scmp.ne.s32.totalorder %s461, %s463
    %p467 = scmp.eq.s32.totalorder %s70, 0
    %p468 = por %p466, %p467
    %p469 = scmp.ne.s32.totalorder %s461, %s463
    %p470 = scmp.eq.s32.totalorder %s75, 1
    %p471 = por %p469, %p470
    %p472 = scmp.ne.s32.totalorder %s463, %s464
    %p473 = scmp.eq.s32.totalorder %s75, 0
    %p474 = por %p472, %p473
    %p475 = scmp.ne.s32.totalorder %s463, %s464
    %p476 = scmp.eq.s32.totalorder %s76, 1
    %p477 = por %p475, %p476
    %p479 = scmp.ne.s32.totalorder %s464, %s478
    %p480 = scmp.eq.s32.totalorder %s76, 0
    %p481 = por %p479, %p480
    %s483 = sadd.s32 %s482, 1
    %p486 = scmp.eq.s32.totalorder %s70, 1
    %p487 = scmp.ne.s32.totalorder %s482, %s484
    %p488 = scmp.eq.s32.totalorder %s70, 0
    %p489 = por %p487, %p488
    %p490 = scmp.ne.s32.totalorder %s482, %s484
    %p491 = scmp.eq.s32.totalorder %s75, 1
    %p492 = por %p490, %p491
    %p493 = scmp.ne.s32.totalorder %s484, %s485
    %p494 = scmp.eq.s32.totalorder %s75, 0
    %p495 = por %p493, %p494
    %p496 = scmp.ne.s32.totalorder %s484, %s485
    %p497 = scmp.eq.s32.totalorder %s76, 1
    %p498 = por %p496, %p497
    %p500 = scmp.ne.s32.totalorder %s485, %s499
    %p501 = scmp.eq.s32.totalorder %s76, 0
    %p502 = por %p500, %p501
    %s504 = sadd.s32 %s503, 1
    %p507 = scmp.eq.s32.totalorder %s70, 1
    %p508 = scmp.ne.s32.totalorder %s503, %s505
    %p509 = scmp.eq.s32.totalorder %s70, 0
    %p510 = por %p508, %p509
    %p511 = scmp.ne.s32.totalorder %s503, %s505
    %p512 = scmp.eq.s32.totalorder %s75, 1
    %p513 = por %p511, %p512
    %p514 = scmp.ne.s32.totalorder %s505, %s506
    %p515 = scmp.eq.s32.totalorder %s75, 0
    %p516 = por %p514, %p515
    %p517 = scmp.ne.s32.totalorder %s505, %s506
    %p518 = scmp.eq.s32.totalorder %s76, 1
    %p519 = por %p517, %p518
    %p521 = scmp.ne.s32.totalorder %s506, %s520
    %p522 = scmp.eq.s32.totalorder %s76, 0
    %p523 = por %p521, %p522
    %s525 = sadd.s32 %s524, 1
    %p528 = scmp.eq.s32.totalorder %s70, 1
    %p529 = scmp.ne.s32.totalorder %s524, %s526
    %p530 = scmp.eq.s32.totalorder %s70, 0
    %p531 = por %p529, %p530
    %p532 = scmp.ne.s32.totalorder %s524, %s526
    %p533 = scmp.eq.s32.totalorder %s75, 1
    %p534 = por %p532, %p533
    %p535 = scmp.ne.s32.totalorder %s526, %s527
    %p536 = scmp.eq.s32.totalorder %s75, 0
    %p537 = por %p535, %p536
    %p538 = scmp.ne.s32.totalorder %s526, %s527
    %p539 = scmp.eq.s32.totalorder %s76, 1
    %p540 = por %p538, %p539
    %p542 = scmp.ne.s32.totalorder %s527, %s541
    %p543 = scmp.eq.s32.totalorder %s76, 0
    %p544 = por %p542, %p543
    %s546 = sadd.s32 %s545, 1
    %p549 = scmp.eq.s32.totalorder %s70, 1
    %p550 = scmp.ne.s32.totalorder %s545, %s547
    %p551 = scmp.eq.s32.totalorder %s70, 0
    %p552 = por %p550, %p551
    %p553 = scmp.ne.s32.totalorder %s545, %s547
    %p554 = scmp.eq.s32.totalorder %s75, 1
    %p555 = por %p553, %p554
    %p556 = scmp.ne.s32.totalorder %s547, %s548
    %p557 = scmp.eq.s32.totalorder %s75, 0
    %p558 = por %p556, %p557
    %p559 = scmp.ne.s32.totalorder %s547, %s548
    %p560 = scmp.eq.s32.totalorder %s76, 1
    %p561 = por %p559, %p560
    %p563 = scmp.ne.s32.totalorder %s548, %s562
    %p564 = scmp.eq.s32.totalorder %s76, 0
    %p565 = por %p563, %p564
    %s567 = sadd.s32 %s566, 1
    %p570 = scmp.eq.s32.totalorder %s70, 1
    %p571 = scmp.ne.s32.totalorder %s566, %s568
    %p572 = scmp.eq.s32.totalorder %s70, 0
    %p573 = por %p571, %p572
    %p574 = scmp.ne.s32.totalorder %s566, %s568
    %p575 = scmp.eq.s32.totalorder %s75, 1
    %p576 = por %p574, %p575
    %p577 = scmp.ne.s32.totalorder %s568, %s569
    %p578 = scmp.eq.s32.totalorder %s75, 0
    %p579 = por %p577, %p578
    %p580 = scmp.ne.s32.totalorder %s568, %s569
    %p581 = scmp.eq.s32.totalorder %s76, 1
    %p582 = por %p580, %p581
    %p584 = scmp.ne.s32.totalorder %s569, %s583
    %p585 = scmp.eq.s32.totalorder %s76, 0
    %p586 = por %p584, %p585
    %s588 = sadd.s32 %s587, 1
    %p591 = scmp.eq.s32.totalorder %s70, 1
    %p592 = scmp.ne.s32.totalorder %s587, %s589
    %p593 = scmp.eq.s32.totalorder %s70, 0
    %p594 = por %p592, %p593
    %p595 = scmp.ne.s32.totalorder %s587, %s589
    %p596 = scmp.eq.s32.totalorder %s75, 1
    %p597 = por %p595, %p596
    %p598 = scmp.ne.s32.totalorder %s589, %s590
    %p599 = scmp.eq.s32.totalorder %s75, 0
    %p600 = por %p598, %p599
    %p601 = scmp.ne.s32.totalorder %s589, %s590
    %p602 = scmp.eq.s32.totalorder %s76, 1
    %p603 = por %p601, %p602
    %p605 = scmp.ne.s32.totalorder %s590, %s604
    %p606 = scmp.eq.s32.totalorder %s76, 0
    %p607 = por %p605, %p606
    %s609 = sadd.s32 %s608, 1
    %p612 = scmp.eq.s32.totalorder %s70, 1
    %p613 = scmp.ne.s32.totalorder %s608, %s610
    %p614 = scmp.eq.s32.totalorder %s70, 0
    %p615 = por %p613, %p614
    %p616 = scmp.ne.s32.totalorder %s608, %s610
    %p617 = scmp.eq.s32.totalorder %s75, 1
    %p618 = por %p616, %p617
    %p619 = scmp.ne.s32.totalorder %s610, %s611
    %p620 = scmp.eq.s32.totalorder %s75, 0
    %p621 = por %p619, %p620
    %p622 = scmp.ne.s32.totalorder %s610, %s611
    %p623 = scmp.eq.s32.totalorder %s76, 1
    %p624 = por %p622, %p623
    %p626 = scmp.ne.s32.totalorder %s611, %s625
    %p627 = scmp.eq.s32.totalorder %s76, 0
    %p628 = por %p626, %p627
    %s630 = sadd.s32 %s629, 1
    %p633 = scmp.eq.s32.totalorder %s70, 1
    %p634 = scmp.ne.s32.totalorder %s629, %s631
    %p635 = scmp.eq.s32.totalorder %s70, 0
    %p636 = por %p634, %p635
    %p637 = scmp.ne.s32.totalorder %s629, %s631
    %p638 = scmp.eq.s32.totalorder %s75, 1
    %p639 = por %p637, %p638
    %p640 = scmp.ne.s32.totalorder %s631, %s632
    %p641 = scmp.eq.s32.totalorder %s75, 0
    %p642 = por %p640, %p641
    %p643 = scmp.ne.s32.totalorder %s631, %s632
    %p644 = scmp.eq.s32.totalorder %s76, 1
    %p645 = por %p643, %p644
    %p647 = scmp.ne.s32.totalorder %s632, %s646
    %p648 = scmp.eq.s32.totalorder %s76, 0
    %p649 = por %p647, %p648
    %s651 = sadd.s32 %s650, 1
    %p654 = scmp.eq.s32.totalorder %s70, 1
    %p655 = scmp.ne.s32.totalorder %s650, %s652
    %p656 = scmp.eq.s32.totalorder %s70, 0
    %p657 = por %p655, %p656
    %p658 = scmp.ne.s32.totalorder %s650, %s652
    %p659 = scmp.eq.s32.totalorder %s75, 1
    %p660 = por %p658, %p659
    %p661 = scmp.ne.s32.totalorder %s652, %s653
    %p662 = scmp.eq.s32.totalorder %s75, 0
    %p663 = por %p661, %p662
    %p664 = scmp.ne.s32.totalorder %s652, %s653
    %p665 = scmp.eq.s32.totalorder %s76, 1
    %p666 = por %p664, %p665
    %p668 = scmp.ne.s32.totalorder %s653, %s667
    %p669 = scmp.eq.s32.totalorder %s76, 0
    %p670 = por %p668, %p669
    %s672 = sadd.s32 %s671, 1
    %p675 = scmp.eq.s32.totalorder %s70, 1
    %p676 = scmp.ne.s32.totalorder %s671, %s673
    %p677 = scmp.eq.s32.totalorder %s70, 0
    %p678 = por %p676, %p677
    %p679 = scmp.ne.s32.totalorder %s671, %s673
    %p680 = scmp.eq.s32.totalorder %s75, 1
    %p681 = por %p679, %p680
    %p682 = scmp.ne.s32.totalorder %s673, %s674
    %p683 = scmp.eq.s32.totalorder %s75, 0
    %p684 = por %p682, %p683
    %p685 = scmp.ne.s32.totalorder %s673, %s674
    %p686 = scmp.eq.s32.totalorder %s76, 1
    %p687 = por %p685, %p686
    %p689 = scmp.ne.s32.totalorder %s674, %s688
    %p690 = scmp.eq.s32.totalorder %s76, 0
    %p691 = por %p689, %p690
    %s692 = ssub.s32 %s70, %s77
    %p693 = scmp.eq.s32.totalorder %s692, 0
    %s695 = sadd.s32 %s694, 1
    %s696 = scalar_select %p693, %s694, %s695
    %p699 = pneg %p693
    %p700 = scmp.eq.s32.totalorder %s70, 1
    %p701 = por %p699, %p700
    %p702 = scmp.ne.s32.totalorder %s694, %s697
    %p703 = scmp.eq.s32.totalorder %s70, 0
    %p704 = por %p702, %p703
    %p705 = scmp.ne.s32.totalorder %s694, %s697
    %p706 = scmp.eq.s32.totalorder %s75, 1
    %p707 = por %p705, %p706
    %p708 = scmp.ne.s32.totalorder %s697, %s698
    %p709 = scmp.eq.s32.totalorder %s75, 0
    %p710 = por %p708, %p709
    %p711 = scmp.ne.s32.totalorder %s697, %s698
    %p712 = scmp.eq.s32.totalorder %s76, 1
    %p713 = por %p711, %p712
    %p715 = scmp.ne.s32.totalorder %s698, %s714
    %p716 = scmp.eq.s32.totalorder %s76, 0
    %p717 = por %p715, %p716
    %s718 = ssub.s32 %s70, %s77
    %p719 = scmp.eq.s32.totalorder %s718, 0
    %s721 = sadd.s32 %s720, 1
    %s722 = scalar_select %p719, %s720, %s721
    %p725 = pneg %p719
    %p726 = scmp.eq.s32.totalorder %s70, 1
    %p727 = por %p725, %p726
    %p728 = scmp.ne.s32.totalorder %s720, %s723
    %p729 = scmp.eq.s32.totalorder %s70, 0
    %p730 = por %p728, %p729
    %p731 = scmp.ne.s32.totalorder %s720, %s723
    %p732 = scmp.eq.s32.totalorder %s75, 1
    %p733 = por %p731, %p732
    %p734 = scmp.ne.s32.totalorder %s723, %s724
    %p735 = scmp.eq.s32.totalorder %s75, 0
    %p736 = por %p734, %p735
    %p737 = scmp.ne.s32.totalorder %s723, %s724
    %p738 = scmp.eq.s32.totalorder %s76, 1
    %p739 = por %p737, %p738
    %p741 = scmp.ne.s32.totalorder %s724, %s740
    %p742 = scmp.eq.s32.totalorder %s76, 0
    %p743 = por %p741, %p742
    %p744 = scmp.le.s32.totalorder 1, %s70
    %p745 = scmp.lt.s32.totalorder %s70, 3
    %p746 = pnand %p744, %p745
    %p747 = pneg %p746
    // Predicated region
    $region9: #{discriminator_forward.1} parent=5 // pred_check
      _
    $region10: #{discriminator_forward.1} parent=5 // pred_check_branch
      %749 = sbr.rel (%p746) target = $region12
    $region11: #{discriminator_forward.1} parent=5 // pred_region
      %s750 = ssub.s32 %s70, 1
      // Predicated region
      $region13: #{discriminator_forward.1} parent=11 // pred_check
        %p751 = pneg %p117
      $region14: #{discriminator_forward.1} parent=11 // pred_check_branch
        %753 = sbr.rel (%p751) target = $region16
      $region15: #{discriminator_forward.1} parent=11 // pred_region
        _
      $region16: #{discriminator_forward.1} parent=11 // pred_fallthru
        _
      // Predicated region
      $region17: #{discriminator_forward.1} parent=11 // pred_check
        %p754 = pneg %p138
      $region18: #{discriminator_forward.1} parent=11 // pred_check_branch
        %756 = sbr.rel (%p754) target = $region20
      $region19: #{discriminator_forward.1} parent=11 // pred_region
        _
      $region20: #{discriminator_forward.1} parent=11 // pred_fallthru
        _
      // Predicated region
      $region21: #{discriminator_forward.1} parent=11 // pred_check
        %p757 = pneg %p159
      $region22: #{discriminator_forward.1} parent=11 // pred_check_branch
        %759 = sbr.rel (%p757) target = $region24
      $region23: #{discriminator_forward.1} parent=11 // pred_region
        _
      $region24: #{discriminator_forward.1} parent=11 // pred_fallthru
        _
      // Predicated region
      $region25: #{discriminator_forward.1} parent=11 // pred_check
        %p760 = pneg %p180
      $region26: #{discriminator_forward.1} parent=11 // pred_check_branch
        %762 = sbr.rel (%p760) target = $region28
      $region27: #{discriminator_forward.1} parent=11 // pred_region
        _
      $region28: #{discriminator_forward.1} parent=11 // pred_fallthru
        _
      // Predicated region
      $region29: #{discriminator_forward.1} parent=11 // pred_check
        %p763 = pneg %p201
      $region30: #{discriminator_forward.1} parent=11 // pred_check_branch
        %765 = sbr.rel (%p763) target = $region32
      $region31: #{discriminator_forward.1} parent=11 // pred_region
        _
      $region32: #{discriminator_forward.1} parent=11 // pred_fallthru
        _
      // Predicated region
      $region33: #{discriminator_forward.1} parent=11 // pred_check
        %p766 = pneg %p222
      $region34: #{discriminator_forward.1} parent=11 // pred_check_branch
        %768 = sbr.rel (%p766) target = $region36
      $region35: #{discriminator_forward.1} parent=11 // pred_region
        _
      $region36: #{discriminator_forward.1} parent=11 // pred_fallthru
        _
      // Predicated region
      $region37: #{discriminator_forward.1} parent=11 // pred_check
        %p769 = pneg %p243
      $region38: #{discriminator_forward.1} parent=11 // pred_check_branch
        %771 = sbr.rel (%p769) target = $region40
      $region39: #{discriminator_forward.1} parent=11 // pred_region
        _
      $region40: #{discriminator_forward.1} parent=11 // pred_fallthru
        _
      // Predicated region
      $region41: #{discriminator_forward.1} parent=11 // pred_check
        %p772 = pneg %p264
      $region42: #{discriminator_forward.1} parent=11 // pred_check_branch
        %774 = sbr.rel (%p772) target = $region44
      $region43: #{discriminator_forward.1} parent=11 // pred_region
        _
      $region44: #{discriminator_forward.1} parent=11 // pred_fallthru
        _
      // Predicated region
      $region45: #{discriminator_forward.1} parent=11 // pred_check
        %p775 = pneg %p285
      $region46: #{discriminator_forward.1} parent=11 // pred_check_branch
        %777 = sbr.rel (%p775) target = $region48
      $region47: #{discriminator_forward.1} parent=11 // pred_region
        _
      $region48: #{discriminator_forward.1} parent=11 // pred_fallthru
        _
      // Predicated region
      $region49: #{discriminator_forward.1} parent=11 // pred_check
        %p778 = pneg %p306
      $region50: #{discriminator_forward.1} parent=11 // pred_check_branch
        %780 = sbr.rel (%p778) target = $region52
      $region51: #{discriminator_forward.1} parent=11 // pred_region
        _
      $region52: #{discriminator_forward.1} parent=11 // pred_fallthru
        _
      // Predicated region
      $region53: #{discriminator_forward.1} parent=11 // pred_check
        %p781 = pneg %p327
      $region54: #{discriminator_forward.1} parent=11 // pred_check_branch
        %783 = sbr.rel (%p781) target = $region56
      $region55: #{discriminator_forward.1} parent=11 // pred_region
        _
      $region56: #{discriminator_forward.1} parent=11 // pred_fallthru
        _
      // Predicated region
      $region57: #{discriminator_forward.1} parent=11 // pred_check
        %p784 = pneg %p348
      $region58: #{discriminator_forward.1} parent=11 // pred_check_branch
        %786 = sbr.rel (%p784) target = $region60
      $region59: #{discriminator_forward.1} parent=11 // pred_region
        _
      $region60: #{discriminator_forward.1} parent=11 // pred_fallthru
        _
      // Predicated region
      $region61: #{discriminator_forward.1} parent=11 // pred_check
        %p787 = pneg %p369
      $region62: #{discriminator_forward.1} parent=11 // pred_check_branch
        %789 = sbr.rel (%p787) target = $region64
      $region63: #{discriminator_forward.1} parent=11 // pred_region
        _
      $region64: #{discriminator_forward.1} parent=11 // pred_fallthru
        _
      // Predicated region
      $region65: #{discriminator_forward.1} parent=11 // pred_check
        %p790 = pneg %p390
      $region66: #{discriminator_forward.1} parent=11 // pred_check_branch
        %792 = sbr.rel (%p790) target = $region68
      $region67: #{discriminator_forward.1} parent=11 // pred_region
        _
      $region68: #{discriminator_forward.1} parent=11 // pred_fallthru
        _
      // Predicated region
      $region69: #{discriminator_forward.1} parent=11 // pred_check
        %p793 = pneg %p411
      $region70: #{discriminator_forward.1} parent=11 // pred_check_branch
        %795 = sbr.rel (%p793) target = $region72
      $region71: #{discriminator_forward.1} parent=11 // pred_region
        _
      $region72: #{discriminator_forward.1} parent=11 // pred_fallthru
        _
      // Predicated region
      $region73: #{discriminator_forward.1} parent=11 // pred_check
        %p796 = pneg %p432
      $region74: #{discriminator_forward.1} parent=11 // pred_check_branch
        %798 = sbr.rel (%p796) target = $region76
      $region75: #{discriminator_forward.1} parent=11 // pred_region
        _
      $region76: #{discriminator_forward.1} parent=11 // pred_fallthru
        _
      // Predicated region
      $region77: #{discriminator_forward.1} parent=11 // pred_check
        %p799 = pneg %p453
      $region78: #{discriminator_forward.1} parent=11 // pred_check_branch
        %801 = sbr.rel (%p799) target = $region80
      $region79: #{discriminator_forward.1} parent=11 // pred_region
        _
      $region80: #{discriminator_forward.1} parent=11 // pred_fallthru
        _
      // Predicated region
      $region81: #{discriminator_forward.1} parent=11 // pred_check
        %p802 = pneg %p474
      $region82: #{discriminator_forward.1} parent=11 // pred_check_branch
        %804 = sbr.rel (%p802) target = $region84
      $region83: #{discriminator_forward.1} parent=11 // pred_region
        _
      $region84: #{discriminator_forward.1} parent=11 // pred_fallthru
        _
      // Predicated region
      $region85: #{discriminator_forward.1} parent=11 // pred_check
        %p805 = pneg %p495
      $region86: #{discriminator_forward.1} parent=11 // pred_check_branch
        %807 = sbr.rel (%p805) target = $region88
      $region87: #{discriminator_forward.1} parent=11 // pred_region
        _
      $region88: #{discriminator_forward.1} parent=11 // pred_fallthru
        _
      // Predicated region
      $region89: #{discriminator_forward.1} parent=11 // pred_check
        %p808 = pneg %p516
      $region90: #{discriminator_forward.1} parent=11 // pred_check_branch
        %810 = sbr.rel (%p808) target = $region92
      $region91: #{discriminator_forward.1} parent=11 // pred_region
        _
      $region92: #{discriminator_forward.1} parent=11 // pred_fallthru
        _
      // Predicated region
      $region93: #{discriminator_forward.1} parent=11 // pred_check
        %p811 = pneg %p537
      $region94: #{discriminator_forward.1} parent=11 // pred_check_branch
        %813 = sbr.rel (%p811) target = $region96
      $region95: #{discriminator_forward.1} parent=11 // pred_region
        _
      $region96: #{discriminator_forward.1} parent=11 // pred_fallthru
        _
      // Predicated region
      $region97: #{discriminator_forward.1} parent=11 // pred_check
        %p814 = pneg %p558
      $region98: #{discriminator_forward.1} parent=11 // pred_check_branch
        %816 = sbr.rel (%p814) target = $region100
      $region99: #{discriminator_forward.1} parent=11 // pred_region
        _
      $region100: #{discriminator_forward.1} parent=11 // pred_fallthru
        _
      // Predicated region
      $region101: #{discriminator_forward.1} parent=11 // pred_check
        %p817 = pneg %p579
      $region102: #{discriminator_forward.1} parent=11 // pred_check_branch
        %819 = sbr.rel (%p817) target = $region104
      $region103: #{discriminator_forward.1} parent=11 // pred_region
        _
      $region104: #{discriminator_forward.1} parent=11 // pred_fallthru
        _
      // Predicated region
      $region105: #{discriminator_forward.1} parent=11 // pred_check
        %p820 = pneg %p600
      $region106: #{discriminator_forward.1} parent=11 // pred_check_branch
        %822 = sbr.rel (%p820) target = $region108
      $region107: #{discriminator_forward.1} parent=11 // pred_region
        _
      $region108: #{discriminator_forward.1} parent=11 // pred_fallthru
        _
      // Predicated region
      $region109: #{discriminator_forward.1} parent=11 // pred_check
        %p823 = pneg %p621
      $region110: #{discriminator_forward.1} parent=11 // pred_check_branch
        %825 = sbr.rel (%p823) target = $region112
      $region111: #{discriminator_forward.1} parent=11 // pred_region
        _
      $region112: #{discriminator_forward.1} parent=11 // pred_fallthru
        _
      // Predicated region
      $region113: #{discriminator_forward.1} parent=11 // pred_check
        %p826 = pneg %p642
      $region114: #{discriminator_forward.1} parent=11 // pred_check_branch
        %828 = sbr.rel (%p826) target = $region116
      $region115: #{discriminator_forward.1} parent=11 // pred_region
        _
      $region116: #{discriminator_forward.1} parent=11 // pred_fallthru
        _
      // Predicated region
      $region117: #{discriminator_forward.1} parent=11 // pred_check
        %p829 = pneg %p663
      $region118: #{discriminator_forward.1} parent=11 // pred_check_branch
        %831 = sbr.rel (%p829) target = $region120
      $region119: #{discriminator_forward.1} parent=11 // pred_region
        _
      $region120: #{discriminator_forward.1} parent=11 // pred_fallthru
        _
      // Predicated region
      $region121: #{discriminator_forward.1} parent=11 // pred_check
        %p832 = pneg %p684
      $region122: #{discriminator_forward.1} parent=11 // pred_check_branch
        %834 = sbr.rel (%p832) target = $region124
      $region123: #{discriminator_forward.1} parent=11 // pred_region
        _
      $region124: #{discriminator_forward.1} parent=11 // pred_fallthru
        _
    $region12: #{discriminator_forward.1} parent=5 // pred_fallthru
      _
    %p835 = scmp.lt.s32.totalorder %s70, 2
    // Predicated region
    $region125: #{discriminator_forward.1} parent=5 // pred_check
      %p836 = pneg %p835
    $region126: #{discriminator_forward.1} parent=5 // pred_check_branch
      %838 = sbr.rel (%p836) target = $region128
    $region127: #{discriminator_forward.1} parent=5 // pred_region
      // Predicated region
      $region129: #{discriminator_forward.1} parent=127 // pred_check
        %p839 = pneg %p90
      $region130: #{discriminator_forward.1} parent=127 // pred_check_branch
        %841 = sbr.rel (%p839) target = $region132
      $region131: #{discriminator_forward.1} parent=127 // pred_region
        %p842 = scmp.lt.s32.totalorder %s70, 1
        %s843 = scalar_select %p842, %s70, 1
        %s844 = smul.addr %s843, 3
        %s845 = smul.addr %s844, 8
        %s846 = scalar_lea.vmem %s1, %s845
      $region132: #{discriminator_forward.1} parent=127 // pred_fallthru
        _
    $region128: #{discriminator_forward.1} parent=5 // pred_fallthru
      _
    %p847 = scmp.le.s32.totalorder 1, %s70
    %p848 = scmp.lt.s32.totalorder %s70, 3
    %p849 = pnand %p847, %p848
    %p850 = pneg %p849
    // Predicated region
    $region133: #{discriminator_forward.1} parent=5 // pred_check
      _
    $region134: #{discriminator_forward.1} parent=5 // pred_check_branch
      %852 = sbr.rel (%p849) target = $region136
    $region135: #{discriminator_forward.1} parent=5 // pred_region
      %s853 = ssub.s32 %s70, 1
      %p854 = scmp.lt.s32.totalorder %s75, 1
      %s855 = scalar_select %p854, %s75, 1
      %s856 = smul.addr %s855, 3
      %s857 = smul.addr %s856, 8
      %s858 = scalar_lea.vmem %s1, %s857
      %p859 = pneg %p96
      %p860 = pneg %p93
      %p861 = pneg %p117
      %p862 = pneg %p114
      %p863 = pneg %p138
      %p864 = pneg %p135
      %p865 = pneg %p159
      %p866 = pneg %p156
      %p867 = pneg %p180
      %p868 = pneg %p177
      %p869 = pneg %p201
      %p870 = pneg %p198
      %p871 = pneg %p222
      %p872 = pneg %p219
      %p873 = pneg %p243
      %p874 = pneg %p240
      %p875 = pneg %p264
      %p876 = pneg %p261
      %p877 = pneg %p285
      %p878 = pneg %p282
      %p879 = pneg %p306
      %p880 = pneg %p303
      %p881 = pneg %p327
      %p882 = pneg %p324
      %p883 = pneg %p348
      %p884 = pneg %p345
      %p885 = pneg %p369
      %p886 = pneg %p366
      %p887 = pneg %p390
      %p888 = pneg %p387
      %p889 = pneg %p411
      %p890 = pneg %p408
      %p891 = pneg %p432
      %p892 = pneg %p429
      %p893 = pneg %p453
      %p894 = pneg %p450
      %p895 = pneg %p474
      %p896 = pneg %p471
      %p897 = pneg %p495
      %p898 = pneg %p492
      %p899 = pneg %p516
      %p900 = pneg %p513
      %p901 = pneg %p537
      %p902 = pneg %p534
      %p903 = pneg %p558
      %p904 = pneg %p555
      %p905 = pneg %p579
      %p906 = pneg %p576
      %p907 = pneg %p600
      %p908 = pneg %p597
      %p909 = pneg %p621
      %p910 = pneg %p618
      %p911 = pneg %p642
      %p912 = pneg %p639
      %p913 = pneg %p663
      %p914 = pneg %p660
      %p915 = pneg %p684
      %p916 = pneg %p681
      %p917 = pneg %p710
      %p918 = pneg %p707
      %p919 = scmp.lt.s32.totalorder %s75, 1
      %s920 = scalar_select %p919, %s75, 1
      %s921 = scalar_lea.vmem %s59, %s920
      %p922 = pneg %p736
      %p923 = pneg %p733
      %p924 = scmp.lt.s32.totalorder %s75, 1
      %s925 = scalar_select %p924, %s75, 1
      %s926 = smul.addr %s925, 4
      %s927 = smul.addr %s926, 8
      %s928 = scalar_lea.vmem %s61, %s927
      %p929 = scmp.lt.s32.totalorder %s75, 1
      %s930 = scalar_select %p929, %s75, 1
      %s931 = smul.addr %s930, 3
      %s932 = smul.addr %s931, 8
      %s933 = scalar_lea.vmem %s1, %s932
      %p934 = scmp.lt.s32.totalorder %s75, 1
      %s935 = scalar_select %p934, %s75, 1
      %s936 = scalar_lea.vmem %s59, %s935
      %p937 = scmp.lt.s32.totalorder %s75, 1
      %s938 = scalar_select %p937, %s75, 1
      %s939 = smul.addr %s938, 4
      %s940 = smul.addr %s939, 8
      %s941 = scalar_lea.vmem %s61, %s940
      %v942 = vld [vmem:[%s933] sm:$0xff]
      %v943 = vld [vmem:[%s933 + $0x8] sm:$0xff]
      %v944 = vld [vmem:[%s933 + $0x10] sm:$0xff]
      %v945 = vld [vmem:[%s45] sm:$0x7]
      %v946 = vld [vmem:[%s47] sm:$0x1]
      %950 = vrot.lane.b32.xlu0 %v942, 127
      %v951 = vpop.permute.xlu0 %950
      %952 = vrot.lane.b32.xlu0 %v943, 127
      %v953 = vpop.permute.xlu0 %952
      %954 = vrot.lane.b32.xlu0 %v944, 127
      %v955 = vpop.permute.xlu0 %954
      %vm956 = vcmask 1039360
      %v957 = vsel %vm956, %v951, %v953
      %v958 = vsel %vm956, %v953, %v955
      %962 = vrot.lane.b32.xlu0 %v942, 126
      %v963 = vpop.permute.xlu0 %962
      %964 = vrot.lane.b32.xlu0 %v943, 126
      %v965 = vpop.permute.xlu0 %964
      %966 = vrot.lane.b32.xlu0 %v944, 126
      %v967 = vpop.permute.xlu0 %966
      %vm968 = vcmask 1031168
      %v969 = vsel %vm968, %v963, %v965
      %v970 = vsel %vm968, %v965, %v967
      %974 = vrot.lane.b32.xlu0 %v942, 110
      %v975 = vpop.permute.xlu0 %974
      %976 = vrot.lane.b32.xlu0 %v943, 110
      %v977 = vpop.permute.xlu0 %976
      %978 = vrot.lane.b32.xlu0 %v944, 110
      %v979 = vpop.permute.xlu0 %978
      %vm980 = vcmask 900096
      %v981 = vsel %vm980, %v975, %v977
      %v982 = vsel %vm980, %v977, %v979
      %986 = vrot.lane.b32.xlu0 %v942, 109
      %v987 = vpop.permute.xlu0 %986
      %988 = vrot.lane.b32.xlu0 %v943, 109
      %v989 = vpop.permute.xlu0 %988
      %990 = vrot.lane.b32.xlu0 %v944, 109
      %v991 = vpop.permute.xlu0 %990
      %vm992 = vcmask 891904
      %v993 = vsel %vm992, %v987, %v989
      %v994 = vsel %vm992, %v989, %v991
      %998 = vrot.lane.b32.xlu0 %v942, 108
      %v999 = vpop.permute.xlu0 %998
      %1000 = vrot.lane.b32.xlu0 %v943, 108
      %v1001 = vpop.permute.xlu0 %1000
      %1002 = vrot.lane.b32.xlu0 %v944, 108
      %v1003 = vpop.permute.xlu0 %1002
      %vm1004 = vcmask 883712
      %v1005 = vsel %vm1004, %v999, %v1001
      %v1006 = vsel %vm1004, %v1001, %v1003
      %1010 = vrot.lane.b32.xlu0 %v942, 92
      %v1011 = vpop.permute.xlu0 %1010
      %1012 = vrot.lane.b32.xlu0 %v943, 92
      %v1013 = vpop.permute.xlu0 %1012
      %1014 = vrot.lane.b32.xlu0 %v944, 92
      %v1015 = vpop.permute.xlu0 %1014
      %vm1016 = vcmask 752640
      %v1017 = vsel %vm1016, %v1011, %v1013
      %v1018 = vsel %vm1016, %v1013, %v1015
      %1022 = vrot.lane.b32.xlu0 %v942, 91
      %v1023 = vpop.permute.xlu0 %1022
      %1024 = vrot.lane.b32.xlu0 %v943, 91
      %v1025 = vpop.permute.xlu0 %1024
      %1026 = vrot.lane.b32.xlu0 %v944, 91
      %v1027 = vpop.permute.xlu0 %1026
      %vm1028 = vcmask 744448
      %v1029 = vsel %vm1028, %v1023, %v1025
      %v1030 = vsel %vm1028, %v1025, %v1027
      %1034 = vrot.lane.b32.xlu0 %v942, 90
      %v1035 = vpop.permute.xlu0 %1034
      %1036 = vrot.lane.b32.xlu0 %v943, 90
      %v1037 = vpop.permute.xlu0 %1036
      %1038 = vrot.lane.b32.xlu0 %v944, 90
      %v1039 = vpop.permute.xlu0 %1038
      %vm1040 = vcmask 736256
      %v1041 = vsel %vm1040, %v1035, %v1037
      %v1042 = vsel %vm1040, %v1037, %v1039
      %v1046 = vld [vmem:[%s3] sm:$0xff]
      %v1047 = vld [vmem:[%s5] sm:$0xff]
      %1049 = vset.pattern.permute.xlu0 0
      %1050 = vperm.xlu0 %1049, %v1047
      %v1051 = vpop.permute.xlu0 %1050
      %vm1053 = vcmask 588800
      %v1055 = vsel %vm1053, %v1046, 0
      %1057 = vmatprep.subr.mxu0 %v943
      %1058 = vmatpush1.msra.mxu0 %v942
      %1059 = vmatprep.subr.mxu0 %v958
      %1060 = vmatpush1.msra.mxu0 %v957
      %1061 = vmatprep.subr.mxu0 %v970
      %1062 = vmatpush1.msra.mxu0 %v969
      %1063 = vmatprep.subr.mxu0 %v982
      %1064 = vmatpush1.msra.mxu0 %v981
      %1065 = vmatprep.subr.mxu0 %v994
      %1066 = vmatpush1.msra.mxu0 %v993
      %1067 = vmatprep.subr.mxu0 %v1006
      %1068 = vmatpush1.msra.mxu0 %v1005
      %1069 = vmatprep.subr.mxu0 %v1018
      %1070 = vmatpush1.msra.mxu0 %v1017
      %1071 = vmatprep.subr.mxu0 %v1030
      %1072 = vmatpush1.msra.mxu0 %v1029
      %1073 = vmatprep.subr.mxu0 %v1042
      %1074 = vmatpush1.msra.mxu0 %v1041
      %1075 = vmatprep.subr.mxu0 0.0
      %1076 = vmatpush1.msra.mxu0 0.0
      %1077 = vmatprep.subr.mxu0 0.0
      %1078 = vmatpush1.msra.mxu0 0.0
      %1079 = vmatprep.subr.mxu0 0.0
      %1080 = vmatpush1.msra.mxu0 0.0
      %1081 = vmatprep.subr.mxu0 0.0
      %1082 = vmatpush1.msra.mxu0 0.0
      %1083 = vmatprep.subr.mxu0 0.0
      %1084 = vmatpush1.msra.mxu0 0.0
      %1085 = vmatprep.subr.mxu0 0.0
      %1086 = vmatpush1.msra.mxu0 0.0
      %1087 = vmatprep.subr.mxu0 0.0
      %1088 = vmatpush1.msra.mxu0 0.0
      %1089 = vmatprep.subr.mxu0 0.0
      %1090 = vmatpush1.msra.mxu0 0.0
      %1091 = vmatprep.subr.mxu0 0.0
      %1092 = vmatpush1.msra.mxu0 0.0
      %1093 = vmatprep.subr.mxu0 0.0
      %1094 = vmatpush1.msra.mxu0 0.0
      %1095 = vmatprep.subr.mxu0 0.0
      %1096 = vmatpush1.msra.mxu0 0.0
      %1097 = vmatprep.subr.mxu0 0.0
      %1098 = vmatpush1.msra.mxu0 0.0
      %1099 = vmatprep.subr.mxu0 0.0
      %1100 = vmatpush1.msra.mxu0 0.0
      %1101 = vmatprep.subr.mxu0 0.0
      %1102 = vmatpush1.msra.mxu0 0.0
      %1103 = vmatprep.subr.mxu0 0.0
      %1104 = vmatpush1.msra.mxu0 0.0
      %1105 = vmatprep.subr.mxu0 0.0
      %1106 = vmatpush1.msra.mxu0 0.0
      %1107 = vmatprep.subr.mxu0 0.0
      %1108 = vmatpush1.msra.mxu0 0.0
      %1109 = vmatprep.subr.mxu0 0.0
      %1110 = vmatpush1.msra.mxu0 0.0
      %1111 = vmatprep.subr.mxu0 0.0
      %1112 = vmatpush1.msra.mxu0 0.0
      %1113 = vmatprep.subr.mxu0 0.0
      %1114 = vmatpush1.msra.mxu0 0.0
      %1115 = vmatprep.subr.mxu0 0.0
      %1116 = vmatpush1.msra.mxu0 0.0
      %1117 = vmatprep.subr.mxu0 0.0
      %1118 = vmatpush1.msra.mxu0 0.0
      %1119 = vmatprep.subr.mxu0 0.0
      %1120 = vmatpush1.msra.mxu0 0.0
      %1121 = vmatprep.mubr.f32.mxu0 0.0
      %1122 = vmatmul.mubr.f32.gmra.mrb[0].mxu0 %v1055
      %v1123 = vpop.f32.mrb[0].mxu0
      %v1124 = vadd.f32 %v1051, %v1123
      %v1125 = vpop.f32.mrb[0].mxu0
      %v1126 = vadd.f32 %v1051, %v1125
      %1127 = vdwg.mxu0
      %1128 = vmatprep.subr.mxu0 0.0
      %1129 = vmatpush1.msra.mxu0 %v944
      %1130 = vmatprep.subr.mxu0 0.0
      %1131 = vmatpush1.msra.mxu0 %v955
      %1132 = vmatprep.subr.mxu0 0.0
      %1133 = vmatpush1.msra.mxu0 %v967
      %1134 = vmatprep.subr.mxu0 0.0
      %1135 = vmatpush1.msra.mxu0 %v979
      %1136 = vmatprep.subr.mxu0 0.0
      %1137 = vmatpush1.msra.mxu0 %v991
      %1138 = vmatprep.subr.mxu0 0.0
      %1139 = vmatpush1.msra.mxu0 %v1003
      %1140 = vmatprep.subr.mxu0 0.0
      %1141 = vmatpush1.msra.mxu0 %v1015
      %1142 = vmatprep.subr.mxu0 0.0
      %1143 = vmatpush1.msra.mxu0 %v1027
      %1144 = vmatprep.subr.mxu0 0.0
      %1145 = vmatpush1.msra.mxu0 %v1039
      %1146 = vmatprep.subr.mxu0 0.0
      %1147 = vmatpush1.msra.mxu0 0.0
      %1148 = vmatprep.subr.mxu0 0.0
      %1149 = vmatpush1.msra.mxu0 0.0
      %1150 = vmatprep.subr.mxu0 0.0
      %1151 = vmatpush1.msra.mxu0 0.0
      %1152 = vmatprep.subr.mxu0 0.0
      %1153 = vmatpush1.msra.mxu0 0.0
      %1154 = vmatprep.subr.mxu0 0.0
      %1155 = vmatpush1.msra.mxu0 0.0
      %1156 = vmatprep.subr.mxu0 0.0
      %1157 = vmatpush1.msra.mxu0 0.0
      %1158 = vmatprep.subr.mxu0 0.0
      %1159 = vmatpush1.msra.mxu0 0.0
      %1160 = vmatprep.subr.mxu0 0.0
      %1161 = vmatpush1.msra.mxu0 0.0
      %1162 = vmatprep.subr.mxu0 0.0
      %1163 = vmatpush1.msra.mxu0 0.0
      %1164 = vmatprep.subr.mxu0 0.0
      %1165 = vmatpush1.msra.mxu0 0.0
      %1166 = vmatprep.subr.mxu0 0.0
      %1167 = vmatpush1.msra.mxu0 0.0
      %1168 = vmatprep.subr.mxu0 0.0
      %1169 = vmatpush1.msra.mxu0 0.0
      %1170 = vmatprep.subr.mxu0 0.0
      %1171 = vmatpush1.msra.mxu0 0.0
      %1172 = vmatprep.subr.mxu0 0.0
      %1173 = vmatpush1.msra.mxu0 0.0
      %1174 = vmatprep.subr.mxu0 0.0
      %1175 = vmatpush1.msra.mxu0 0.0
      %1176 = vmatprep.subr.mxu0 0.0
      %1177 = vmatpush1.msra.mxu0 0.0
      %1178 = vmatprep.subr.mxu0 0.0
      %1179 = vmatpush1.msra.mxu0 0.0
      %1180 = vmatprep.subr.mxu0 0.0
      %1181 = vmatpush1.msra.mxu0 0.0
      %1182 = vmatprep.subr.mxu0 0.0
      %1183 = vmatpush1.msra.mxu0 0.0
      %1184 = vmatprep.subr.mxu0 0.0
      %1185 = vmatpush1.msra.mxu0 0.0
      %1186 = vmatprep.subr.mxu0 0.0
      %1187 = vmatpush1.msra.mxu0 0.0
      %1188 = vmatprep.subr.mxu0 0.0
      %1189 = vmatpush1.msra.mxu0 0.0
      %1190 = vmatprep.subr.mxu0 0.0
      %1191 = vmatpush1.msra.mxu0 0.0
      %1192 = vmatprep.mubr.f32.mxu0 0.0
      %1193 = vmatmul.mubr.f32.gmra.mrb[0].mxu0 %v1055
      %v1194 = vpop.f32.mrb[0].mxu0
      %v1195 = vadd.f32 %v1051, %v1194
      %v1196 = vpop.f32.mrb[0].mxu0
      %1197 = vdwg.mxu0
      %1201 = vrot.lane.b32.xlu0 %v1124, 19
      %v1202 = vpop.permute.xlu0 %1201
      %1203 = vrot.lane.b32.xlu0 %v1126, 19
      %v1204 = vpop.permute.xlu0 %1203
      %1205 = vrot.lane.b32.xlu0 %v1195, 19
      %v1206 = vpop.permute.xlu0 %1205
      %vm1207 = vcmask 154624
      %v1208 = vsel %vm1207, %v1202, %v1204
      %v1209 = vsel %vm1207, %v1204, %v1206
      %v1213 = vsel %vm1207, 0.0, %v1202
      %vm1214 = vcmask 400384
      %v1215 = vsel %vm1214, %v1209, 0.0
      %v1216 = vmax.f32 %v1213, 0.0
      %v1217 = vmax.f32 %v1208, 0.0
      %v1218 = vmax.f32 %v1215, 0.0
      %v1220 = vlaneseq
      %v1221 = vshrl.u32 %v1220, 7
      %v1222 = vsub.s32 0, %v1221
      %v1223 = vrot.slane %v945, %v1222
      %v1224 = vlaneseq
      %v1225 = vshrl.u32 %v1224, 7
      %v1226 = vsub.s32 1, %v1225
      %v1227 = vrot.slane %v945, %v1226
      %v1228 = vlaneseq
      %v1229 = vshrl.u32 %v1228, 7
      %v1230 = vsub.s32 2, %v1229
      %v1231 = vrot.slane %v945, %v1230
      %v1235 = vmul.f32 %v1216, %v1223
      %v1236 = vmul.f32 %v1217, %v1227
      %v1237 = vmul.f32 %v1218, %v1231
      %1241 = vrot.lane.b32.xlu0 %v1235, 127
      %v1242 = vpop.permute.xlu0 %1241
      %1243 = vrot.lane.b32.xlu0 %v1236, 127
      %v1244 = vpop.permute.xlu0 %1243
      %1245 = vrot.lane.b32.xlu0 %v1237, 127
      %v1246 = vpop.permute.xlu0 %1245
      %v1247 = vsel %vm956, %v1242, %v1244
      %v1248 = vsel %vm956, %v1244, %v1246
      %1252 = vrot.lane.b32.xlu0 %v1235, 126
      %v1253 = vpop.permute.xlu0 %1252
      %1254 = vrot.lane.b32.xlu0 %v1236, 126
      %v1255 = vpop.permute.xlu0 %1254
      %1256 = vrot.lane.b32.xlu0 %v1237, 126
      %v1257 = vpop.permute.xlu0 %1256
      %v1258 = vsel %vm968, %v1253, %v1255
      %v1259 = vsel %vm968, %v1255, %v1257
      %1263 = vrot.lane.b32.xlu0 %v1235, 110
      %v1264 = vpop.permute.xlu0 %1263
      %1265 = vrot.lane.b32.xlu0 %v1236, 110
      %v1266 = vpop.permute.xlu0 %1265
      %1267 = vrot.lane.b32.xlu0 %v1237, 110
      %v1268 = vpop.permute.xlu0 %1267
      %v1269 = vsel %vm980, %v1264, %v1266
      %v1270 = vsel %vm980, %v1266, %v1268
      %1274 = vrot.lane.b32.xlu0 %v1235, 109
      %v1275 = vpop.permute.xlu0 %1274
      %1276 = vrot.lane.b32.xlu0 %v1236, 109
      %v1277 = vpop.permute.xlu0 %1276
      %1278 = vrot.lane.b32.xlu0 %v1237, 109
      %v1279 = vpop.permute.xlu0 %1278
      %v1280 = vsel %vm992, %v1275, %v1277
      %v1281 = vsel %vm992, %v1277, %v1279
      %1285 = vrot.lane.b32.xlu0 %v1235, 108
      %v1286 = vpop.permute.xlu0 %1285
      %1287 = vrot.lane.b32.xlu0 %v1236, 108
      %v1288 = vpop.permute.xlu0 %1287
      %1289 = vrot.lane.b32.xlu0 %v1237, 108
      %v1290 = vpop.permute.xlu0 %1289
      %v1291 = vsel %vm1004, %v1286, %v1288
      %v1292 = vsel %vm1004, %v1288, %v1290
      %1296 = vrot.lane.b32.xlu0 %v1235, 92
      %v1297 = vpop.permute.xlu0 %1296
      %1298 = vrot.lane.b32.xlu0 %v1236, 92
      %v1299 = vpop.permute.xlu0 %1298
      %1300 = vrot.lane.b32.xlu0 %v1237, 92
      %v1301 = vpop.permute.xlu0 %1300
      %v1302 = vsel %vm1016, %v1297, %v1299
      %v1303 = vsel %vm1016, %v1299, %v1301
      %1307 = vrot.lane.b32.xlu0 %v1235, 91
      %v1308 = vpop.permute.xlu0 %1307
      %1309 = vrot.lane.b32.xlu0 %v1236, 91
      %v1310 = vpop.permute.xlu0 %1309
      %1311 = vrot.lane.b32.xlu0 %v1237, 91
      %v1312 = vpop.permute.xlu0 %1311
      %v1313 = vsel %vm1028, %v1308, %v1310
      %v1314 = vsel %vm1028, %v1310, %v1312
      %1318 = vrot.lane.b32.xlu0 %v1235, 90
      %v1319 = vpop.permute.xlu0 %1318
      %1320 = vrot.lane.b32.xlu0 %v1236, 90
      %v1321 = vpop.permute.xlu0 %1320
      %1322 = vrot.lane.b32.xlu0 %v1237, 90
      %v1323 = vpop.permute.xlu0 %1322
      %v1324 = vsel %vm1040, %v1319, %v1321
      %v1325 = vsel %vm1040, %v1321, %v1323
      %v1329 = vld [vmem:[%s7] sm:$0xff]
      %v1330 = vld [vmem:[%s9] sm:$0xff]
      %1332 = vset.pattern.permute.xlu0 0
      %1333 = vperm.xlu0 %1332, %v1330
      %v1334 = vpop.permute.xlu0 %1333
      %v1337 = vsel %vm1053, %v1329, 0
      %1339 = vmatprep.subr.mxu0 %v1236
      %1340 = vmatpush1.msra.mxu0 %v1235
      %1341 = vmatprep.subr.mxu0 %v1248
      %1342 = vmatpush1.msra.mxu0 %v1247
      %1343 = vmatprep.subr.mxu0 %v1259
      %1344 = vmatpush1.msra.mxu0 %v1258
      %1345 = vmatprep.subr.mxu0 %v1270
      %1346 = vmatpush1.msra.mxu0 %v1269
      %1347 = vmatprep.subr.mxu0 %v1281
      %1348 = vmatpush1.msra.mxu0 %v1280
      %1349 = vmatprep.subr.mxu0 %v1292
      %1350 = vmatpush1.msra.mxu0 %v1291
      %1351 = vmatprep.subr.mxu0 %v1303
      %1352 = vmatpush1.msra.mxu0 %v1302
      %1353 = vmatprep.subr.mxu0 %v1314
      %1354 = vmatpush1.msra.mxu0 %v1313
      %1355 = vmatprep.subr.mxu0 %v1325
      %1356 = vmatpush1.msra.mxu0 %v1324
      %1357 = vmatprep.subr.mxu0 0.0
      %1358 = vmatpush1.msra.mxu0 0.0
      %1359 = vmatprep.subr.mxu0 0.0
      %1360 = vmatpush1.msra.mxu0 0.0
      %1361 = vmatprep.subr.mxu0 0.0
      %1362 = vmatpush1.msra.mxu0 0.0
      %1363 = vmatprep.subr.mxu0 0.0
      %1364 = vmatpush1.msra.mxu0 0.0
      %1365 = vmatprep.subr.mxu0 0.0
      %1366 = vmatpush1.msra.mxu0 0.0
      %1367 = vmatprep.subr.mxu0 0.0
      %1368 = vmatpush1.msra.mxu0 0.0
      %1369 = vmatprep.subr.mxu0 0.0
      %1370 = vmatpush1.msra.mxu0 0.0
      %1371 = vmatprep.subr.mxu0 0.0
      %1372 = vmatpush1.msra.mxu0 0.0
      %1373 = vmatprep.subr.mxu0 0.0
      %1374 = vmatpush1.msra.mxu0 0.0
      %1375 = vmatprep.subr.mxu0 0.0
      %1376 = vmatpush1.msra.mxu0 0.0
      %1377 = vmatprep.subr.mxu0 0.0
      %1378 = vmatpush1.msra.mxu0 0.0
      %1379 = vmatprep.subr.mxu0 0.0
      %1380 = vmatpush1.msra.mxu0 0.0
      %1381 = vmatprep.subr.mxu0 0.0
      %1382 = vmatpush1.msra.mxu0 0.0
      %1383 = vmatprep.subr.mxu0 0.0
      %1384 = vmatpush1.msra.mxu0 0.0
      %1385 = vmatprep.subr.mxu0 0.0
      %1386 = vmatpush1.msra.mxu0 0.0
      %1387 = vmatprep.subr.mxu0 0.0
      %1388 = vmatpush1.msra.mxu0 0.0
      %1389 = vmatprep.subr.mxu0 0.0
      %1390 = vmatpush1.msra.mxu0 0.0
      %1391 = vmatprep.subr.mxu0 0.0
      %1392 = vmatpush1.msra.mxu0 0.0
      %1393 = vmatprep.subr.mxu0 0.0
      %1394 = vmatpush1.msra.mxu0 0.0
      %1395 = vmatprep.subr.mxu0 0.0
      %1396 = vmatpush1.msra.mxu0 0.0
      %1397 = vmatprep.subr.mxu0 0.0
      %1398 = vmatpush1.msra.mxu0 0.0
      %1399 = vmatprep.subr.mxu0 0.0
      %1400 = vmatpush1.msra.mxu0 0.0
      %1401 = vmatprep.subr.mxu0 0.0
      %1402 = vmatpush1.msra.mxu0 0.0
      %1403 = vmatprep.mubr.f32.mxu0 0.0
      %1404 = vmatmul.mubr.f32.gmra.mrb[0].mxu0 %v1337
      %v1405 = vpop.f32.mrb[0].mxu0
      %v1406 = vadd.f32 %v1334, %v1405
      %v1407 = vpop.f32.mrb[0].mxu0
      %v1408 = vadd.f32 %v1334, %v1407
      %1409 = vdwg.mxu0
      %1410 = vmatprep.subr.mxu0 0.0
      %1411 = vmatpush1.msra.mxu0 %v1237
      %1412 = vmatprep.subr.mxu0 0.0
      %1413 = vmatpush1.msra.mxu0 %v1246
      %1414 = vmatprep.subr.mxu0 0.0
      %1415 = vmatpush1.msra.mxu0 %v1257
      %1416 = vmatprep.subr.mxu0 0.0
      %1417 = vmatpush1.msra.mxu0 %v1268
      %1418 = vmatprep.subr.mxu0 0.0
      %1419 = vmatpush1.msra.mxu0 %v1279
      %1420 = vmatprep.subr.mxu0 0.0
      %1421 = vmatpush1.msra.mxu0 %v1290
      %1422 = vmatprep.subr.mxu0 0.0
      %1423 = vmatpush1.msra.mxu0 %v1301
      %1424 = vmatprep.subr.mxu0 0.0
      %1425 = vmatpush1.msra.mxu0 %v1312
      %1426 = vmatprep.subr.mxu0 0.0
      %1427 = vmatpush1.msra.mxu0 %v1323
      %1428 = vmatprep.subr.mxu0 0.0
      %1429 = vmatpush1.msra.mxu0 0.0
      %1430 = vmatprep.subr.mxu0 0.0
      %1431 = vmatpush1.msra.mxu0 0.0
      %1432 = vmatprep.subr.mxu0 0.0
      %1433 = vmatpush1.msra.mxu0 0.0
      %1434 = vmatprep.subr.mxu0 0.0
      %1435 = vmatpush1.msra.mxu0 0.0
      %1436 = vmatprep.subr.mxu0 0.0
      %1437 = vmatpush1.msra.mxu0 0.0
      %1438 = vmatprep.subr.mxu0 0.0
      %1439 = vmatpush1.msra.mxu0 0.0
      %1440 = vmatprep.subr.mxu0 0.0
      %1441 = vmatpush1.msra.mxu0 0.0
      %1442 = vmatprep.subr.mxu0 0.0
      %1443 = vmatpush1.msra.mxu0 0.0
      %1444 = vmatprep.subr.mxu0 0.0
      %1445 = vmatpush1.msra.mxu0 0.0
      %1446 = vmatprep.subr.mxu0 0.0
      %1447 = vmatpush1.msra.mxu0 0.0
      %1448 = vmatprep.subr.mxu0 0.0
      %1449 = vmatpush1.msra.mxu0 0.0
      %1450 = vmatprep.subr.mxu0 0.0
      %1451 = vmatpush1.msra.mxu0 0.0
      %1452 = vmatprep.subr.mxu0 0.0
      %1453 = vmatpush1.msra.mxu0 0.0
      %1454 = vmatprep.subr.mxu0 0.0
      %1455 = vmatpush1.msra.mxu0 0.0
      %1456 = vmatprep.subr.mxu0 0.0
      %1457 = vmatpush1.msra.mxu0 0.0
      %1458 = vmatprep.subr.mxu0 0.0
      %1459 = vmatpush1.msra.mxu0 0.0
      %1460 = vmatprep.subr.mxu0 0.0
      %1461 = vmatpush1.msra.mxu0 0.0
      %1462 = vmatprep.subr.mxu0 0.0
      %1463 = vmatpush1.msra.mxu0 0.0
      %1464 = vmatprep.subr.mxu0 0.0
      %1465 = vmatpush1.msra.mxu0 0.0
      %1466 = vmatprep.subr.mxu0 0.0
      %1467 = vmatpush1.msra.mxu0 0.0
      %1468 = vmatprep.subr.mxu0 0.0
      %1469 = vmatpush1.msra.mxu0 0.0
      %1470 = vmatprep.subr.mxu0 0.0
      %1471 = vmatpush1.msra.mxu0 0.0
      %1472 = vmatprep.subr.mxu0 0.0
      %1473 = vmatpush1.msra.mxu0 0.0
      %1474 = vmatprep.mubr.f32.mxu0 0.0
      %1475 = vmatmul.mubr.f32.gmra.mrb[0].mxu0 %v1337
      %v1476 = vpop.f32.mrb[0].mxu0
      %v1477 = vadd.f32 %v1334, %v1476
      %v1478 = vpop.f32.mrb[0].mxu0
      %1479 = vdwg.mxu0
      %1483 = vrot.lane.b32.xlu0 %v1406, 19
      %v1484 = vpop.permute.xlu0 %1483
      %1485 = vrot.lane.b32.xlu0 %v1408, 19
      %v1486 = vpop.permute.xlu0 %1485
      %1487 = vrot.lane.b32.xlu0 %v1477, 19
      %v1488 = vpop.permute.xlu0 %1487
      %v1489 = vsel %vm1207, %v1484, %v1486
      %v1490 = vsel %vm1207, %v1486, %v1488
      %v1493 = vsel %vm1207, 0.0, %v1484
      %v1494 = vsel %vm1214, %v1490, 0.0
      %v1495 = vld [vmem:[%s15] sm:$0xff]
      %v1496 = vld [vmem:[%s15 + $0x8] sm:$0xff]
      %v1497 = vld [vmem:[%s15 + $0x10] sm:$0xff]
      %v1498 = vld [vmem:[%s15 + $0x18] sm:$0xff]
      %v1499 = vld [vmem:[%s15 + $0x20] sm:$0xff]
      %v1500 = vld [vmem:[%s15 + $0x28] sm:$0xff]
      %v1501 = vld [vmem:[%s15 + $0x30] sm:$0xff]
      %v1502 = vld [vmem:[%s15 + $0x38] sm:$0xff]
      %v1503 = vld [vmem:[%s15 + $0x40] sm:$0xff]
      %v1504 = vld [vmem:[%s15 + $0x48] sm:$0xff]
      %v1505 = vld [vmem:[%s15 + $0x50] sm:$0xff]
      %v1506 = vld [vmem:[%s15 + $0x58] sm:$0xff]
      %v1507 = vld [vmem:[%s15 + $0x60] sm:$0xff]
      %v1508 = vld [vmem:[%s15 + $0x68] sm:$0xff]
      %v1509 = vld [vmem:[%s15 + $0x70] sm:$0xff]
      %v1510 = vld [vmem:[%s15 + $0x78] sm:$0xff]
      %v1511 = vld [vmem:[%s15 + $0x80] sm:$0xff]
      %v1512 = vld [vmem:[%s15 + $0x88] sm:$0xff]
      %v1513 = vld [vmem:[%s15 + $0x90] sm:$0xff]
      %v1514 = vld [vmem:[%s15 + $0x98] sm:$0xff]
      %v1515 = vld [vmem:[%s15 + $0xa0] sm:$0xff]
      %v1516 = vld [vmem:[%s15 + $0xa8] sm:$0xff]
      %v1517 = vld [vmem:[%s15 + $0xb0] sm:$0xff]
      %v1518 = vld [vmem:[%s15 + $0xb8] sm:$0xff]
      %v1519 = vld [vmem:[%s15 + $0xc0] sm:$0xff]
      %v1520 = vld [vmem:[%s15 + $0xc8] sm:$0xff]
      %v1521 = vld [vmem:[%s15 + $0xd0] sm:$0xff]
      %v1522 = vld [vmem:[%s15 + $0xd8] sm:$0xff]
      %v1523 = vld [vmem:[%s15 + $0xe0] sm:$0xff]
      %v1524 = vld [vmem:[%s15 + $0xe8] sm:$0xff]
      %v1525 = vld [vmem:[%s15 + $0xf0] sm:$0xff]
      %v1526 = vld [vmem:[%s15 + $0xf8] sm:$0xff]
      %v1527 = vld [vmem:[%s15 + $0x100] sm:$0xff]
      %v1528 = vld [vmem:[%s15 + $0x108] sm:$0xff]
      %v1529 = vld [vmem:[%s15 + $0x110] sm:$0xff]
      %v1530 = vld [vmem:[%s15 + $0x118] sm:$0xff]
      %1533 = vrot.lane.b32.xlu0 %v1493, 110
      %v1534 = vpop.permute.xlu0 %1533
      %1535 = vrot.lane.b32.xlu0 %v1489, 110
      %v1536 = vpop.permute.xlu0 %1535
      %1537 = vrot.lane.b32.xlu0 %v1494, 110
      %v1538 = vpop.permute.xlu0 %1537
      %v1539 = vsel %vm980, %v1534, %v1536
      %v1540 = vsel %vm980, %v1536, %v1538
      %vm1543 = vcmask 261120
      %v1544 = vsel %vm1543, %v1538, 0
      %1546 = vmatprep.subr.mxu0 0.0
      %1547 = vmatpush1.msra.mxu0 %v1495
      %1548 = vmatprep.subr.mxu0 0.0
      %1549 = vmatpush1.msra.mxu0 %v1496
      %1550 = vmatprep.subr.mxu0 0.0
      %1551 = vmatpush1.msra.mxu0 %v1497
      %1552 = vmatprep.subr.mxu0 0.0
      %1553 = vmatpush1.msra.mxu0 %v1498
      %1554 = vmatprep.subr.mxu0 0.0
      %1555 = vmatpush1.msra.mxu0 %v1499
      %1556 = vmatprep.subr.mxu0 0.0
      %1557 = vmatpush1.msra.mxu0 %v1500
      %1558 = vmatprep.subr.mxu0 0.0
      %1559 = vmatpush1.msra.mxu0 %v1501
      %1560 = vmatprep.subr.mxu0 0.0
      %1561 = vmatpush1.msra.mxu0 %v1502
      %1562 = vmatprep.subr.mxu0 0.0
      %1563 = vmatpush1.msra.mxu0 %v1503
      %1564 = vmatprep.subr.mxu0 0.0
      %1565 = vmatpush1.msra.mxu0 %v1504
      %1566 = vmatprep.subr.mxu0 0.0
      %1567 = vmatpush1.msra.mxu0 %v1505
      %1568 = vmatprep.subr.mxu0 0.0
      %1569 = vmatpush1.msra.mxu0 %v1506
      %1570 = vmatprep.subr.mxu0 0.0
      %1571 = vmatpush1.msra.mxu0 %v1507
      %1572 = vmatprep.subr.mxu0 0.0
      %1573 = vmatpush1.msra.mxu0 %v1508
      %1574 = vmatprep.subr.mxu0 0.0
      %1575 = vmatpush1.msra.mxu0 %v1509
      %1576 = vmatprep.subr.mxu0 0.0
      %1577 = vmatpush1.msra.mxu0 %v1510
      %1578 = vmatprep.subr.mxu0 0.0
      %1579 = vmatpush1.msra.mxu0 %v1511
      %1580 = vmatprep.subr.mxu0 0.0
      %1581 = vmatpush1.msra.mxu0 %v1512
      %1582 = vmatprep.subr.mxu0 0.0
      %1583 = vmatpush1.msra.mxu0 %v1513
      %1584 = vmatprep.subr.mxu0 0.0
      %1585 = vmatpush1.msra.mxu0 %v1514
      %1586 = vmatprep.subr.mxu0 0.0
      %1587 = vmatpush1.msra.mxu0 %v1515
      %1588 = vmatprep.subr.mxu0 0.0
      %1589 = vmatpush1.msra.mxu0 %v1516
      %1590 = vmatprep.subr.mxu0 0.0
      %1591 = vmatpush1.msra.mxu0 %v1517
      %1592 = vmatprep.subr.mxu0 0.0
      %1593 = vmatpush1.msra.mxu0 %v1518
      %1594 = vmatprep.subr.mxu0 0.0
      %1595 = vmatpush1.msra.mxu0 %v1519
      %1596 = vmatprep.subr.mxu0 0.0
      %1597 = vmatpush1.msra.mxu0 %v1520
      %1598 = vmatprep.subr.mxu0 0.0
      %1599 = vmatpush1.msra.mxu0 %v1521
      %1600 = vmatprep.subr.mxu0 0.0
      %1601 = vmatpush1.msra.mxu0 %v1522
      %1602 = vmatprep.subr.mxu0 0.0
      %1603 = vmatpush1.msra.mxu0 %v1523
      %1604 = vmatprep.subr.mxu0 0.0
      %1605 = vmatpush1.msra.mxu0 %v1524
      %1606 = vmatprep.subr.mxu0 0.0
      %1607 = vmatpush1.msra.mxu0 %v1525
      %1608 = vmatprep.subr.mxu0 0.0
      %1609 = vmatpush1.msra.mxu0 %v1526
      %1610 = vmatprep.mubr.f32.mxu0 %v1540
      %1611 = vmatmul.mubr.f32.gmra.mrb[0].mxu0 %v1539
      %v1612 = vpop.f32.mrb[0].mxu0
      %v1613 = vadd.f32 0.0, %v1612
      %v1614 = vpop.f32.mrb[0].mxu0
      %1615 = vdwg.mxu0
      %1616 = vmatprep.subr.mxu0 0.0
      %1617 = vmatpush1.msra.mxu0 %v1527
      %1618 = vmatprep.subr.mxu0 0.0
      %1619 = vmatpush1.msra.mxu0 %v1528
      %1620 = vmatprep.subr.mxu0 0.0
      %1621 = vmatpush1.msra.mxu0 %v1529
      %1622 = vmatprep.subr.mxu0 0.0
      %1623 = vmatpush1.msra.mxu0 %v1530
      %1624 = vmatprep.subr.mxu0 0.0
      %1625 = vmatpush1.msra.mxu0 0.0
      %1626 = vmatprep.subr.mxu0 0.0
      %1627 = vmatpush1.msra.mxu0 0.0
      %1628 = vmatprep.subr.mxu0 0.0
      %1629 = vmatpush1.msra.mxu0 0.0
      %1630 = vmatprep.subr.mxu0 0.0
      %1631 = vmatpush1.msra.mxu0 0.0
      %1632 = vmatprep.subr.mxu0 0.0
      %1633 = vmatpush1.msra.mxu0 0.0
      %1634 = vmatprep.subr.mxu0 0.0
      %1635 = vmatpush1.msra.mxu0 0.0
      %1636 = vmatprep.subr.mxu0 0.0
      %1637 = vmatpush1.msra.mxu0 0.0
      %1638 = vmatprep.subr.mxu0 0.0
      %1639 = vmatpush1.msra.mxu0 0.0
      %1640 = vmatprep.subr.mxu0 0.0
      %1641 = vmatpush1.msra.mxu0 0.0
      %1642 = vmatprep.subr.mxu0 0.0
      %1643 = vmatpush1.msra.mxu0 0.0
      %1644 = vmatprep.subr.mxu0 0.0
      %1645 = vmatpush1.msra.mxu0 0.0
      %1646 = vmatprep.subr.mxu0 0.0
      %1647 = vmatpush1.msra.mxu0 0.0
      %1648 = vmatprep.subr.mxu0 0.0
      %1649 = vmatpush1.msra.mxu0 0.0
      %1650 = vmatprep.subr.mxu0 0.0
      %1651 = vmatpush1.msra.mxu0 0.0
      %1652 = vmatprep.subr.mxu0 0.0
      %1653 = vmatpush1.msra.mxu0 0.0
      %1654 = vmatprep.subr.mxu0 0.0
      %1655 = vmatpush1.msra.mxu0 0.0
      %1656 = vmatprep.subr.mxu0 0.0
      %1657 = vmatpush1.msra.mxu0 0.0
      %1658 = vmatprep.subr.mxu0 0.0
      %1659 = vmatpush1.msra.mxu0 0.0
      %1660 = vmatprep.subr.mxu0 0.0
      %1661 = vmatpush1.msra.mxu0 0.0
      %1662 = vmatprep.subr.mxu0 0.0
      %1663 = vmatpush1.msra.mxu0 0.0
      %1664 = vmatprep.subr.mxu0 0.0
      %1665 = vmatpush1.msra.mxu0 0.0
      %1666 = vmatprep.subr.mxu0 0.0
      %1667 = vmatpush1.msra.mxu0 0.0
      %1668 = vmatprep.subr.mxu0 0.0
      %1669 = vmatpush1.msra.mxu0 0.0
      %1670 = vmatprep.subr.mxu0 0.0
      %1671 = vmatpush1.msra.mxu0 0.0
      %1672 = vmatprep.subr.mxu0 0.0
      %1673 = vmatpush1.msra.mxu0 0.0
      %1674 = vmatprep.subr.mxu0 0.0
      %1675 = vmatpush1.msra.mxu0 0.0
      %1676 = vmatprep.subr.mxu0 0.0
      %1677 = vmatpush1.msra.mxu0 0.0
      %1678 = vmatprep.subr.mxu0 0.0
      %1679 = vmatpush1.msra.mxu0 0.0
      %1680 = vmatprep.mubr.f32.mxu0 0.0
      %1681 = vmatmul.mubr.f32.gmra.mrb[0].mxu0 %v1544
      %v1682 = vpop.f32.mrb[0].mxu0
      %v1683 = vadd.f32 %v1613, %v1682
      %v1684 = vpop.f32.mrb[0].mxu0
      %1685 = vdwg.mxu0
      %1687 = vrot.lane.b32.xlu0 %v1683, 10
      %v1688 = vpop.permute.xlu0 %1687
      %vm1690 = vcmask 80896
      %v1691 = vsel %vm1690, 0.0, %v1688
      %v1692 = vsel %vm1040, %v1691, 0.0
      %v1693 = vsel %vm1543, %v979, 0
      %1695 = vmatprep.subr.mxu0 0.0
      %1696 = vmatpush1.msra.mxu0 %v1495
      %1697 = vmatprep.subr.mxu0 0.0
      %1698 = vmatpush1.msra.mxu0 %v1496
      %1699 = vmatprep.subr.mxu0 0.0
      %1700 = vmatpush1.msra.mxu0 %v1497
      %1701 = vmatprep.subr.mxu0 0.0
      %1702 = vmatpush1.msra.mxu0 %v1498
      %1703 = vmatprep.subr.mxu0 0.0
      %1704 = vmatpush1.msra.mxu0 %v1499
      %1705 = vmatprep.subr.mxu0 0.0
      %1706 = vmatpush1.msra.mxu0 %v1500
      %1707 = vmatprep.subr.mxu0 0.0
      %1708 = vmatpush1.msra.mxu0 %v1501
      %1709 = vmatprep.subr.mxu0 0.0
      %1710 = vmatpush1.msra.mxu0 %v1502
      %1711 = vmatprep.subr.mxu0 0.0
      %1712 = vmatpush1.msra.mxu0 %v1503
      %1713 = vmatprep.subr.mxu0 0.0
      %1714 = vmatpush1.msra.mxu0 %v1504
      %1715 = vmatprep.subr.mxu0 0.0
      %1716 = vmatpush1.msra.mxu0 %v1505
      %1717 = vmatprep.subr.mxu0 0.0
      %1718 = vmatpush1.msra.mxu0 %v1506
      %1719 = vmatprep.subr.mxu0 0.0
      %1720 = vmatpush1.msra.mxu0 %v1507
      %1721 = vmatprep.subr.mxu0 0.0
      %1722 = vmatpush1.msra.mxu0 %v1508
      %1723 = vmatprep.subr.mxu0 0.0
      %1724 = vmatpush1.msra.mxu0 %v1509
      %1725 = vmatprep.subr.mxu0 0.0
      %1726 = vmatpush1.msra.mxu0 %v1510
      %1727 = vmatprep.subr.mxu0 0.0
      %1728 = vmatpush1.msra.mxu0 %v1511
      %1729 = vmatprep.subr.mxu0 0.0
      %1730 = vmatpush1.msra.mxu0 %v1512
      %1731 = vmatprep.subr.mxu0 0.0
      %1732 = vmatpush1.msra.mxu0 %v1513
      %1733 = vmatprep.subr.mxu0 0.0
      %1734 = vmatpush1.msra.mxu0 %v1514
      %1735 = vmatprep.subr.mxu0 0.0
      %1736 = vmatpush1.msra.mxu0 %v1515
      %1737 = vmatprep.subr.mxu0 0.0
      %1738 = vmatpush1.msra.mxu0 %v1516
      %1739 = vmatprep.subr.mxu0 0.0
      %1740 = vmatpush1.msra.mxu0 %v1517
      %1741 = vmatprep.subr.mxu0 0.0
      %1742 = vmatpush1.msra.mxu0 %v1518
      %1743 = vmatprep.subr.mxu0 0.0
      %1744 = vmatpush1.msra.mxu0 %v1519
      %1745 = vmatprep.subr.mxu0 0.0
      %1746 = vmatpush1.msra.mxu0 %v1520
      %1747 = vmatprep.subr.mxu0 0.0
      %1748 = vmatpush1.msra.mxu0 %v1521
      %1749 = vmatprep.subr.mxu0 0.0
      %1750 = vmatpush1.msra.mxu0 %v1522
      %1751 = vmatprep.subr.mxu0 0.0
      %1752 = vmatpush1.msra.mxu0 %v1523
      %1753 = vmatprep.subr.mxu0 0.0
      %1754 = vmatpush1.msra.mxu0 %v1524
      %1755 = vmatprep.subr.mxu0 0.0
      %1756 = vmatpush1.msra.mxu0 %v1525
      %1757 = vmatprep.subr.mxu0 0.0
      %1758 = vmatpush1.msra.mxu0 %v1526
      %1759 = vmatprep.mubr.f32.mxu0 %v982
      %1760 = vmatmul.mubr.f32.gmra.mrb[0].mxu0 %v981
      %v1761 = vpop.f32.mrb[0].mxu0
      %v1762 = vadd.f32 0.0, %v1761
      %v1763 = vpop.f32.mrb[0].mxu0
      %1764 = vdwg.mxu0
      %1765 = vmatprep.subr.mxu0 0.0
      %1766 = vmatpush1.msra.mxu0 %v1527
      %1767 = vmatprep.subr.mxu0 0.0
      %1768 = vmatpush1.msra.mxu0 %v1528
      %1769 = vmatprep.subr.mxu0 0.0
      %1770 = vmatpush1.msra.mxu0 %v1529
      %1771 = vmatprep.subr.mxu0 0.0
      %1772 = vmatpush1.msra.mxu0 %v1530
      %1773 = vmatprep.subr.mxu0 0.0
      %1774 = vmatpush1.msra.mxu0 0.0
      %1775 = vmatprep.subr.mxu0 0.0
      %1776 = vmatpush1.msra.mxu0 0.0
      %1777 = vmatprep.subr.mxu0 0.0
      %1778 = vmatpush1.msra.mxu0 0.0
      %1779 = vmatprep.subr.mxu0 0.0
      %1780 = vmatpush1.msra.mxu0 0.0
      %1781 = vmatprep.subr.mxu0 0.0
      %1782 = vmatpush1.msra.mxu0 0.0
      %1783 = vmatprep.subr.mxu0 0.0
      %1784 = vmatpush1.msra.mxu0 0.0
      %1785 = vmatprep.subr.mxu0 0.0
      %1786 = vmatpush1.msra.mxu0 0.0
      %1787 = vmatprep.subr.mxu0 0.0
      %1788 = vmatpush1.msra.mxu0 0.0
      %1789 = vmatprep.subr.mxu0 0.0
      %1790 = vmatpush1.msra.mxu0 0.0
      %1791 = vmatprep.subr.mxu0 0.0
      %1792 = vmatpush1.msra.mxu0 0.0
      %1793 = vmatprep.subr.mxu0 0.0
      %1794 = vmatpush1.msra.mxu0 0.0
      %1795 = vmatprep.subr.mxu0 0.0
      %1796 = vmatpush1.msra.mxu0 0.0
      %1797 = vmatprep.subr.mxu0 0.0
      %1798 = vmatpush1.msra.mxu0 0.0
      %1799 = vmatprep.subr.mxu0 0.0
      %1800 = vmatpush1.msra.mxu0 0.0
      %1801 = vmatprep.subr.mxu0 0.0
      %1802 = vmatpush1.msra.mxu0 0.0
      %1803 = vmatprep.subr.mxu0 0.0
      %1804 = vmatpush1.msra.mxu0 0.0
      %1805 = vmatprep.subr.mxu0 0.0
      %1806 = vmatpush1.msra.mxu0 0.0
      %1807 = vmatprep.subr.mxu0 0.0
      %1808 = vmatpush1.msra.mxu0 0.0
      %1809 = vmatprep.subr.mxu0 0.0
      %1810 = vmatpush1.msra.mxu0 0.0
      %1811 = vmatprep.subr.mxu0 0.0
      %1812 = vmatpush1.msra.mxu0 0.0
      %1813 = vmatprep.subr.mxu0 0.0
      %1814 = vmatpush1.msra.mxu0 0.0
      %1815 = vmatprep.subr.mxu0 0.0
      %1816 = vmatpush1.msra.mxu0 0.0
      %1817 = vmatprep.subr.mxu0 0.0
      %1818 = vmatpush1.msra.mxu0 0.0
      %1819 = vmatprep.subr.mxu0 0.0
      %1820 = vmatpush1.msra.mxu0 0.0
      %1821 = vmatprep.subr.mxu0 0.0
      %1822 = vmatpush1.msra.mxu0 0.0
      %1823 = vmatprep.subr.mxu0 0.0
      %1824 = vmatpush1.msra.mxu0 0.0
      %1825 = vmatprep.subr.mxu0 0.0
      %1826 = vmatpush1.msra.mxu0 0.0
      %1827 = vmatprep.subr.mxu0 0.0
      %1828 = vmatpush1.msra.mxu0 0.0
      %1829 = vmatprep.mubr.f32.mxu0 0.0
      %1830 = vmatmul.mubr.f32.gmra.mrb[0].mxu0 %v1693
      %v1831 = vpop.f32.mrb[0].mxu0
      %v1832 = vadd.f32 %v1762, %v1831
      %v1833 = vpop.f32.mrb[0].mxu0
      %1834 = vdwg.mxu0
      %1836 = vrot.lane.b32.xlu0 %v1832, 10
      %v1837 = vpop.permute.xlu0 %1836
      %v1839 = vsel %vm1690, 0.0, %v1837
      %v1840 = vsel %vm1040, %v1839, 0.0
      %v1841 = vld [vmem:[%s11] sm:$0xff]
      %v1842 = vld [vmem:[%s13] sm:$0xff]
      %1844 = vset.pattern.permute.xlu0 0
      %1845 = vperm.xlu0 %1844, %v1842
      %v1846 = vpop.permute.xlu0 %1845
      %vm1848 = vcmask 64512
      %v1850 = vsel %vm1848, %v1841, 0
      %1852 = vmatprep.subr.mxu0 0.0
      %1853 = vmatpush1.msra.mxu0 %v1840
      %1854 = vmatprep.subr.mxu0 0.0
      %1855 = vmatpush1.msra.mxu0 0.0
      %1856 = vmatprep.subr.mxu0 0.0
      %1857 = vmatpush1.msra.mxu0 0.0
      %1858 = vmatprep.subr.mxu0 0.0
      %1859 = vmatpush1.msra.mxu0 0.0
      %1860 = vmatprep.subr.mxu0 0.0
      %1861 = vmatpush1.msra.mxu0 0.0
      %1862 = vmatprep.subr.mxu0 0.0
      %1863 = vmatpush1.msra.mxu0 0.0
      %1864 = vmatprep.subr.mxu0 0.0
      %1865 = vmatpush1.msra.mxu0 0.0
      %1866 = vmatprep.subr.mxu0 0.0
      %1867 = vmatpush1.msra.mxu0 0.0
      %1868 = vmatprep.subr.mxu0 0.0
      %1869 = vmatpush1.msra.mxu0 0.0
      %1870 = vmatprep.subr.mxu0 0.0
      %1871 = vmatpush1.msra.mxu0 0.0
      %1872 = vmatprep.subr.mxu0 0.0
      %1873 = vmatpush1.msra.mxu0 0.0
      %1874 = vmatprep.subr.mxu0 0.0
      %1875 = vmatpush1.msra.mxu0 0.0
      %1876 = vmatprep.subr.mxu0 0.0
      %1877 = vmatpush1.msra.mxu0 0.0
      %1878 = vmatprep.subr.mxu0 0.0
      %1879 = vmatpush1.msra.mxu0 0.0
      %1880 = vmatprep.subr.mxu0 0.0
      %1881 = vmatpush1.msra.mxu0 0.0
      %1882 = vmatprep.subr.mxu0 0.0
      %1883 = vmatpush1.msra.mxu0 0.0
      %1884 = vmatprep.subr.mxu0 0.0
      %1885 = vmatpush1.msra.mxu0 0.0
      %1886 = vmatprep.subr.mxu0 0.0
      %1887 = vmatpush1.msra.mxu0 0.0
      %1888 = vmatprep.subr.mxu0 0.0
      %1889 = vmatpush1.msra.mxu0 0.0
      %1890 = vmatprep.subr.mxu0 0.0
      %1891 = vmatpush1.msra.mxu0 0.0
      %1892 = vmatprep.subr.mxu0 0.0
      %1893 = vmatpush1.msra.mxu0 0.0
      %1894 = vmatprep.subr.mxu0 0.0
      %1895 = vmatpush1.msra.mxu0 0.0
      %1896 = vmatprep.subr.mxu0 0.0
      %1897 = vmatpush1.msra.mxu0 0.0
      %1898 = vmatprep.subr.mxu0 0.0
      %1899 = vmatpush1.msra.mxu0 0.0
      %1900 = vmatprep.subr.mxu0 0.0
      %1901 = vmatpush1.msra.mxu0 0.0
      %1902 = vmatprep.subr.mxu0 0.0
      %1903 = vmatpush1.msra.mxu0 0.0
      %1904 = vmatprep.subr.mxu0 0.0
      %1905 = vmatpush1.msra.mxu0 0.0
      %1906 = vmatprep.subr.mxu0 0.0
      %1907 = vmatpush1.msra.mxu0 0.0
      %1908 = vmatprep.subr.mxu0 0.0
      %1909 = vmatpush1.msra.mxu0 0.0
      %1910 = vmatprep.subr.mxu0 0.0
      %1911 = vmatpush1.msra.mxu0 0.0
      %1912 = vmatprep.subr.mxu0 0.0
      %1913 = vmatpush1.msra.mxu0 0.0
      %1914 = vmatprep.subr.mxu0 0.0
      %1915 = vmatpush1.msra.mxu0 0.0
      %1916 = vmatprep.mubr.f32.mxu0 0.0
      %1917 = vmatmul.mubr.f32.gmra.mrb[0].mxu0 %v1850
      %v1918 = vpop.f32.mrb[0].mxu0
      %v1919 = vadd.f32 %v1846, %v1918
      %v1920 = vpop.f32.mrb[0].mxu0
      %1921 = vdwg.mxu0
      %v1923 = vlaneseq
      %v1924 = vshrl.u32 %v1923, 7
      %v1925 = vsub.s32 0, %v1924
      %v1926 = vrot.slane %v946, %v1925
      %v1928 = vmul.f32 %v1919, %v1926
      %v1929 = vadd.f32 %v1692, %v1928
      %v1930 = vld [vmem:[%s49] sm:$0x1]
      %v1931 = vmax.f32 %v1929, 0.0
      %1933 = vrot.lane.b32.xlu0 %v1931, 127
      %v1934 = vpop.permute.xlu0 %1933
      %1936 = vrot.lane.b32.xlu0 %v1931, 126
      %v1937 = vpop.permute.xlu0 %1936
      %1939 = vrot.lane.b32.xlu0 %v1931, 118
      %v1940 = vpop.permute.xlu0 %1939
      %1942 = vrot.lane.b32.xlu0 %v1931, 117
      %v1943 = vpop.permute.xlu0 %1942
      %1945 = vrot.lane.b32.xlu0 %v1931, 116
      %v1946 = vpop.permute.xlu0 %1945
      %1948 = vrot.lane.b32.xlu0 %v1931, 108
      %v1949 = vpop.permute.xlu0 %1948
      %1951 = vrot.lane.b32.xlu0 %v1931, 107
      %v1952 = vpop.permute.xlu0 %1951
      %1954 = vrot.lane.b32.xlu0 %v1931, 106
      %v1955 = vpop.permute.xlu0 %1954
      %v1957 = vld [vmem:[%s17] sm:$0xff]
      %v1958 = vld [vmem:[%s19] sm:$0xff]
      %1960 = vset.pattern.permute.xlu0 0
      %1961 = vperm.xlu0 %1960, %v1958
      %v1962 = vpop.permute.xlu0 %1961
      %v1965 = vsel %vm1053, %v1957, 0
      %1967 = vmatprep.subr.mxu0 0.0
      %1968 = vmatpush1.msra.mxu0 %v1931
      %1969 = vmatprep.subr.mxu0 0.0
      %1970 = vmatpush1.msra.mxu0 %v1934
      %1971 = vmatprep.subr.mxu0 0.0
      %1972 = vmatpush1.msra.mxu0 %v1937
      %1973 = vmatprep.subr.mxu0 0.0
      %1974 = vmatpush1.msra.mxu0 %v1940
      %1975 = vmatprep.subr.mxu0 0.0
      %1976 = vmatpush1.msra.mxu0 %v1943
      %1977 = vmatprep.subr.mxu0 0.0
      %1978 = vmatpush1.msra.mxu0 %v1946
      %1979 = vmatprep.subr.mxu0 0.0
      %1980 = vmatpush1.msra.mxu0 %v1949
      %1981 = vmatprep.subr.mxu0 0.0
      %1982 = vmatpush1.msra.mxu0 %v1952
      %1983 = vmatprep.subr.mxu0 0.0
      %1984 = vmatpush1.msra.mxu0 %v1955
      %1985 = vmatprep.subr.mxu0 0.0
      %1986 = vmatpush1.msra.mxu0 0.0
      %1987 = vmatprep.subr.mxu0 0.0
      %1988 = vmatpush1.msra.mxu0 0.0
      %1989 = vmatprep.subr.mxu0 0.0
      %1990 = vmatpush1.msra.mxu0 0.0
      %1991 = vmatprep.subr.mxu0 0.0
      %1992 = vmatpush1.msra.mxu0 0.0
      %1993 = vmatprep.subr.mxu0 0.0
      %1994 = vmatpush1.msra.mxu0 0.0
      %1995 = vmatprep.subr.mxu0 0.0
      %1996 = vmatpush1.msra.mxu0 0.0
      %1997 = vmatprep.subr.mxu0 0.0
      %1998 = vmatpush1.msra.mxu0 0.0
      %1999 = vmatprep.subr.mxu0 0.0
      %2000 = vmatpush1.msra.mxu0 0.0
      %2001 = vmatprep.subr.mxu0 0.0
      %2002 = vmatpush1.msra.mxu0 0.0
      %2003 = vmatprep.subr.mxu0 0.0
      %2004 = vmatpush1.msra.mxu0 0.0
      %2005 = vmatprep.subr.mxu0 0.0
      %2006 = vmatpush1.msra.mxu0 0.0
      %2007 = vmatprep.subr.mxu0 0.0
      %2008 = vmatpush1.msra.mxu0 0.0
      %2009 = vmatprep.subr.mxu0 0.0
      %2010 = vmatpush1.msra.mxu0 0.0
      %2011 = vmatprep.subr.mxu0 0.0
      %2012 = vmatpush1.msra.mxu0 0.0
      %2013 = vmatprep.subr.mxu0 0.0
      %2014 = vmatpush1.msra.mxu0 0.0
      %2015 = vmatprep.subr.mxu0 0.0
      %2016 = vmatpush1.msra.mxu0 0.0
      %2017 = vmatprep.subr.mxu0 0.0
      %2018 = vmatpush1.msra.mxu0 0.0
      %2019 = vmatprep.subr.mxu0 0.0
      %2020 = vmatpush1.msra.mxu0 0.0
      %2021 = vmatprep.subr.mxu0 0.0
      %2022 = vmatpush1.msra.mxu0 0.0
      %2023 = vmatprep.subr.mxu0 0.0
      %2024 = vmatpush1.msra.mxu0 0.0
      %2025 = vmatprep.subr.mxu0 0.0
      %2026 = vmatpush1.msra.mxu0 0.0
      %2027 = vmatprep.subr.mxu0 0.0
      %2028 = vmatpush1.msra.mxu0 0.0
      %2029 = vmatprep.subr.mxu0 0.0
      %2030 = vmatpush1.msra.mxu0 0.0
      %2031 = vmatprep.mubr.f32.mxu0 0.0
      %2032 = vmatmul.mubr.f32.gmra.mrb[0].mxu0 %v1965
      %v2033 = vpop.f32.mrb[0].mxu0
      %v2034 = vadd.f32 %v1962, %v2033
      %v2035 = vpop.f32.mrb[0].mxu0
      %2036 = vdwg.mxu0
      %2038 = vrot.lane.b32.xlu0 %v2034, 11
      %v2039 = vpop.permute.xlu0 %2038
      %vm2041 = vcmask 89088
      %v2042 = vsel %vm2041, 0.0, %v2039
      %vm2043 = vcmask 728064
      %v2044 = vsel %vm2043, %v2042, 0.0
      %v2045 = vmax.f32 %v2044, 0.0
      %v2046 = vmul.f32 %v2045, %v1926
      %2048 = vrot.lane.b32.xlu0 %v2046, 127
      %v2049 = vpop.permute.xlu0 %2048
      %2051 = vrot.lane.b32.xlu0 %v2046, 126
      %v2052 = vpop.permute.xlu0 %2051
      %2054 = vrot.lane.b32.xlu0 %v2046, 118
      %v2055 = vpop.permute.xlu0 %2054
      %2057 = vrot.lane.b32.xlu0 %v2046, 117
      %v2058 = vpop.permute.xlu0 %2057
      %2060 = vrot.lane.b32.xlu0 %v2046, 116
      %v2061 = vpop.permute.xlu0 %2060
      %2063 = vrot.lane.b32.xlu0 %v2046, 108
      %v2064 = vpop.permute.xlu0 %2063
      %2066 = vrot.lane.b32.xlu0 %v2046, 107
      %v2067 = vpop.permute.xlu0 %2066
      %2069 = vrot.lane.b32.xlu0 %v2046, 106
      %v2070 = vpop.permute.xlu0 %2069
      %v2072 = vld [vmem:[%s21] sm:$0xff]
      %v2073 = vld [vmem:[%s21 + $0x8] sm:$0xff]
      %v2074 = vld [vmem:[%s23] sm:$0xff]
      %v2075 = vld [vmem:[%s23 + $0x8] sm:$0xff]
      %2077 = vset.pattern.permute.xlu0 0
      %2078 = vperm.xlu0 %2077, %v2074
      %v2079 = vpop.permute.xlu0 %2078
      %2082 = vset.pattern.permute.xlu0 0
      %2083 = vperm.xlu0 %2082, %v2075
      %v2084 = vpop.permute.xlu0 %2083
      %v2087 = vsel %vm1053, %v2072, 0
      %v2090 = vsel %vm1053, %v2073, 0
      %2092 = vmatprep.subr.mxu0 0.0
      %2093 = vmatpush1.msra.mxu0 %v2046
      %2094 = vmatprep.subr.mxu0 0.0
      %2095 = vmatpush1.msra.mxu0 %v2049
      %2096 = vmatprep.subr.mxu0 0.0
      %2097 = vmatpush1.msra.mxu0 %v2052
      %2098 = vmatprep.subr.mxu0 0.0
      %2099 = vmatpush1.msra.mxu0 %v2055
      %2100 = vmatprep.subr.mxu0 0.0
      %2101 = vmatpush1.msra.mxu0 %v2058
      %2102 = vmatprep.subr.mxu0 0.0
      %2103 = vmatpush1.msra.mxu0 %v2061
      %2104 = vmatprep.subr.mxu0 0.0
      %2105 = vmatpush1.msra.mxu0 %v2064
      %2106 = vmatprep.subr.mxu0 0.0
      %2107 = vmatpush1.msra.mxu0 %v2067
      %2108 = vmatprep.subr.mxu0 0.0
      %2109 = vmatpush1.msra.mxu0 %v2070
      %2110 = vmatprep.subr.mxu0 0.0
      %2111 = vmatpush1.msra.mxu0 0.0
      %2112 = vmatprep.subr.mxu0 0.0
      %2113 = vmatpush1.msra.mxu0 0.0
      %2114 = vmatprep.subr.mxu0 0.0
      %2115 = vmatpush1.msra.mxu0 0.0
      %2116 = vmatprep.subr.mxu0 0.0
      %2117 = vmatpush1.msra.mxu0 0.0
      %2118 = vmatprep.subr.mxu0 0.0
      %2119 = vmatpush1.msra.mxu0 0.0
      %2120 = vmatprep.subr.mxu0 0.0
      %2121 = vmatpush1.msra.mxu0 0.0
      %2122 = vmatprep.subr.mxu0 0.0
      %2123 = vmatpush1.msra.mxu0 0.0
      %2124 = vmatprep.subr.mxu0 0.0
      %2125 = vmatpush1.msra.mxu0 0.0
      %2126 = vmatprep.subr.mxu0 0.0
      %2127 = vmatpush1.msra.mxu0 0.0
      %2128 = vmatprep.subr.mxu0 0.0
      %2129 = vmatpush1.msra.mxu0 0.0
      %2130 = vmatprep.subr.mxu0 0.0
      %2131 = vmatpush1.msra.mxu0 0.0
      %2132 = vmatprep.subr.mxu0 0.0
      %2133 = vmatpush1.msra.mxu0 0.0
      %2134 = vmatprep.subr.mxu0 0.0
      %2135 = vmatpush1.msra.mxu0 0.0
      %2136 = vmatprep.subr.mxu0 0.0
      %2137 = vmatpush1.msra.mxu0 0.0
      %2138 = vmatprep.subr.mxu0 0.0
      %2139 = vmatpush1.msra.mxu0 0.0
      %2140 = vmatprep.subr.mxu0 0.0
      %2141 = vmatpush1.msra.mxu0 0.0
      %2142 = vmatprep.subr.mxu0 0.0
      %2143 = vmatpush1.msra.mxu0 0.0
      %2144 = vmatprep.subr.mxu0 0.0
      %2145 = vmatpush1.msra.mxu0 0.0
      %2146 = vmatprep.subr.mxu0 0.0
      %2147 = vmatpush1.msra.mxu0 0.0
      %2148 = vmatprep.subr.mxu0 0.0
      %2149 = vmatpush1.msra.mxu0 0.0
      %2150 = vmatprep.subr.mxu0 0.0
      %2151 = vmatpush1.msra.mxu0 0.0
      %2152 = vmatprep.subr.mxu0 0.0
      %2153 = vmatpush1.msra.mxu0 0.0
      %2154 = vmatprep.subr.mxu0 0.0
      %2155 = vmatpush1.msra.mxu0 0.0
      %2156 = vmatprep.mubr.f32.mxu0 0.0
      %2157 = vmatmul.mubr.f32.gmra.mrb[0].mxu0 %v2087
      %v2158 = vpop.f32.mrb[0].mxu0
      %v2159 = vadd.f32 %v2079, %v2158
      %v2160 = vpop.f32.mrb[0].mxu0
      %2161 = vmatprep.mubr.f32.mxu0 0.0
      %2162 = vmatmul.mubr.f32.gmra.mrb[0].mxu0 %v2090
      %v2163 = vpop.f32.mrb[0].mxu0
      %v2164 = vadd.f32 %v2084, %v2163
      %v2165 = vpop.f32.mrb[0].mxu0
      %2166 = vdwg.mxu0
      %2169 = vrot.lane.b32.xlu0 %v2159, 11
      %v2170 = vpop.permute.xlu0 %2169
      %2171 = vrot.lane.b32.xlu0 %v2164, 11
      %v2172 = vpop.permute.xlu0 %2171
      %v2175 = vsel %vm2041, 0.0, %v2170
      %v2176 = vsel %vm2041, 0.0, %v2172
      %v2177 = vsel %vm2043, %v2175, 0.0
      %v2178 = vsel %vm2043, %v2176, 0.0
      %v2179 = vld [vmem:[%s29] sm:$0xff]
      %v2180 = vld [vmem:[%s29 + $0x8] sm:$0xff]
      %v2181 = vld [vmem:[%s29 + $0x10] sm:$0xff]
      %v2182 = vld [vmem:[%s29 + $0x18] sm:$0xff]
      %v2183 = vld [vmem:[%s29 + $0x20] sm:$0xff]
      %v2184 = vld [vmem:[%s29 + $0x28] sm:$0xff]
      %v2185 = vld [vmem:[%s29 + $0x30] sm:$0xff]
      %v2186 = vld [vmem:[%s29 + $0x38] sm:$0xff]
      %v2187 = vld [vmem:[%s29 + $0x40] sm:$0xff]
      %v2188 = vld [vmem:[%s29 + $0x48] sm:$0xff]
      %2191 = vrot.lane.b32.xlu0 %v2177, 118
      %v2192 = vpop.permute.xlu0 %2191
      %2193 = vrot.lane.b32.xlu0 %v2178, 118
      %v2194 = vpop.permute.xlu0 %2193
      %vm2195 = vcmask 654336
      %v2196 = vsel %vm2195, %v2192, 0
      %v2198 = vsel %vm2195, %v2194, 0
      %2200 = vmatprep.subr.mxu0 0.0
      %2201 = vmatpush1.msra.mxu0 %v2179
      %2202 = vmatprep.subr.mxu0 0.0
      %2203 = vmatpush1.msra.mxu0 %v2180
      %2204 = vmatprep.subr.mxu0 0.0
      %2205 = vmatpush1.msra.mxu0 %v2181
      %2206 = vmatprep.subr.mxu0 0.0
      %2207 = vmatpush1.msra.mxu0 %v2182
      %2208 = vmatprep.subr.mxu0 0.0
      %2209 = vmatpush1.msra.mxu0 %v2183
      %2210 = vmatprep.subr.mxu0 0.0
      %2211 = vmatpush1.msra.mxu0 %v2184
      %2212 = vmatprep.subr.mxu0 0.0
      %2213 = vmatpush1.msra.mxu0 %v2185
      %2214 = vmatprep.subr.mxu0 0.0
      %2215 = vmatpush1.msra.mxu0 %v2186
      %2216 = vmatprep.subr.mxu0 0.0
      %2217 = vmatpush1.msra.mxu0 %v2187
      %2218 = vmatprep.subr.mxu0 0.0
      %2219 = vmatpush1.msra.mxu0 %v2188
      %2220 = vmatprep.subr.mxu0 0.0
      %2221 = vmatpush1.msra.mxu0 0.0
      %2222 = vmatprep.subr.mxu0 0.0
      %2223 = vmatpush1.msra.mxu0 0.0
      %2224 = vmatprep.subr.mxu0 0.0
      %2225 = vmatpush1.msra.mxu0 0.0
      %2226 = vmatprep.subr.mxu0 0.0
      %2227 = vmatpush1.msra.mxu0 0.0
      %2228 = vmatprep.subr.mxu0 0.0
      %2229 = vmatpush1.msra.mxu0 0.0
      %2230 = vmatprep.subr.mxu0 0.0
      %2231 = vmatpush1.msra.mxu0 0.0
      %2232 = vmatprep.subr.mxu0 0.0
      %2233 = vmatpush1.msra.mxu0 0.0
      %2234 = vmatprep.subr.mxu0 0.0
      %2235 = vmatpush1.msra.mxu0 0.0
      %2236 = vmatprep.subr.mxu0 0.0
      %2237 = vmatpush1.msra.mxu0 0.0
      %2238 = vmatprep.subr.mxu0 0.0
      %2239 = vmatpush1.msra.mxu0 0.0
      %2240 = vmatprep.subr.mxu0 0.0
      %2241 = vmatpush1.msra.mxu0 0.0
      %2242 = vmatprep.subr.mxu0 0.0
      %2243 = vmatpush1.msra.mxu0 0.0
      %2244 = vmatprep.subr.mxu0 0.0
      %2245 = vmatpush1.msra.mxu0 0.0
      %2246 = vmatprep.subr.mxu0 0.0
      %2247 = vmatpush1.msra.mxu0 0.0
      %2248 = vmatprep.subr.mxu0 0.0
      %2249 = vmatpush1.msra.mxu0 0.0
      %2250 = vmatprep.subr.mxu0 0.0
      %2251 = vmatpush1.msra.mxu0 0.0
      %2252 = vmatprep.subr.mxu0 0.0
      %2253 = vmatpush1.msra.mxu0 0.0
      %2254 = vmatprep.subr.mxu0 0.0
      %2255 = vmatpush1.msra.mxu0 0.0
      %2256 = vmatprep.subr.mxu0 0.0
      %2257 = vmatpush1.msra.mxu0 0.0
      %2258 = vmatprep.subr.mxu0 0.0
      %2259 = vmatpush1.msra.mxu0 0.0
      %2260 = vmatprep.subr.mxu0 0.0
      %2261 = vmatpush1.msra.mxu0 0.0
      %2262 = vmatprep.subr.mxu0 0.0
      %2263 = vmatpush1.msra.mxu0 0.0
      %2264 = vmatprep.mubr.f32.mxu0 0.0
      %2265 = vmatmul.mubr.f32.gmra.mrb[0].mxu0 %v2196
      %v2266 = vpop.f32.mrb[0].mxu0
      %v2267 = vadd.f32 0.0, %v2266
      %v2268 = vpop.f32.mrb[0].mxu0
      %2269 = vmatprep.mubr.f32.mxu0 0.0
      %2270 = vmatmul.mubr.f32.gmra.mrb[0].mxu0 %v2198
      %v2271 = vpop.f32.mrb[0].mxu0
      %v2272 = vadd.f32 0.0, %v2271
      %v2273 = vpop.f32.mrb[0].mxu0
      %2274 = vdwg.mxu0
      %2277 = vrot.lane.b32.xlu0 %v2267, 6
      %v2278 = vpop.permute.xlu0 %2277
      %2279 = vrot.lane.b32.xlu0 %v2272, 6
      %v2280 = vpop.permute.xlu0 %2279
      %vm2283 = vcmask 48128
      %v2284 = vsel %vm2283, 0.0, %v2278
      %v2285 = vsel %vm2283, 0.0, %v2280
      %vm2286 = vcmask 244736
      %v2287 = vsel %vm2286, %v2284, 0.0
      %v2288 = vsel %vm2286, %v2285, 0.0
      %2290 = vrot.lane.b32.xlu0 %v1929, 118
      %v2291 = vpop.permute.xlu0 %2290
      %v2292 = vsel %vm2195, %v2291, 0
      %2294 = vmatprep.subr.mxu0 0.0
      %2295 = vmatpush1.msra.mxu0 %v2179
      %2296 = vmatprep.subr.mxu0 0.0
      %2297 = vmatpush1.msra.mxu0 %v2180
      %2298 = vmatprep.subr.mxu0 0.0
      %2299 = vmatpush1.msra.mxu0 %v2181
      %2300 = vmatprep.subr.mxu0 0.0
      %2301 = vmatpush1.msra.mxu0 %v2182
      %2302 = vmatprep.subr.mxu0 0.0
      %2303 = vmatpush1.msra.mxu0 %v2183
      %2304 = vmatprep.subr.mxu0 0.0
      %2305 = vmatpush1.msra.mxu0 %v2184
      %2306 = vmatprep.subr.mxu0 0.0
      %2307 = vmatpush1.msra.mxu0 %v2185
      %2308 = vmatprep.subr.mxu0 0.0
      %2309 = vmatpush1.msra.mxu0 %v2186
      %2310 = vmatprep.subr.mxu0 0.0
      %2311 = vmatpush1.msra.mxu0 %v2187
      %2312 = vmatprep.subr.mxu0 0.0
      %2313 = vmatpush1.msra.mxu0 %v2188
      %2314 = vmatprep.subr.mxu0 0.0
      %2315 = vmatpush1.msra.mxu0 0.0
      %2316 = vmatprep.subr.mxu0 0.0
      %2317 = vmatpush1.msra.mxu0 0.0
      %2318 = vmatprep.subr.mxu0 0.0
      %2319 = vmatpush1.msra.mxu0 0.0
      %2320 = vmatprep.subr.mxu0 0.0
      %2321 = vmatpush1.msra.mxu0 0.0
      %2322 = vmatprep.subr.mxu0 0.0
      %2323 = vmatpush1.msra.mxu0 0.0
      %2324 = vmatprep.subr.mxu0 0.0
      %2325 = vmatpush1.msra.mxu0 0.0
      %2326 = vmatprep.subr.mxu0 0.0
      %2327 = vmatpush1.msra.mxu0 0.0
      %2328 = vmatprep.subr.mxu0 0.0
      %2329 = vmatpush1.msra.mxu0 0.0
      %2330 = vmatprep.subr.mxu0 0.0
      %2331 = vmatpush1.msra.mxu0 0.0
      %2332 = vmatprep.subr.mxu0 0.0
      %2333 = vmatpush1.msra.mxu0 0.0
      %2334 = vmatprep.subr.mxu0 0.0
      %2335 = vmatpush1.msra.mxu0 0.0
      %2336 = vmatprep.subr.mxu0 0.0
      %2337 = vmatpush1.msra.mxu0 0.0
      %2338 = vmatprep.subr.mxu0 0.0
      %2339 = vmatpush1.msra.mxu0 0.0
      %2340 = vmatprep.subr.mxu0 0.0
      %2341 = vmatpush1.msra.mxu0 0.0
      %2342 = vmatprep.subr.mxu0 0.0
      %2343 = vmatpush1.msra.mxu0 0.0
      %2344 = vmatprep.subr.mxu0 0.0
      %2345 = vmatpush1.msra.mxu0 0.0
      %2346 = vmatprep.subr.mxu0 0.0
      %2347 = vmatpush1.msra.mxu0 0.0
      %2348 = vmatprep.subr.mxu0 0.0
      %2349 = vmatpush1.msra.mxu0 0.0
      %2350 = vmatprep.subr.mxu0 0.0
      %2351 = vmatpush1.msra.mxu0 0.0
      %2352 = vmatprep.subr.mxu0 0.0
      %2353 = vmatpush1.msra.mxu0 0.0
      %2354 = vmatprep.subr.mxu0 0.0
      %2355 = vmatpush1.msra.mxu0 0.0
      %2356 = vmatprep.subr.mxu0 0.0
      %2357 = vmatpush1.msra.mxu0 0.0
      %2358 = vmatprep.mubr.f32.mxu0 0.0
      %2359 = vmatmul.mubr.f32.gmra.mrb[0].mxu0 %v2292
      %v2360 = vpop.f32.mrb[0].mxu0
      %v2361 = vadd.f32 0.0, %v2360
      %v2362 = vpop.f32.mrb[0].mxu0
      %2363 = vdwg.mxu0
      %2365 = vrot.lane.b32.xlu0 %v2361, 6
      %v2366 = vpop.permute.xlu0 %2365
      %v2368 = vsel %vm2283, 0.0, %v2366
      %v2369 = vsel %vm2286, %v2368, 0.0
      %v2370 = vld [vmem:[%s25] sm:$0xff]
      %v2371 = vld [vmem:[%s25 + $0x8] sm:$0xff]
      %v2372 = vld [vmem:[%s27] sm:$0xff]
      %v2373 = vld [vmem:[%s27 + $0x8] sm:$0xff]
      %2375 = vset.pattern.permute.xlu0 0
      %2376 = vperm.xlu0 %2375, %v2372
      %v2377 = vpop.permute.xlu0 %2376
      %2380 = vset.pattern.permute.xlu0 0
      %2381 = vperm.xlu0 %2380, %v2373
      %v2382 = vpop.permute.xlu0 %2381
      %v2385 = vsel %vm1848, %v2370, 0
      %v2388 = vsel %vm1848, %v2371, 0
      %2390 = vmatprep.subr.mxu0 0.0
      %2391 = vmatpush1.msra.mxu0 %v2369
      %2392 = vmatprep.subr.mxu0 0.0
      %2393 = vmatpush1.msra.mxu0 0.0
      %2394 = vmatprep.subr.mxu0 0.0
      %2395 = vmatpush1.msra.mxu0 0.0
      %2396 = vmatprep.subr.mxu0 0.0
      %2397 = vmatpush1.msra.mxu0 0.0
      %2398 = vmatprep.subr.mxu0 0.0
      %2399 = vmatpush1.msra.mxu0 0.0
      %2400 = vmatprep.subr.mxu0 0.0
      %2401 = vmatpush1.msra.mxu0 0.0
      %2402 = vmatprep.subr.mxu0 0.0
      %2403 = vmatpush1.msra.mxu0 0.0
      %2404 = vmatprep.subr.mxu0 0.0
      %2405 = vmatpush1.msra.mxu0 0.0
      %2406 = vmatprep.subr.mxu0 0.0
      %2407 = vmatpush1.msra.mxu0 0.0
      %2408 = vmatprep.subr.mxu0 0.0
      %2409 = vmatpush1.msra.mxu0 0.0
      %2410 = vmatprep.subr.mxu0 0.0
      %2411 = vmatpush1.msra.mxu0 0.0
      %2412 = vmatprep.subr.mxu0 0.0
      %2413 = vmatpush1.msra.mxu0 0.0
      %2414 = vmatprep.subr.mxu0 0.0
      %2415 = vmatpush1.msra.mxu0 0.0
      %2416 = vmatprep.subr.mxu0 0.0
      %2417 = vmatpush1.msra.mxu0 0.0
      %2418 = vmatprep.subr.mxu0 0.0
      %2419 = vmatpush1.msra.mxu0 0.0
      %2420 = vmatprep.subr.mxu0 0.0
      %2421 = vmatpush1.msra.mxu0 0.0
      %2422 = vmatprep.subr.mxu0 0.0
      %2423 = vmatpush1.msra.mxu0 0.0
      %2424 = vmatprep.subr.mxu0 0.0
      %2425 = vmatpush1.msra.mxu0 0.0
      %2426 = vmatprep.subr.mxu0 0.0
      %2427 = vmatpush1.msra.mxu0 0.0
      %2428 = vmatprep.subr.mxu0 0.0
      %2429 = vmatpush1.msra.mxu0 0.0
      %2430 = vmatprep.subr.mxu0 0.0
      %2431 = vmatpush1.msra.mxu0 0.0
      %2432 = vmatprep.subr.mxu0 0.0
      %2433 = vmatpush1.msra.mxu0 0.0
      %2434 = vmatprep.subr.mxu0 0.0
      %2435 = vmatpush1.msra.mxu0 0.0
      %2436 = vmatprep.subr.mxu0 0.0
      %2437 = vmatpush1.msra.mxu0 0.0
      %2438 = vmatprep.subr.mxu0 0.0
      %2439 = vmatpush1.msra.mxu0 0.0
      %2440 = vmatprep.subr.mxu0 0.0
      %2441 = vmatpush1.msra.mxu0 0.0
      %2442 = vmatprep.subr.mxu0 0.0
      %2443 = vmatpush1.msra.mxu0 0.0
      %2444 = vmatprep.subr.mxu0 0.0
      %2445 = vmatpush1.msra.mxu0 0.0
      %2446 = vmatprep.subr.mxu0 0.0
      %2447 = vmatpush1.msra.mxu0 0.0
      %2448 = vmatprep.subr.mxu0 0.0
      %2449 = vmatpush1.msra.mxu0 0.0
      %2450 = vmatprep.subr.mxu0 0.0
      %2451 = vmatpush1.msra.mxu0 0.0
      %2452 = vmatprep.subr.mxu0 0.0
      %2453 = vmatpush1.msra.mxu0 0.0
      %2454 = vmatprep.mubr.f32.mxu0 0.0
      %2455 = vmatmul.mubr.f32.gmra.mrb[0].mxu0 %v2385
      %v2456 = vpop.f32.mrb[0].mxu0
      %v2457 = vadd.f32 %v2377, %v2456
      %v2458 = vpop.f32.mrb[0].mxu0
      %2459 = vmatprep.mubr.f32.mxu0 0.0
      %2460 = vmatmul.mubr.f32.gmra.mrb[0].mxu0 %v2388
      %v2461 = vpop.f32.mrb[0].mxu0
      %v2462 = vadd.f32 %v2382, %v2461
      %v2463 = vpop.f32.mrb[0].mxu0
      %2464 = vdwg.mxu0
      %v2466 = vlaneseq
      %v2467 = vshrl.u32 %v2466, 7
      %v2468 = vsub.s32 0, %v2467
      %v2469 = vrot.slane %v1930, %v2468
      %v2471 = vmul.f32 %v2457, %v2469
      %v2472 = vmul.f32 %v2462, %v2469
      %v2473 = vadd.f32 %v2287, %v2471
      %v2474 = vadd.f32 %v2288, %v2472
      %v2475 = vld [vmem:[%s51] sm:$0x1]
      %v2476 = vmax.f32 %v2473, 0.0
      %v2477 = vmax.f32 %v2474, 0.0
      %2480 = vrot.lane.b32.xlu0 %v2476, 127
      %v2481 = vpop.permute.xlu0 %2480
      %2482 = vrot.lane.b32.xlu0 %v2477, 127
      %v2483 = vpop.permute.xlu0 %2482
      %2486 = vrot.lane.b32.xlu0 %v2476, 126
      %v2487 = vpop.permute.xlu0 %2486
      %2488 = vrot.lane.b32.xlu0 %v2477, 126
      %v2489 = vpop.permute.xlu0 %2488
      %2492 = vrot.lane.b32.xlu0 %v2476, 122
      %v2493 = vpop.permute.xlu0 %2492
      %2494 = vrot.lane.b32.xlu0 %v2477, 122
      %v2495 = vpop.permute.xlu0 %2494
      %2498 = vrot.lane.b32.xlu0 %v2476, 121
      %v2499 = vpop.permute.xlu0 %2498
      %2500 = vrot.lane.b32.xlu0 %v2477, 121
      %v2501 = vpop.permute.xlu0 %2500
      %2504 = vrot.lane.b32.xlu0 %v2476, 120
      %v2505 = vpop.permute.xlu0 %2504
      %2506 = vrot.lane.b32.xlu0 %v2477, 120
      %v2507 = vpop.permute.xlu0 %2506
      %2510 = vrot.lane.b32.xlu0 %v2476, 116
      %v2511 = vpop.permute.xlu0 %2510
      %2512 = vrot.lane.b32.xlu0 %v2477, 116
      %v2513 = vpop.permute.xlu0 %2512
      %2516 = vrot.lane.b32.xlu0 %v2476, 115
      %v2517 = vpop.permute.xlu0 %2516
      %2518 = vrot.lane.b32.xlu0 %v2477, 115
      %v2519 = vpop.permute.xlu0 %2518
      %2522 = vrot.lane.b32.xlu0 %v2476, 114
      %v2523 = vpop.permute.xlu0 %2522
      %2524 = vrot.lane.b32.xlu0 %v2477, 114
      %v2525 = vpop.permute.xlu0 %2524
      %v2528 = vld [vmem:[%s31] sm:$0xff]
      %v2529 = vld [vmem:[%s31 + $0x8] sm:$0xff]
      %v2530 = vld [vmem:[%s31 + $0x10] sm:$0xff]
      %v2531 = vld [vmem:[%s31 + $0x18] sm:$0xff]
      %v2532 = vld [vmem:[%s33] sm:$0xff]
      %v2533 = vld [vmem:[%s33 + $0x8] sm:$0xff]
      %2535 = vset.pattern.permute.xlu0 0
      %2536 = vperm.xlu0 %2535, %v2532
      %v2537 = vpop.permute.xlu0 %2536
      %2540 = vset.pattern.permute.xlu0 0
      %2541 = vperm.xlu0 %2540, %v2533
      %v2542 = vpop.permute.xlu0 %2541
      %vm2544 = vcmask 130048
      %v2546 = vsel %vm2544, %v2529, 0
      %v2549 = vsel %vm2544, %v2531, 0
      %2551 = vmatprep.subr.mxu0 0.0
      %2552 = vmatpush1.msra.mxu0 %v2476
      %2553 = vmatprep.subr.mxu0 0.0
      %2554 = vmatpush1.msra.mxu0 %v2477
      %2555 = vmatprep.subr.mxu0 0.0
      %2556 = vmatpush1.msra.mxu0 %v2481
      %2557 = vmatprep.subr.mxu0 0.0
      %2558 = vmatpush1.msra.mxu0 %v2483
      %2559 = vmatprep.subr.mxu0 0.0
      %2560 = vmatpush1.msra.mxu0 %v2487
      %2561 = vmatprep.subr.mxu0 0.0
      %2562 = vmatpush1.msra.mxu0 %v2489
      %2563 = vmatprep.subr.mxu0 0.0
      %2564 = vmatpush1.msra.mxu0 %v2493
      %2565 = vmatprep.subr.mxu0 0.0
      %2566 = vmatpush1.msra.mxu0 %v2495
      %2567 = vmatprep.subr.mxu0 0.0
      %2568 = vmatpush1.msra.mxu0 %v2499
      %2569 = vmatprep.subr.mxu0 0.0
      %2570 = vmatpush1.msra.mxu0 %v2501
      %2571 = vmatprep.subr.mxu0 0.0
      %2572 = vmatpush1.msra.mxu0 %v2505
      %2573 = vmatprep.subr.mxu0 0.0
      %2574 = vmatpush1.msra.mxu0 %v2507
      %2575 = vmatprep.subr.mxu0 0.0
      %2576 = vmatpush1.msra.mxu0 %v2511
      %2577 = vmatprep.subr.mxu0 0.0
      %2578 = vmatpush1.msra.mxu0 %v2513
      %2579 = vmatprep.subr.mxu0 0.0
      %2580 = vmatpush1.msra.mxu0 %v2517
      %2581 = vmatprep.subr.mxu0 0.0
      %2582 = vmatpush1.msra.mxu0 %v2519
      %2583 = vmatprep.subr.mxu0 0.0
      %2584 = vmatpush1.msra.mxu0 %v2523
      %2585 = vmatprep.subr.mxu0 0.0
      %2586 = vmatpush1.msra.mxu0 %v2525
      %2587 = vmatprep.subr.mxu0 0.0
      %2588 = vmatpush1.msra.mxu0 0.0
      %2589 = vmatprep.subr.mxu0 0.0
      %2590 = vmatpush1.msra.mxu0 0.0
      %2591 = vmatprep.subr.mxu0 0.0
      %2592 = vmatpush1.msra.mxu0 0.0
      %2593 = vmatprep.subr.mxu0 0.0
      %2594 = vmatpush1.msra.mxu0 0.0
      %2595 = vmatprep.subr.mxu0 0.0
      %2596 = vmatpush1.msra.mxu0 0.0
      %2597 = vmatprep.subr.mxu0 0.0
      %2598 = vmatpush1.msra.mxu0 0.0
      %2599 = vmatprep.subr.mxu0 0.0
      %2600 = vmatpush1.msra.mxu0 0.0
      %2601 = vmatprep.subr.mxu0 0.0
      %2602 = vmatpush1.msra.mxu0 0.0
      %2603 = vmatprep.subr.mxu0 0.0
      %2604 = vmatpush1.msra.mxu0 0.0
      %2605 = vmatprep.subr.mxu0 0.0
      %2606 = vmatpush1.msra.mxu0 0.0
      %2607 = vmatprep.subr.mxu0 0.0
      %2608 = vmatpush1.msra.mxu0 0.0
      %2609 = vmatprep.subr.mxu0 0.0
      %2610 = vmatpush1.msra.mxu0 0.0
      %2611 = vmatprep.subr.mxu0 0.0
      %2612 = vmatpush1.msra.mxu0 0.0
      %2613 = vmatprep.subr.mxu0 0.0
      %2614 = vmatpush1.msra.mxu0 0.0
      %2615 = vmatprep.mubr.f32.mxu0 %v2546
      %2616 = vmatmul.mubr.f32.gmra.mrb[0].mxu0 %v2528
      %v2617 = vpop.f32.mrb[0].mxu0
      %v2618 = vadd.f32 %v2537, %v2617
      %v2619 = vpop.f32.mrb[0].mxu0
      %2620 = vmatprep.mubr.f32.mxu0 %v2549
      %2621 = vmatmul.mubr.f32.gmra.mrb[0].mxu0 %v2530
      %v2622 = vpop.f32.mrb[0].mxu0
      %v2623 = vadd.f32 %v2542, %v2622
      %v2624 = vpop.f32.mrb[0].mxu0
      %2625 = vdwg.mxu0
      %2628 = vrot.lane.b32.xlu0 %v2618, 7
      %v2629 = vpop.permute.xlu0 %2628
      %2630 = vrot.lane.b32.xlu0 %v2623, 7
      %v2631 = vpop.permute.xlu0 %2630
      %vm2634 = vcmask 56320
      %v2635 = vsel %vm2634, 0.0, %v2629
      %v2636 = vsel %vm2634, 0.0, %v2631
      %vm2637 = vcmask 236544
      %v2638 = vsel %vm2637, %v2635, 0.0
      %v2639 = vsel %vm2637, %v2636, 0.0
      %v2640 = vmax.f32 %v2638, 0.0
      %v2641 = vmax.f32 %v2639, 0.0
      %v2642 = vmul.f32 %v2640, %v2469
      %v2643 = vmul.f32 %v2641, %v2469
      %2646 = vrot.lane.b32.xlu0 %v2642, 127
      %v2647 = vpop.permute.xlu0 %2646
      %2648 = vrot.lane.b32.xlu0 %v2643, 127
      %v2649 = vpop.permute.xlu0 %2648
      %2652 = vrot.lane.b32.xlu0 %v2642, 126
      %v2653 = vpop.permute.xlu0 %2652
      %2654 = vrot.lane.b32.xlu0 %v2643, 126
      %v2655 = vpop.permute.xlu0 %2654
      %2658 = vrot.lane.b32.xlu0 %v2642, 122
      %v2659 = vpop.permute.xlu0 %2658
      %2660 = vrot.lane.b32.xlu0 %v2643, 122
      %v2661 = vpop.permute.xlu0 %2660
      %2664 = vrot.lane.b32.xlu0 %v2642, 121
      %v2665 = vpop.permute.xlu0 %2664
      %2666 = vrot.lane.b32.xlu0 %v2643, 121
      %v2667 = vpop.permute.xlu0 %2666
      %2670 = vrot.lane.b32.xlu0 %v2642, 120
      %v2671 = vpop.permute.xlu0 %2670
      %2672 = vrot.lane.b32.xlu0 %v2643, 120
      %v2673 = vpop.permute.xlu0 %2672
      %2676 = vrot.lane.b32.xlu0 %v2642, 116
      %v2677 = vpop.permute.xlu0 %2676
      %2678 = vrot.lane.b32.xlu0 %v2643, 116
      %v2679 = vpop.permute.xlu0 %2678
      %2682 = vrot.lane.b32.xlu0 %v2642, 115
      %v2683 = vpop.permute.xlu0 %2682
      %2684 = vrot.lane.b32.xlu0 %v2643, 115
      %v2685 = vpop.permute.xlu0 %2684
      %2688 = vrot.lane.b32.xlu0 %v2642, 114
      %v2689 = vpop.permute.xlu0 %2688
      %2690 = vrot.lane.b32.xlu0 %v2643, 114
      %v2691 = vpop.permute.xlu0 %2690
      %v2694 = vld [vmem:[%s35] sm:$0xff]
      %v2695 = vld [vmem:[%s35 + $0x8] sm:$0xff]
      %v2696 = vld [vmem:[%s35 + $0x10] sm:$0xff]
      %v2697 = vld [vmem:[%s35 + $0x18] sm:$0xff]
      %v2698 = vld [vmem:[%s35 + $0x20] sm:$0xff]
      %v2699 = vld [vmem:[%s35 + $0x28] sm:$0xff]
      %v2700 = vld [vmem:[%s35 + $0x30] sm:$0xff]
      %v2701 = vld [vmem:[%s35 + $0x38] sm:$0xff]
      %v2702 = vld [vmem:[%s37] sm:$0xff]
      %v2703 = vld [vmem:[%s37 + $0x8] sm:$0xff]
      %v2704 = vld [vmem:[%s37 + $0x10] sm:$0xff]
      %v2705 = vld [vmem:[%s37 + $0x18] sm:$0xff]
      %2707 = vset.pattern.permute.xlu0 0
      %2708 = vperm.xlu0 %2707, %v2702
      %v2709 = vpop.permute.xlu0 %2708
      %2712 = vset.pattern.permute.xlu0 0
      %2713 = vperm.xlu0 %2712, %v2703
      %v2714 = vpop.permute.xlu0 %2713
      %2717 = vset.pattern.permute.xlu0 0
      %2718 = vperm.xlu0 %2717, %v2704
      %v2719 = vpop.permute.xlu0 %2718
      %2722 = vset.pattern.permute.xlu0 0
      %2723 = vperm.xlu0 %2722, %v2705
      %v2724 = vpop.permute.xlu0 %2723
      %v2727 = vsel %vm2544, %v2695, 0
      %v2730 = vsel %vm2544, %v2697, 0
      %v2733 = vsel %vm2544, %v2699, 0
      %v2736 = vsel %vm2544, %v2701, 0
      %2738 = vmatprep.subr.mxu0 0.0
      %2739 = vmatpush1.msra.mxu0 %v2642
      %2740 = vmatprep.subr.mxu0 0.0
      %2741 = vmatpush1.msra.mxu0 %v2643
      %2742 = vmatprep.subr.mxu0 0.0
      %2743 = vmatpush1.msra.mxu0 %v2647
      %2744 = vmatprep.subr.mxu0 0.0
      %2745 = vmatpush1.msra.mxu0 %v2649
      %2746 = vmatprep.subr.mxu0 0.0
      %2747 = vmatpush1.msra.mxu0 %v2653
      %2748 = vmatprep.subr.mxu0 0.0
      %2749 = vmatpush1.msra.mxu0 %v2655
      %2750 = vmatprep.subr.mxu0 0.0
      %2751 = vmatpush1.msra.mxu0 %v2659
      %2752 = vmatprep.subr.mxu0 0.0
      %2753 = vmatpush1.msra.mxu0 %v2661
      %2754 = vmatprep.subr.mxu0 0.0
      %2755 = vmatpush1.msra.mxu0 %v2665
      %2756 = vmatprep.subr.mxu0 0.0
      %2757 = vmatpush1.msra.mxu0 %v2667
      %2758 = vmatprep.subr.mxu0 0.0
      %2759 = vmatpush1.msra.mxu0 %v2671
      %2760 = vmatprep.subr.mxu0 0.0
      %2761 = vmatpush1.msra.mxu0 %v2673
      %2762 = vmatprep.subr.mxu0 0.0
      %2763 = vmatpush1.msra.mxu0 %v2677
      %2764 = vmatprep.subr.mxu0 0.0
      %2765 = vmatpush1.msra.mxu0 %v2679
      %2766 = vmatprep.subr.mxu0 0.0
      %2767 = vmatpush1.msra.mxu0 %v2683
      %2768 = vmatprep.subr.mxu0 0.0
      %2769 = vmatpush1.msra.mxu0 %v2685
      %2770 = vmatprep.subr.mxu0 0.0
      %2771 = vmatpush1.msra.mxu0 %v2689
      %2772 = vmatprep.subr.mxu0 0.0
      %2773 = vmatpush1.msra.mxu0 %v2691
      %2774 = vmatprep.subr.mxu0 0.0
      %2775 = vmatpush1.msra.mxu0 0.0
      %2776 = vmatprep.subr.mxu0 0.0
      %2777 = vmatpush1.msra.mxu0 0.0
      %2778 = vmatprep.subr.mxu0 0.0
      %2779 = vmatpush1.msra.mxu0 0.0
      %2780 = vmatprep.subr.mxu0 0.0
      %2781 = vmatpush1.msra.mxu0 0.0
      %2782 = vmatprep.subr.mxu0 0.0
      %2783 = vmatpush1.msra.mxu0 0.0
      %2784 = vmatprep.subr.mxu0 0.0
      %2785 = vmatpush1.msra.mxu0 0.0
      %2786 = vmatprep.subr.mxu0 0.0
      %2787 = vmatpush1.msra.mxu0 0.0
      %2788 = vmatprep.subr.mxu0 0.0
      %2789 = vmatpush1.msra.mxu0 0.0
      %2790 = vmatprep.subr.mxu0 0.0
      %2791 = vmatpush1.msra.mxu0 0.0
      %2792 = vmatprep.subr.mxu0 0.0
      %2793 = vmatpush1.msra.mxu0 0.0
      %2794 = vmatprep.subr.mxu0 0.0
      %2795 = vmatpush1.msra.mxu0 0.0
      %2796 = vmatprep.subr.mxu0 0.0
      %2797 = vmatpush1.msra.mxu0 0.0
      %2798 = vmatprep.subr.mxu0 0.0
      %2799 = vmatpush1.msra.mxu0 0.0
      %2800 = vmatprep.subr.mxu0 0.0
      %2801 = vmatpush1.msra.mxu0 0.0
      %2802 = vmatprep.mubr.f32.mxu0 %v2727
      %2803 = vmatmul.mubr.f32.gmra.mrb[0].mxu0 %v2694
      %v2804 = vpop.f32.mrb[0].mxu0
      %v2805 = vadd.f32 %v2709, %v2804
      %v2806 = vpop.f32.mrb[0].mxu0
      %2807 = vmatprep.mubr.f32.mxu0 %v2730
      %2808 = vmatmul.mubr.f32.gmra.mrb[0].mxu0 %v2696
      %v2809 = vpop.f32.mrb[0].mxu0
      %v2810 = vadd.f32 %v2714, %v2809
      %v2811 = vpop.f32.mrb[0].mxu0
      %2812 = vmatprep.mubr.f32.mxu0 %v2733
      %2813 = vmatmul.mubr.f32.gmra.mrb[0].mxu0 %v2698
      %v2814 = vpop.f32.mrb[0].mxu0
      %v2815 = vadd.f32 %v2719, %v2814
      %v2816 = vpop.f32.mrb[0].mxu0
      %2817 = vmatprep.mubr.f32.mxu0 %v2736
      %2818 = vmatmul.mubr.f32.gmra.mrb[0].mxu0 %v2700
      %v2819 = vpop.f32.mrb[0].mxu0
      %v2820 = vadd.f32 %v2724, %v2819
      %v2821 = vpop.f32.mrb[0].mxu0
      %2822 = vdwg.mxu0
      %2827 = vrot.lane.b32.xlu0 %v2805, 7
      %v2828 = vpop.permute.xlu0 %2827
      %2829 = vrot.lane.b32.xlu0 %v2810, 7
      %v2830 = vpop.permute.xlu0 %2829
      %2831 = vrot.lane.b32.xlu0 %v2815, 7
      %v2832 = vpop.permute.xlu0 %2831
      %2833 = vrot.lane.b32.xlu0 %v2820, 7
      %v2834 = vpop.permute.xlu0 %2833
      %v2839 = vsel %vm2634, 0.0, %v2828
      %v2840 = vsel %vm2634, 0.0, %v2830
      %v2841 = vsel %vm2634, 0.0, %v2832
      %v2842 = vsel %vm2634, 0.0, %v2834
      %v2843 = vsel %vm2637, %v2839, 0.0
      %v2844 = vsel %vm2637, %v2840, 0.0
      %v2845 = vsel %vm2637, %v2841, 0.0
      %v2846 = vsel %vm2637, %v2842, 0.0
      %v2847 = vld [vmem:[%s43] sm:$0xff]
      %v2848 = vld [vmem:[%s43 + $0x8] sm:$0xff]
      %v2849 = vld [vmem:[%s43 + $0x10] sm:$0xff]
      %2854 = vrot.lane.b32.xlu0 %v2843, 122
      %v2855 = vpop.permute.xlu0 %2854
      %2856 = vrot.lane.b32.xlu0 %v2844, 122
      %v2857 = vpop.permute.xlu0 %2856
      %2858 = vrot.lane.b32.xlu0 %v2845, 122
      %v2859 = vpop.permute.xlu0 %2858
      %2860 = vrot.lane.b32.xlu0 %v2846, 122
      %v2861 = vpop.permute.xlu0 %2860
      %vm2862 = vcmask 195584
      %v2863 = vsel %vm2862, %v2855, 0
      %v2865 = vsel %vm2862, %v2857, 0
      %v2867 = vsel %vm2862, %v2859, 0
      %v2869 = vsel %vm2862, %v2861, 0
      %2871 = vmatprep.subr.mxu0 0.0
      %2872 = vmatpush1.msra.mxu0 %v2847
      %2873 = vmatprep.subr.mxu0 0.0
      %2874 = vmatpush1.msra.mxu0 %v2848
      %2875 = vmatprep.subr.mxu0 0.0
      %2876 = vmatpush1.msra.mxu0 %v2849
      %2877 = vmatprep.subr.mxu0 0.0
      %2878 = vmatpush1.msra.mxu0 0.0
      %2879 = vmatprep.subr.mxu0 0.0
      %2880 = vmatpush1.msra.mxu0 0.0
      %2881 = vmatprep.subr.mxu0 0.0
      %2882 = vmatpush1.msra.mxu0 0.0
      %2883 = vmatprep.subr.mxu0 0.0
      %2884 = vmatpush1.msra.mxu0 0.0
      %2885 = vmatprep.subr.mxu0 0.0
      %2886 = vmatpush1.msra.mxu0 0.0
      %2887 = vmatprep.subr.mxu0 0.0
      %2888 = vmatpush1.msra.mxu0 0.0
      %2889 = vmatprep.subr.mxu0 0.0
      %2890 = vmatpush1.msra.mxu0 0.0
      %2891 = vmatprep.subr.mxu0 0.0
      %2892 = vmatpush1.msra.mxu0 0.0
      %2893 = vmatprep.subr.mxu0 0.0
      %2894 = vmatpush1.msra.mxu0 0.0
      %2895 = vmatprep.subr.mxu0 0.0
      %2896 = vmatpush1.msra.mxu0 0.0
      %2897 = vmatprep.subr.mxu0 0.0
      %2898 = vmatpush1.msra.mxu0 0.0
      %2899 = vmatprep.subr.mxu0 0.0
      %2900 = vmatpush1.msra.mxu0 0.0
      %2901 = vmatprep.subr.mxu0 0.0
      %2902 = vmatpush1.msra.mxu0 0.0
      %2903 = vmatprep.subr.mxu0 0.0
      %2904 = vmatpush1.msra.mxu0 0.0
      %2905 = vmatprep.subr.mxu0 0.0
      %2906 = vmatpush1.msra.mxu0 0.0
      %2907 = vmatprep.subr.mxu0 0.0
      %2908 = vmatpush1.msra.mxu0 0.0
      %2909 = vmatprep.subr.mxu0 0.0
      %2910 = vmatpush1.msra.mxu0 0.0
      %2911 = vmatprep.subr.mxu0 0.0
      %2912 = vmatpush1.msra.mxu0 0.0
      %2913 = vmatprep.subr.mxu0 0.0
      %2914 = vmatpush1.msra.mxu0 0.0
      %2915 = vmatprep.subr.mxu0 0.0
      %2916 = vmatpush1.msra.mxu0 0.0
      %2917 = vmatprep.subr.mxu0 0.0
      %2918 = vmatpush1.msra.mxu0 0.0
      %2919 = vmatprep.subr.mxu0 0.0
      %2920 = vmatpush1.msra.mxu0 0.0
      %2921 = vmatprep.subr.mxu0 0.0
      %2922 = vmatpush1.msra.mxu0 0.0
      %2923 = vmatprep.subr.mxu0 0.0
      %2924 = vmatpush1.msra.mxu0 0.0
      %2925 = vmatprep.subr.mxu0 0.0
      %2926 = vmatpush1.msra.mxu0 0.0
      %2927 = vmatprep.subr.mxu0 0.0
      %2928 = vmatpush1.msra.mxu0 0.0
      %2929 = vmatprep.subr.mxu0 0.0
      %2930 = vmatpush1.msra.mxu0 0.0
      %2931 = vmatprep.subr.mxu0 0.0
      %2932 = vmatpush1.msra.mxu0 0.0
      %2933 = vmatprep.subr.mxu0 0.0
      %2934 = vmatpush1.msra.mxu0 0.0
      %2935 = vmatprep.mubr.f32.mxu0 0.0
      %2936 = vmatmul.mubr.f32.gmra.mrb[0].mxu0 %v2863
      %v2937 = vpop.f32.mrb[0].mxu0
      %v2938 = vadd.f32 0.0, %v2937
      %v2939 = vpop.f32.mrb[0].mxu0
      %2940 = vmatprep.mubr.f32.mxu0 0.0
      %2941 = vmatmul.mubr.f32.gmra.mrb[0].mxu0 %v2865
      %v2942 = vpop.f32.mrb[0].mxu0
      %v2943 = vadd.f32 0.0, %v2942
      %v2944 = vpop.f32.mrb[0].mxu0
      %2945 = vmatprep.mubr.f32.mxu0 0.0
      %2946 = vmatmul.mubr.f32.gmra.mrb[0].mxu0 %v2867
      %v2947 = vpop.f32.mrb[0].mxu0
      %v2948 = vadd.f32 0.0, %v2947
      %v2949 = vpop.f32.mrb[0].mxu0
      %2950 = vmatprep.mubr.f32.mxu0 0.0
      %2951 = vmatmul.mubr.f32.gmra.mrb[0].mxu0 %v2869
      %v2952 = vpop.f32.mrb[0].mxu0
      %v2953 = vadd.f32 0.0, %v2952
      %v2954 = vpop.f32.mrb[0].mxu0
      %2955 = vdwg.mxu0
      %2960 = vrot.lane.b32.xlu0 %v2938, 4
      %v2961 = vpop.permute.xlu0 %2960
      %2962 = vrot.lane.b32.xlu0 %v2943, 4
      %v2963 = vpop.permute.xlu0 %2962
      %2964 = vrot.lane.b32.xlu0 %v2948, 4
      %v2965 = vpop.permute.xlu0 %2964
      %2966 = vrot.lane.b32.xlu0 %v2953, 4
      %v2967 = vpop.permute.xlu0 %2966
      %vm2972 = vcmask 31744
      %v2973 = vsel %vm2972, 0.0, %v2961
      %v2974 = vsel %vm2972, 0.0, %v2963
      %v2975 = vsel %vm2972, 0.0, %v2965
      %v2976 = vsel %vm2972, 0.0, %v2967
      %vm2977 = vcmask 97280
      %v2978 = vsel %vm2977, %v2973, 0.0
      %v2979 = vsel %vm2977, %v2974, 0.0
      %v2980 = vsel %vm2977, %v2975, 0.0
      %v2981 = vsel %vm2977, %v2976, 0.0
      %2984 = vrot.lane.b32.xlu0 %v2473, 122
      %v2985 = vpop.permute.xlu0 %2984
      %2986 = vrot.lane.b32.xlu0 %v2474, 122
      %v2987 = vpop.permute.xlu0 %2986
      %v2988 = vsel %vm2862, %v2985, 0
      %v2990 = vsel %vm2862, %v2987, 0
      %2992 = vmatprep.subr.mxu0 0.0
      %2993 = vmatpush1.msra.mxu0 %v2847
      %2994 = vmatprep.subr.mxu0 0.0
      %2995 = vmatpush1.msra.mxu0 %v2848
      %2996 = vmatprep.subr.mxu0 0.0
      %2997 = vmatpush1.msra.mxu0 %v2849
      %2998 = vmatprep.subr.mxu0 0.0
      %2999 = vmatpush1.msra.mxu0 0.0
      %3000 = vmatprep.subr.mxu0 0.0
      %3001 = vmatpush1.msra.mxu0 0.0
      %3002 = vmatprep.subr.mxu0 0.0
      %3003 = vmatpush1.msra.mxu0 0.0
      %3004 = vmatprep.subr.mxu0 0.0
      %3005 = vmatpush1.msra.mxu0 0.0
      %3006 = vmatprep.subr.mxu0 0.0
      %3007 = vmatpush1.msra.mxu0 0.0
      %3008 = vmatprep.subr.mxu0 0.0
      %3009 = vmatpush1.msra.mxu0 0.0
      %3010 = vmatprep.subr.mxu0 0.0
      %3011 = vmatpush1.msra.mxu0 0.0
      %3012 = vmatprep.subr.mxu0 0.0
      %3013 = vmatpush1.msra.mxu0 0.0
      %3014 = vmatprep.subr.mxu0 0.0
      %3015 = vmatpush1.msra.mxu0 0.0
      %3016 = vmatprep.subr.mxu0 0.0
      %3017 = vmatpush1.msra.mxu0 0.0
      %3018 = vmatprep.subr.mxu0 0.0
      %3019 = vmatpush1.msra.mxu0 0.0
      %3020 = vmatprep.subr.mxu0 0.0
      %3021 = vmatpush1.msra.mxu0 0.0
      %3022 = vmatprep.subr.mxu0 0.0
      %3023 = vmatpush1.msra.mxu0 0.0
      %3024 = vmatprep.subr.mxu0 0.0
      %3025 = vmatpush1.msra.mxu0 0.0
      %3026 = vmatprep.subr.mxu0 0.0
      %3027 = vmatpush1.msra.mxu0 0.0
      %3028 = vmatprep.subr.mxu0 0.0
      %3029 = vmatpush1.msra.mxu0 0.0
      %3030 = vmatprep.subr.mxu0 0.0
      %3031 = vmatpush1.msra.mxu0 0.0
      %3032 = vmatprep.subr.mxu0 0.0
      %3033 = vmatpush1.msra.mxu0 0.0
      %3034 = vmatprep.subr.mxu0 0.0
      %3035 = vmatpush1.msra.mxu0 0.0
      %3036 = vmatprep.subr.mxu0 0.0
      %3037 = vmatpush1.msra.mxu0 0.0
      %3038 = vmatprep.subr.mxu0 0.0
      %3039 = vmatpush1.msra.mxu0 0.0
      %3040 = vmatprep.subr.mxu0 0.0
      %3041 = vmatpush1.msra.mxu0 0.0
      %3042 = vmatprep.subr.mxu0 0.0
      %3043 = vmatpush1.msra.mxu0 0.0
      %3044 = vmatprep.subr.mxu0 0.0
      %3045 = vmatpush1.msra.mxu0 0.0
      %3046 = vmatprep.subr.mxu0 0.0
      %3047 = vmatpush1.msra.mxu0 0.0
      %3048 = vmatprep.subr.mxu0 0.0
      %3049 = vmatpush1.msra.mxu0 0.0
      %3050 = vmatprep.subr.mxu0 0.0
      %3051 = vmatpush1.msra.mxu0 0.0
      %3052 = vmatprep.subr.mxu0 0.0
      %3053 = vmatpush1.msra.mxu0 0.0
      %3054 = vmatprep.subr.mxu0 0.0
      %3055 = vmatpush1.msra.mxu0 0.0
      %3056 = vmatprep.mubr.f32.mxu0 0.0
      %3057 = vmatmul.mubr.f32.gmra.mrb[0].mxu0 %v2988
      %v3058 = vpop.f32.mrb[0].mxu0
      %v3059 = vadd.f32 0.0, %v3058
      %v3060 = vpop.f32.mrb[0].mxu0
      %3061 = vmatprep.mubr.f32.mxu0 0.0
      %3062 = vmatmul.mubr.f32.gmra.mrb[0].mxu0 %v2990
      %v3063 = vpop.f32.mrb[0].mxu0
      %v3064 = vadd.f32 0.0, %v3063
      %v3065 = vpop.f32.mrb[0].mxu0
      %3066 = vdwg.mxu0
      %3069 = vrot.lane.b32.xlu0 %v3059, 4
      %v3070 = vpop.permute.xlu0 %3069
      %3071 = vrot.lane.b32.xlu0 %v3064, 4
      %v3072 = vpop.permute.xlu0 %3071
      %v3075 = vsel %vm2972, 0.0, %v3070
      %v3076 = vsel %vm2972, 0.0, %v3072
      %v3077 = vsel %vm2977, %v3075, 0.0
      %v3078 = vsel %vm2977, %v3076, 0.0
      %v3079 = vld [vmem:[%s39] sm:$0xff]
      %v3080 = vld [vmem:[%s39 + $0x8] sm:$0xff]
      %v3081 = vld [vmem:[%s39 + $0x10] sm:$0xff]
      %v3082 = vld [vmem:[%s39 + $0x18] sm:$0xff]
      %v3083 = vld [vmem:[%s41] sm:$0xff]
      %v3084 = vld [vmem:[%s41 + $0x8] sm:$0xff]
      %v3085 = vld [vmem:[%s41 + $0x10] sm:$0xff]
      %v3086 = vld [vmem:[%s41 + $0x18] sm:$0xff]
      %3088 = vset.pattern.permute.xlu0 0
      %3089 = vperm.xlu0 %3088, %v3083
      %v3090 = vpop.permute.xlu0 %3089
      %3093 = vset.pattern.permute.xlu0 0
      %3094 = vperm.xlu0 %3093, %v3084
      %v3095 = vpop.permute.xlu0 %3094
      %3098 = vset.pattern.permute.xlu0 0
      %3099 = vperm.xlu0 %3098, %v3085
      %v3100 = vpop.permute.xlu0 %3099
      %3103 = vset.pattern.permute.xlu0 0
      %3104 = vperm.xlu0 %3103, %v3086
      %v3105 = vpop.permute.xlu0 %3104
      %v3108 = vsel %vm2544, %v3079, 0
      %v3111 = vsel %vm2544, %v3080, 0
      %v3114 = vsel %vm2544, %v3081, 0
      %v3117 = vsel %vm2544, %v3082, 0
      %3119 = vmatprep.subr.mxu0 0.0
      %3120 = vmatpush1.msra.mxu0 %v3077
      %3121 = vmatprep.subr.mxu0 0.0
      %3122 = vmatpush1.msra.mxu0 %v3078
      %3123 = vmatprep.subr.mxu0 0.0
      %3124 = vmatpush1.msra.mxu0 0.0
      %3125 = vmatprep.subr.mxu0 0.0
      %3126 = vmatpush1.msra.mxu0 0.0
      %3127 = vmatprep.subr.mxu0 0.0
      %3128 = vmatpush1.msra.mxu0 0.0
      %3129 = vmatprep.subr.mxu0 0.0
      %3130 = vmatpush1.msra.mxu0 0.0
      %3131 = vmatprep.subr.mxu0 0.0
      %3132 = vmatpush1.msra.mxu0 0.0
      %3133 = vmatprep.subr.mxu0 0.0
      %3134 = vmatpush1.msra.mxu0 0.0
      %3135 = vmatprep.subr.mxu0 0.0
      %3136 = vmatpush1.msra.mxu0 0.0
      %3137 = vmatprep.subr.mxu0 0.0
      %3138 = vmatpush1.msra.mxu0 0.0
      %3139 = vmatprep.subr.mxu0 0.0
      %3140 = vmatpush1.msra.mxu0 0.0
      %3141 = vmatprep.subr.mxu0 0.0
      %3142 = vmatpush1.msra.mxu0 0.0
      %3143 = vmatprep.subr.mxu0 0.0
      %3144 = vmatpush1.msra.mxu0 0.0
      %3145 = vmatprep.subr.mxu0 0.0
      %3146 = vmatpush1.msra.mxu0 0.0
      %3147 = vmatprep.subr.mxu0 0.0
      %3148 = vmatpush1.msra.mxu0 0.0
      %3149 = vmatprep.subr.mxu0 0.0
      %3150 = vmatpush1.msra.mxu0 0.0
      %3151 = vmatprep.subr.mxu0 0.0
      %3152 = vmatpush1.msra.mxu0 0.0
      %3153 = vmatprep.subr.mxu0 0.0
      %3154 = vmatpush1.msra.mxu0 0.0
      %3155 = vmatprep.subr.mxu0 0.0
      %3156 = vmatpush1.msra.mxu0 0.0
      %3157 = vmatprep.subr.mxu0 0.0
      %3158 = vmatpush1.msra.mxu0 0.0
      %3159 = vmatprep.subr.mxu0 0.0
      %3160 = vmatpush1.msra.mxu0 0.0
      %3161 = vmatprep.subr.mxu0 0.0
      %3162 = vmatpush1.msra.mxu0 0.0
      %3163 = vmatprep.subr.mxu0 0.0
      %3164 = vmatpush1.msra.mxu0 0.0
      %3165 = vmatprep.subr.mxu0 0.0
      %3166 = vmatpush1.msra.mxu0 0.0
      %3167 = vmatprep.subr.mxu0 0.0
      %3168 = vmatpush1.msra.mxu0 0.0
      %3169 = vmatprep.subr.mxu0 0.0
      %3170 = vmatpush1.msra.mxu0 0.0
      %3171 = vmatprep.subr.mxu0 0.0
      %3172 = vmatpush1.msra.mxu0 0.0
      %3173 = vmatprep.subr.mxu0 0.0
      %3174 = vmatpush1.msra.mxu0 0.0
      %3175 = vmatprep.subr.mxu0 0.0
      %3176 = vmatpush1.msra.mxu0 0.0
      %3177 = vmatprep.subr.mxu0 0.0
      %3178 = vmatpush1.msra.mxu0 0.0
      %3179 = vmatprep.subr.mxu0 0.0
      %3180 = vmatpush1.msra.mxu0 0.0
      %3181 = vmatprep.subr.mxu0 0.0
      %3182 = vmatpush1.msra.mxu0 0.0
      %3183 = vmatprep.mubr.f32.mxu0 0.0
      %3184 = vmatmul.mubr.f32.gmra.mrb[0].mxu0 %v3108
      %v3185 = vpop.f32.mrb[0].mxu0
      %v3186 = vadd.f32 %v3090, %v3185
      %v3187 = vpop.f32.mrb[0].mxu0
      %3188 = vmatprep.mubr.f32.mxu0 0.0
      %3189 = vmatmul.mubr.f32.gmra.mrb[0].mxu0 %v3111
      %v3190 = vpop.f32.mrb[0].mxu0
      %v3191 = vadd.f32 %v3095, %v3190
      %v3192 = vpop.f32.mrb[0].mxu0
      %3193 = vmatprep.mubr.f32.mxu0 0.0
      %3194 = vmatmul.mubr.f32.gmra.mrb[0].mxu0 %v3114
      %v3195 = vpop.f32.mrb[0].mxu0
      %v3196 = vadd.f32 %v3100, %v3195
      %v3197 = vpop.f32.mrb[0].mxu0
      %3198 = vmatprep.mubr.f32.mxu0 0.0
      %3199 = vmatmul.mubr.f32.gmra.mrb[0].mxu0 %v3117
      %v3200 = vpop.f32.mrb[0].mxu0
      %v3201 = vadd.f32 %v3105, %v3200
      %v3202 = vpop.f32.mrb[0].mxu0
      %3203 = vdwg.mxu0
      %v3205 = vlaneseq
      %v3206 = vshrl.u32 %v3205, 7
      %v3207 = vsub.s32 0, %v3206
      %v3208 = vrot.slane %v2475, %v3207
      %v3210 = vmul.f32 %v3186, %v3208
      %v3211 = vmul.f32 %v3191, %v3208
      %v3212 = vmul.f32 %v3196, %v3208
      %v3213 = vmul.f32 %v3201, %v3208
      %v3214 = vadd.f32 %v2978, %v3210
      %v3215 = vadd.f32 %v2979, %v3211
      %v3216 = vadd.f32 %v2980, %v3212
      %v3217 = vadd.f32 %v2981, %v3213
      %v3218 = vmax.f32 %v3214, 0.0
      %v3219 = vmax.f32 %v3215, 0.0
      %v3220 = vmax.f32 %v3216, 0.0
      %v3221 = vmax.f32 %v3217, 0.0
      %v3222 = vld [vmem:[%s53] sm:$0xff]
      %v3223 = vld [vmem:[%s53 + $0x8] sm:$0xff]
      %v3225 = vsel %vm2544, %v3218, 0
      %v3228 = vsel %vm2544, %v3219, 0
      %v3231 = vsel %vm2544, %v3220, 0
      %v3234 = vsel %vm2544, %v3221, 0
      %3236 = vmatprep.subr.mxu0 0.0
      %3237 = vmatpush1.msra.mxu0 %v3222
      %3238 = vmatprep.subr.mxu0 0.0
      %3239 = vmatpush1.msra.mxu0 %v3223
      %3240 = vmatprep.subr.mxu0 0.0
      %3241 = vmatpush1.msra.mxu0 0.0
      %3242 = vmatprep.subr.mxu0 0.0
      %3243 = vmatpush1.msra.mxu0 0.0
      %3244 = vmatprep.subr.mxu0 0.0
      %3245 = vmatpush1.msra.mxu0 0.0
      %3246 = vmatprep.subr.mxu0 0.0
      %3247 = vmatpush1.msra.mxu0 0.0
      %3248 = vmatprep.subr.mxu0 0.0
      %3249 = vmatpush1.msra.mxu0 0.0
      %3250 = vmatprep.subr.mxu0 0.0
      %3251 = vmatpush1.msra.mxu0 0.0
      %3252 = vmatprep.subr.mxu0 0.0
      %3253 = vmatpush1.msra.mxu0 0.0
      %3254 = vmatprep.subr.mxu0 0.0
      %3255 = vmatpush1.msra.mxu0 0.0
      %3256 = vmatprep.subr.mxu0 0.0
      %3257 = vmatpush1.msra.mxu0 0.0
      %3258 = vmatprep.subr.mxu0 0.0
      %3259 = vmatpush1.msra.mxu0 0.0
      %3260 = vmatprep.subr.mxu0 0.0
      %3261 = vmatpush1.msra.mxu0 0.0
      %3262 = vmatprep.subr.mxu0 0.0
      %3263 = vmatpush1.msra.mxu0 0.0
      %3264 = vmatprep.subr.mxu0 0.0
      %3265 = vmatpush1.msra.mxu0 0.0
      %3266 = vmatprep.subr.mxu0 0.0
      %3267 = vmatpush1.msra.mxu0 0.0
      %3268 = vmatprep.subr.mxu0 0.0
      %3269 = vmatpush1.msra.mxu0 0.0
      %3270 = vmatprep.subr.mxu0 0.0
      %3271 = vmatpush1.msra.mxu0 0.0
      %3272 = vmatprep.subr.mxu0 0.0
      %3273 = vmatpush1.msra.mxu0 0.0
      %3274 = vmatprep.subr.mxu0 0.0
      %3275 = vmatpush1.msra.mxu0 0.0
      %3276 = vmatprep.subr.mxu0 0.0
      %3277 = vmatpush1.msra.mxu0 0.0
      %3278 = vmatprep.subr.mxu0 0.0
      %3279 = vmatpush1.msra.mxu0 0.0
      %3280 = vmatprep.subr.mxu0 0.0
      %3281 = vmatpush1.msra.mxu0 0.0
      %3282 = vmatprep.subr.mxu0 0.0
      %3283 = vmatpush1.msra.mxu0 0.0
      %3284 = vmatprep.subr.mxu0 0.0
      %3285 = vmatpush1.msra.mxu0 0.0
      %3286 = vmatprep.subr.mxu0 0.0
      %3287 = vmatpush1.msra.mxu0 0.0
      %3288 = vmatprep.subr.mxu0 0.0
      %3289 = vmatpush1.msra.mxu0 0.0
      %3290 = vmatprep.subr.mxu0 0.0
      %3291 = vmatpush1.msra.mxu0 0.0
      %3292 = vmatprep.subr.mxu0 0.0
      %3293 = vmatpush1.msra.mxu0 0.0
      %3294 = vmatprep.subr.mxu0 0.0
      %3295 = vmatpush1.msra.mxu0 0.0
      %3296 = vmatprep.subr.mxu0 0.0
      %3297 = vmatpush1.msra.mxu0 0.0
      %3298 = vmatprep.subr.mxu0 0.0
      %3299 = vmatpush1.msra.mxu0 0.0
      %3300 = vmatprep.mubr.f32.mxu0 0.0
      %3301 = vmatmul.mubr.f32.gmra.mrb[0].mxu0 %v3225
      %v3302 = vpop.f32.mrb[0].mxu0
      %v3303 = vadd.f32 0.0, %v3302
      %v3304 = vpop.f32.mrb[0].mxu0
      %3305 = vmatprep.mubr.f32.mxu0 0.0
      %3306 = vmatmul.mubr.f32.gmra.mrb[0].mxu0 %v3228
      %v3307 = vpop.f32.mrb[0].mxu0
      %v3308 = vadd.f32 0.0, %v3307
      %v3309 = vpop.f32.mrb[0].mxu0
      %3310 = vmatprep.mubr.f32.mxu0 0.0
      %3311 = vmatmul.mubr.f32.gmra.mrb[0].mxu0 %v3231
      %v3312 = vpop.f32.mrb[0].mxu0
      %v3313 = vadd.f32 0.0, %v3312
      %v3314 = vpop.f32.mrb[0].mxu0
      %3315 = vmatprep.mubr.f32.mxu0 0.0
      %3316 = vmatmul.mubr.f32.gmra.mrb[0].mxu0 %v3234
      %v3317 = vpop.f32.mrb[0].mxu0
      %v3318 = vadd.f32 0.0, %v3317
      %v3319 = vpop.f32.mrb[0].mxu0
      %3320 = vdwg.mxu0
      %vm3321 = vcmask 7168
      %3322 = vst.msk [vmem:[%s941] sm:$0xff] %vm3321, %v3303
      %3323 = vst.msk [vmem:[%s941 + $0x8] sm:$0xff] %vm3321, %v3308
      %3324 = vst.msk [vmem:[%s941 + $0x10] sm:$0xff] %vm3321, %v3313
      %3325 = vst.msk [vmem:[%s941 + $0x18] sm:$0xff] %vm3321, %v3318
      %v3326 = vld [vmem:[%s55] sm:$0x1]
      %v3327 = vld [vmem:[#allocation2] sm:$0x1]
      %v3329 = vsel %vm1543, %v3326, 0
      %3331 = vmatprep.subr.mxu0 0.0
      %3332 = vmatpush1.msra.mxu0 %v3303
      %3333 = vmatprep.subr.mxu0 0.0
      %3334 = vmatpush1.msra.mxu0 %v3308
      %3335 = vmatprep.subr.mxu0 0.0
      %3336 = vmatpush1.msra.mxu0 %v3313
      %3337 = vmatprep.subr.mxu0 0.0
      %3338 = vmatpush1.msra.mxu0 %v3318
      %3339 = vmatprep.subr.mxu0 0.0
      %3340 = vmatpush1.msra.mxu0 0.0
      %3341 = vmatprep.subr.mxu0 0.0
      %3342 = vmatpush1.msra.mxu0 0.0
      %3343 = vmatprep.subr.mxu0 0.0
      %3344 = vmatpush1.msra.mxu0 0.0
      %3345 = vmatprep.subr.mxu0 0.0
      %3346 = vmatpush1.msra.mxu0 0.0
      %3347 = vmatprep.subr.mxu0 0.0
      %3348 = vmatpush1.msra.mxu0 0.0
      %3349 = vmatprep.subr.mxu0 0.0
      %3350 = vmatpush1.msra.mxu0 0.0
      %3351 = vmatprep.subr.mxu0 0.0
      %3352 = vmatpush1.msra.mxu0 0.0
      %3353 = vmatprep.subr.mxu0 0.0
      %3354 = vmatpush1.msra.mxu0 0.0
      %3355 = vmatprep.subr.mxu0 0.0
      %3356 = vmatpush1.msra.mxu0 0.0
      %3357 = vmatprep.subr.mxu0 0.0
      %3358 = vmatpush1.msra.mxu0 0.0
      %3359 = vmatprep.subr.mxu0 0.0
      %3360 = vmatpush1.msra.mxu0 0.0
      %3361 = vmatprep.subr.mxu0 0.0
      %3362 = vmatpush1.msra.mxu0 0.0
      %3363 = vmatprep.subr.mxu0 0.0
      %3364 = vmatpush1.msra.mxu0 0.0
      %3365 = vmatprep.subr.mxu0 0.0
      %3366 = vmatpush1.msra.mxu0 0.0
      %3367 = vmatprep.subr.mxu0 0.0
      %3368 = vmatpush1.msra.mxu0 0.0
      %3369 = vmatprep.subr.mxu0 0.0
      %3370 = vmatpush1.msra.mxu0 0.0
      %3371 = vmatprep.subr.mxu0 0.0
      %3372 = vmatpush1.msra.mxu0 0.0
      %3373 = vmatprep.subr.mxu0 0.0
      %3374 = vmatpush1.msra.mxu0 0.0
      %3375 = vmatprep.subr.mxu0 0.0
      %3376 = vmatpush1.msra.mxu0 0.0
      %3377 = vmatprep.subr.mxu0 0.0
      %3378 = vmatpush1.msra.mxu0 0.0
      %3379 = vmatprep.subr.mxu0 0.0
      %3380 = vmatpush1.msra.mxu0 0.0
      %3381 = vmatprep.subr.mxu0 0.0
      %3382 = vmatpush1.msra.mxu0 0.0
      %3383 = vmatprep.subr.mxu0 0.0
      %3384 = vmatpush1.msra.mxu0 0.0
      %3385 = vmatprep.subr.mxu0 0.0
      %3386 = vmatpush1.msra.mxu0 0.0
      %3387 = vmatprep.subr.mxu0 0.0
      %3388 = vmatpush1.msra.mxu0 0.0
      %3389 = vmatprep.subr.mxu0 0.0
      %3390 = vmatpush1.msra.mxu0 0.0
      %3391 = vmatprep.subr.mxu0 0.0
      %3392 = vmatpush1.msra.mxu0 0.0
      %3393 = vmatprep.subr.mxu0 0.0
      %3394 = vmatpush1.msra.mxu0 0.0
      %3395 = vmatprep.mubr.f32.mxu0 0.0
      %3396 = vmatmul.mubr.f32.gmra.mrb[0].mxu0 %v3329
      %v3397 = vpop.f32.mrb[0].mxu0
      %v3398 = vadd.f32 %v3327, %v3397
      %v3399 = vpop.f32.mrb[0].mxu0
      %3400 = vdwg.mxu0
      %vm3401 = vcmask 0
      %3402 = vst.msk [vmem:[%s936] sm:$0x1] %vm3401, %v3398
      %p3403 = scmp.lt.s32.totalorder %s75, 1
      %s3404 = scalar_select %p3403, %s75, 1
      %s3405 = scalar_lea.vmem %s59, %s3404
      %p3406 = scmp.lt.s32.totalorder %s75, 1
      %s3407 = scalar_select %p3406, %s75, 1
      %s3408 = smul.addr %s3407, 4
      %s3409 = smul.addr %s3408, 8
      %s3410 = scalar_lea.vmem %s61, %s3409
      // Predicated region
      $region137: #{discriminator_forward.1} parent=135 // pred_check
        %p3411 = pneg %p707
      $region138: #{discriminator_forward.1} parent=135 // pred_check_branch
        %3413 = sbr.rel (%p3411) target = $region140
      $region139: #{discriminator_forward.1} parent=135 // pred_region
        _
      $region140: #{discriminator_forward.1} parent=135 // pred_fallthru
        _
      // Predicated region
      $region141: #{discriminator_forward.1} parent=135 // pred_check
        %p3414 = pneg %p733
      $region142: #{discriminator_forward.1} parent=135 // pred_check_branch
        %3416 = sbr.rel (%p3414) target = $region144
      $region143: #{discriminator_forward.1} parent=135 // pred_region
        _
      $region144: #{discriminator_forward.1} parent=135 // pred_fallthru
        _
    $region136: #{discriminator_forward.1} parent=5 // pred_fallthru
      _
    %p3417 = scmp.le.s32.totalorder 2, %s70
    // Predicated region
    $region145: #{discriminator_forward.1} parent=5 // pred_check
      %p3418 = pneg %p3417
    $region146: #{discriminator_forward.1} parent=5 // pred_check_branch
      %3420 = sbr.rel (%p3418) target = $region148
    $region147: #{discriminator_forward.1} parent=5 // pred_region
      %s3421 = ssub.s32 %s70, 2
      // Predicated region
      $region149: #{discriminator_forward.1} parent=147 // pred_check
        %p3422 = pneg %p713
      $region150: #{discriminator_forward.1} parent=147 // pred_check_branch
        %3424 = sbr.rel (%p3422) target = $region152
      $region151: #{discriminator_forward.1} parent=147 // pred_region
        %p3425 = scmp.lt.s32.totalorder %s76, 1
        %s3426 = scalar_select %p3425, %s76, 1
        %s3427 = scalar_lea.vmem %s59, %s3426
      $region152: #{discriminator_forward.1} parent=147 // pred_fallthru
        _
      // Predicated region
      $region153: #{discriminator_forward.1} parent=147 // pred_check
        %p3428 = pneg %p739
      $region154: #{discriminator_forward.1} parent=147 // pred_check_branch
        %3430 = sbr.rel (%p3428) target = $region156
      $region155: #{discriminator_forward.1} parent=147 // pred_region
        %p3431 = scmp.lt.s32.totalorder %s76, 1
        %s3432 = scalar_select %p3431, %s76, 1
        %s3433 = smul.addr %s3432, 4
        %s3434 = smul.addr %s3433, 8
        %s3435 = scalar_lea.vmem %s61, %s3434
      $region156: #{discriminator_forward.1} parent=147 // pred_fallthru
        _
    $region148: #{discriminator_forward.1} parent=5 // pred_fallthru
      _
  $region6: #{discriminator_forward.1} parent=0 // loop_footer
    %s74 = sadd.s32 1, %s70
  $region7: #{discriminator_forward.1} parent=0 // loop_footer_branch
    %69 = sbr.rel target = $region3
  $region8: #{discriminator_forward.1} parent=0 // loop_exit
    _

</llo_original>
